<compile_context>
chip_gen: v5e
topology: v5e:2x2
jax: 0.10.0
libtpu: 0.0.40
codegen_flags: <defaults>
</compile_context>

<pallas_src>
import functools

import jax
import jax.numpy as jnp
from jax.experimental import pallas as pl
from jax.experimental.pallas import tpu as pltpu


_TM_CAP = 512                       # M-tile cap (rows of the patch matrix)
_VMEM_BUDGET = 24 * 1024 * 1024     # per-step working-set target (v7x-safe)


def _round_up(x, m):
    return (x + m - 1) // m * m


# ---------------------------------------------------------------------------
# Pallas kernel: (im2col patches) @ (resident weights) + bias + LeakyReLU
# ---------------------------------------------------------------------------
def _conv_mm_kernel(a_ref, w_ref, b_ref, o_ref, *, apply_act, neg_slope):
    # a_ref: (tm, K) bf16 patches (streamed), w_ref: (K, Np) bf16 weights
    # (VMEM resident), b_ref: (1, Np) f32 bias, o_ref: (tm, Np) bf16/f32.
    acc = jnp.dot(a_ref[...], w_ref[...], preferred_element_type=jnp.float32)
    acc = acc + b_ref[...]
    if apply_act:
        acc = jnp.where(acc >= 0.0, acc, neg_slope * acc)
    o_ref[...] = acc.astype(o_ref.dtype)


def _pallas_conv_matmul(patches, w_mat, bias, apply_act, out_dtype,
                        neg_slope=0.2):
    """patches: (M, K) bf16; w_mat: (K, N) bf16; bias: (N,).

    Returns (M, N) in out_dtype.  Weights + bias are held VMEM-resident
    (constant index_map), the grid only tiles M, so patches stream from HBM
    exactly once and weights are read exactly once.
    """
    M, K = patches.shape
    _, N = w_mat.shape

    # K is normally already a multiple of 128 (Cin padded to x8 in im2col);
    # pad here only as a fallback.
    Kp = _round_up(K, 128)
    if Kp != K:
        patches = jnp.pad(patches, ((0, 0), (0, Kp - K)))
        w_mat = jnp.pad(w_mat, ((0, Kp - K), (0, 0)))
    Np = _round_up(N, 128)
    out_itemsize = jnp.dtype(out_dtype).itemsize

    # Choose the M tile against the VMEM budget: resident W + bias are fixed
    # cost; the double-buffered bf16 A tile and the output tile scale with tm.
    fixed = 2 * Kp * Np * 2 + 2 * Np * 4
    per_row = 2 * (Kp * 2 + Np * out_itemsize)
    tm = min(_TM_CAP, _round_up(M, 16))
    while tm > 16 and fixed + per_row * tm > _VMEM_BUDGET:
        tm //= 2
    tm = max(16, (tm // 16) * 16)
    Mp = _round_up(M, tm)

    a_p = patches if Mp == M else jnp.pad(patches, ((0, Mp - M), (0, 0)))
    w_p = w_mat if Np == N else jnp.pad(w_mat, ((0, 0), (0, Np - N)))
    b_p = bias.astype(jnp.float32).reshape(1, -1)
    if Np != N:
        b_p = jnp.pad(b_p, ((0, 0), (0, Np - N)))

    grid = (Mp // tm,)
    kernel = functools.partial(
        _conv_mm_kernel, apply_act=apply_act, neg_slope=neg_slope)

    vmem_limit = int(min(64 * 1024 * 1024,
                         max(32 * 1024 * 1024,
                             fixed + per_row * tm + 8 * 1024 * 1024)))

    # Advisory cost hint: A and W each read once, output written once.
    flops = 2 * Mp * Kp * Np
    bytes_accessed = (Mp * Kp * 2 + Kp * Np * 2 + Np * 4
                      + Mp * Np * out_itemsize)

    out = pl.pallas_call(
        kernel,
        out_shape=jax.ShapeDtypeStruct((Mp, Np), out_dtype),
        grid_spec=pltpu.PrefetchScalarGridSpec(
            num_scalar_prefetch=0,
            grid=grid,
            in_specs=[
                pl.BlockSpec((tm, Kp), lambda i: (i, 0)),   # streamed patches
                pl.BlockSpec((Kp, Np), lambda i: (0, 0)),   # resident weights
                pl.BlockSpec((1, Np), lambda i: (0, 0)),    # resident bias
            ],
            out_specs=pl.BlockSpec((tm, Np), lambda i: (i, 0)),
        ),
        compiler_params=pltpu.CompilerParams(
            dimension_semantics=("parallel",),
            vmem_limit_bytes=vmem_limit,
        ),
        cost_estimate=pl.CostEstimate(
            flops=flops, transcendentals=0, bytes_accessed=bytes_accessed),
    )(a_p, w_p, b_p)
    return out[:M, :N]


# ---------------------------------------------------------------------------
# Plain-JAX glue: im2col patch extraction (NHWC, zero pad, kernel 4x4)
# ---------------------------------------------------------------------------
def _extract_patches_nhwc(x_nhwc, kh, kw, stride, pad, cin_extra):
    """x_nhwc: (N, H, W, C) bf16 -> ((N*Ho*Wo, kh*kw*(C+cin_extra)), Ho, Wo)."""
    x = jnp.pad(x_nhwc, ((0, 0), (pad, pad), (pad, pad), (0, cin_extra)))
    n, hp, wp, c = x.shape
    ho = (hp - kh) // stride + 1
    wo = (wp - kw) // stride + 1
    cols = []
    for i in range(kh):
        for j in range(kw):
            cols.append(
                x[:, i:i + stride * ho:stride, j:j + stride * wo:stride, :])
    # (N, Ho, Wo, kh*kw, C) -> (N*Ho*Wo, kh*kw*C)   (K laid out kh, kw, Cin)
    p = jnp.stack(cols, axis=3)
    return p.reshape(n * ho * wo, kh * kw * c), ho, wo


def _conv2d_layer_nhwc(x_nhwc, weight, bias, stride, pad, apply_act,
                       out_dtype):
    """x_nhwc: (N, H, W, Cin); weight: (Cout, Cin, kh, kw) PyTorch layout.

    Returns (N, Ho, Wo, Cout) NHWC in out_dtype (no NCHW round-trips).
    """
    cout, cin, kh, kw = weight.shape
    n = x_nhwc.shape[0]
    # Pad Cin to a multiple of 8 so K = kh*kw*Cin_pad is already 128-aligned
    # (folded into the same jnp.pad as the spatial padding).
    cin_p = _round_up(cin, 8)
    patches, ho, wo = _extract_patches_nhwc(
        x_nhwc.astype(jnp.bfloat16), kh, kw, stride, pad, cin_p - cin)
    # Reorder weight so K index matches (kh, kw, Cin_pad) patch ordering.
    w = jnp.transpose(weight, (2, 3, 1, 0))
    if cin_p != cin:
        w = jnp.pad(w, ((0, 0), (0, 0), (0, cin_p - cin), (0, 0)))
    w_mat = w.reshape(kh * kw * cin_p, cout).astype(jnp.bfloat16)
    out = _pallas_conv_matmul(patches, w_mat, bias, apply_act, out_dtype)
    return out.reshape(n, ho, wo, cout)


# ---------------------------------------------------------------------------
# Spectral normalization (parameter setup, plain JAX)
# ---------------------------------------------------------------------------
def _spectral_normalize(weight, key, n_power_iterations=30, eps=1e-12):
    # TODO(synk): PyTorch's spectral_norm does one power iteration per forward
    # with persistent u/v buffers; here sigma is estimated once at init, which
    # matches the normalization semantics but not a torch ckpt bit-for-bit.
    m = weight.reshape(weight.shape[0], -1)  # (Cout, Cin*kh*kw)
    u = jax.random.normal(key, (m.shape[0],), dtype=jnp.float32)
    u = u / (jnp.linalg.norm(u) + eps)

    def body(_, u_):
        v_ = m.T @ u_
        v_ = v_ / (jnp.linalg.norm(v_) + eps)
        u_new = m @ v_
        return u_new / (jnp.linalg.norm(u_new) + eps)

    u = jax.lax.fori_loop(0, n_power_iterations, body, u)
    v = m.T @ u
    v = v / (jnp.linalg.norm(v) + eps)
    sigma = u @ (m @ v)
    return weight / sigma


# ---------------------------------------------------------------------------
# SpectralDiscriminator parameters + forward
# ---------------------------------------------------------------------------
def init_spectral_discriminator_params(key, input_nc, ndf=64, n_layers=3):
    """Builds the layer list exactly as the PyTorch module does.

    Layers (kw=4, padw=1), all convs with bias:
      conv(input_nc -> ndf, s2) + LeakyReLU(0.2)
      for n in 1..n_layers-1: conv(ndf*prev -> ndf*min(2^n,8), s2) + LeakyReLU
      conv(ndf*prev -> ndf*min(2^n_layers,8), s1) + LeakyReLU
      conv(-> 1, s1)                      (no sigmoid, use_sigmoid=False)

    Returns (params, configs): params is a pytree of arrays, configs is a
    static tuple of (stride, pad, apply_act) per layer.
    """
    kw, padw = 4, 1
    params, configs = [], []

    def make_conv(k, cin, cout):
        kw_key, b_key, sn_key = jax.random.split(k, 3)
        w = 0.02 * jax.random.normal(kw_key, (cout, cin, kw, kw), jnp.float32)
        b = 0.01 * jax.random.normal(b_key, (cout,), jnp.float32)
        return {"weight": _spectral_normalize(w, sn_key), "bias": b}

    keys = jax.random.split(key, n_layers + 2)
    params.append(make_conv(keys[0], input_nc, ndf))
    configs.append((2, padw, True))
    nf_mult = 1
    for n in range(1, n_layers):
        nf_prev, nf_mult = nf_mult, min(2 ** n, 8)
        params.append(make_conv(keys[n], ndf * nf_prev, ndf * nf_mult))
        configs.append((2, padw, True))
    nf_prev, nf_mult = nf_mult, min(2 ** n_layers, 8)
    params.append(make_conv(keys[n_layers], ndf * nf_prev, ndf * nf_mult))
    configs.append((1, padw, True))
    # TODO(synk): the final 1-output-channel conv pads N to 128 lanes; a
    # production path would fuse it into the previous layer's epilogue.
    params.append(make_conv(keys[n_layers + 1], ndf * nf_mult, 1))
    configs.append((1, padw, False))
    return params, tuple(configs)


def spectral_discriminator_forward(params, x_nchw, *, configs):
    # TODO(synk): torch.utils.checkpoint only affects backward-pass memory; the
    # forward semantics are identical, so it is a no-op here.
    y = jnp.transpose(x_nchw.astype(jnp.float32), (0, 2, 3, 1))  # NHWC once
    n_layers = len(params)
    for idx, (layer, (stride, pad, act)) in enumerate(zip(params, configs)):
        out_dtype = jnp.float32 if idx == n_layers - 1 else jnp.bfloat16
        y = _conv2d_layer_nhwc(y, layer["weight"], layer["bias"],
                               stride, pad, act, out_dtype)
    return jnp.transpose(y, (0, 3, 1, 2))  # NCHW only at the API boundary


# ---------------------------------------------------------------------------
if __name__ == "__main__":
    key = jax.random.PRNGKey(0)
    k_params, k_input = jax.random.split(key)

    # Small config consistent with the module: input_nc=3, ndf=16, n_layers=3.
    # Spatial 32 so all conv output sizes stay >= 1.
    batch, input_nc, spatial = 2, 3, 32
    ndf, n_layers = 16, 3

    params, configs = init_spectral_discriminator_params(
        k_params, input_nc=input_nc, ndf=ndf, n_layers=n_layers)
    x = jax.random.normal(
        k_input, (batch, input_nc, spatial, spatial), jnp.float32)

    forward = jax.jit(
        functools.partial(spectral_discriminator_forward, configs=configs))
    out = jax.block_until_ready(forward(params, x))

    # Expected PatchGAN output shape for 32x32 input: (2, 1, 2, 2)
    assert out.shape == (batch, 1, 2, 2), out.shape
    assert out.dtype == jnp.float32
    assert bool(jnp.all(jnp.isfinite(out)))
    print("KERNEL_OK")
</pallas_src>

<mosaic_0001>
module attributes {stable_mosaic.version = 11 : i64} {
  func.func @_conv_mm_kernel(%arg0: i32, %arg1: memref<512x128xbf16, #tpu.memory_space<vmem>>, %arg2: memref<128x128xbf16, #tpu.memory_space<vmem>>, %arg3: memref<1x128xf32, #tpu.memory_space<vmem>>, %arg4: memref<512x128xbf16, #tpu.memory_space<vmem>>) attributes {dimension_semantics = [#tpu.dimension_semantics<parallel>], iteration_bounds = array<i64: 1>, scalar_prefetch = 0 : i64, scratch_operands = 0 : i64, tpu.core_type = #tpu.core_type<tc>, window_params = [{transform_indices = @transform_0, window_bounds = array<i64: 512, 128>}, {pipeline_mode = #tpu.pipeline_mode<synchronous>, transform_indices = @transform_1, window_bounds = array<i64: 128, 128>}, {pipeline_mode = #tpu.pipeline_mode<synchronous>, transform_indices = @transform_2, window_bounds = array<i64: 1, 128>}, {transform_indices = @transform_3, window_bounds = array<i64: 512, 128>}]} {
    %c0 = arith.constant 0 : index
    %c0_0 = arith.constant 0 : index
    %0 = vector.load %arg1[%c0, %c0_0] : memref<512x128xbf16, #tpu.memory_space<vmem>>, vector<512x128xbf16>
    %c0_1 = arith.constant 0 : index
    %c0_2 = arith.constant 0 : index
    %1 = vector.load %arg2[%c0_1, %c0_2] : memref<128x128xbf16, #tpu.memory_space<vmem>>, vector<128x128xbf16>
    %cst = arith.constant dense<0.000000e+00> : vector<512x128xf32>
    %2 = tpu.matmul %0, %1, %cst {dimension_numbers = #tpu.dot_dimension_numbers<[1], [0], [0], [1], [0, 0, 1, 1], [], []>} : vector<512x128xbf16>, vector<128x128xbf16>, vector<512x128xf32> -> vector<512x128xf32>
    %c0_3 = arith.constant 0 : index
    %c0_4 = arith.constant 0 : index
    %3 = vector.load %arg3[%c0_3, %c0_4] : memref<1x128xf32, #tpu.memory_space<vmem>>, vector<1x128xf32>
    %4 = vector.broadcast %3 : vector<1x128xf32> to vector<512x128xf32>
    %5 = arith.addf %2, %4 : vector<512x128xf32>
    %cst_5 = arith.constant 0.000000e+00 : f32
    %6 = vector.broadcast %cst_5 : f32 to vector<512x128xf32>
    %7 = arith.cmpf oge, %5, %6 : vector<512x128xf32>
    %cst_6 = arith.constant 2.000000e-01 : f32
    %8 = vector.broadcast %cst_6 : f32 to vector<512x128xf32>
    %9 = arith.mulf %8, %5 : vector<512x128xf32>
    %10 = arith.select %7, %5, %9 : vector<512x128xi1>, vector<512x128xf32>
    %11 = arith.truncf %10 : vector<512x128xf32> to vector<512x128xbf16>
    %c0_7 = arith.constant 0 : index
    %c0_8 = arith.constant 0 : index
    %12 = vector.load %arg4[%c0_7, %c0_8] : memref<512x128xbf16, #tpu.memory_space<vmem>>, vector<512x128xbf16>
    tpu.vector_store %arg4[%c0_7, %c0_8], %11 {strides = array<i32>} : memref<512x128xbf16, #tpu.memory_space<vmem>>, vector<512x128xbf16>,
    return
  }
  func.func @transform_0(%arg0: i32) -> (i32, i32) {
    %c0_i32 = arith.constant 0 : i32
    %c0_i32_0 = arith.constant 0 : i32
    return %arg0, %c0_i32 : i32, i32
  }
  func.func @transform_1(%arg0: i32) -> (i32, i32) {
    %c0_i32 = arith.constant 0 : i32
    %c0_i32_0 = arith.constant 0 : i32
    %c0_i32_1 = arith.constant 0 : i32
    return %c0_i32, %c0_i32_0 : i32, i32
  }
  func.func @transform_2(%arg0: i32) -> (i32, i32) {
    %c0_i32 = arith.constant 0 : i32
    %c0_i32_0 = arith.constant 0 : i32
    %c0_i32_1 = arith.constant 0 : i32
    return %c0_i32, %c0_i32_0 : i32, i32
  }
  func.func @transform_3(%arg0: i32) -> (i32, i32) {
    %c0_i32 = arith.constant 0 : i32
    %c0_i32_0 = arith.constant 0 : i32
    return %arg0, %c0_i32 : i32, i32
  }
}

module attributes {stable_mosaic.version = 11 : i64} {
  func.func @_conv_mm_kernel(%arg0: i32, %arg1: memref<128x256xbf16, #tpu.memory_space<vmem>>, %arg2: memref<256x128xbf16, #tpu.memory_space<vmem>>, %arg3: memref<1x128xf32, #tpu.memory_space<vmem>>, %arg4: memref<128x128xbf16, #tpu.memory_space<vmem>>) attributes {dimension_semantics = [#tpu.dimension_semantics<parallel>], iteration_bounds = array<i64: 1>, scalar_prefetch = 0 : i64, scratch_operands = 0 : i64, tpu.core_type = #tpu.core_type<tc>, window_params = [{transform_indices = @transform_0, window_bounds = array<i64: 128, 256>}, {pipeline_mode = #tpu.pipeline_mode<synchronous>, transform_indices = @transform_1, window_bounds = array<i64: 256, 128>}, {pipeline_mode = #tpu.pipeline_mode<synchronous>, transform_indices = @transform_2, window_bounds = array<i64: 1, 128>}, {transform_indices = @transform_3, window_bounds = array<i64: 128, 128>}]} {
    %c0 = arith.constant 0 : index
    %c0_0 = arith.constant 0 : index
    %0 = vector.load %arg1[%c0, %c0_0] : memref<128x256xbf16, #tpu.memory_space<vmem>>, vector<128x256xbf16>
    %c0_1 = arith.constant 0 : index
    %c0_2 = arith.constant 0 : index
    %1 = vector.load %arg2[%c0_1, %c0_2] : memref<256x128xbf16, #tpu.memory_space<vmem>>, vector<256x128xbf16>
    %cst = arith.constant dense<0.000000e+00> : vector<128x128xf32>
    %2 = tpu.matmul %0, %1, %cst {dimension_numbers = #tpu.dot_dimension_numbers<[1], [0], [0], [1], [0, 0, 1, 1], [], []>} : vector<128x256xbf16>, vector<256x128xbf16>, vector<128x128xf32> -> vector<128x128xf32>
    %c0_3 = arith.constant 0 : index
    %c0_4 = arith.constant 0 : index
    %3 = vector.load %arg3[%c0_3, %c0_4] : memref<1x128xf32, #tpu.memory_space<vmem>>, vector<1x128xf32>
    %4 = vector.broadcast %3 : vector<1x128xf32> to vector<128x128xf32>
    %5 = arith.addf %2, %4 : vector<128x128xf32>
    %cst_5 = arith.constant 0.000000e+00 : f32
    %6 = vector.broadcast %cst_5 : f32 to vector<128x128xf32>
    %7 = arith.cmpf oge, %5, %6 : vector<128x128xf32>
    %cst_6 = arith.constant 2.000000e-01 : f32
    %8 = vector.broadcast %cst_6 : f32 to vector<128x128xf32>
    %9 = arith.mulf %8, %5 : vector<128x128xf32>
    %10 = arith.select %7, %5, %9 : vector<128x128xi1>, vector<128x128xf32>
    %11 = arith.truncf %10 : vector<128x128xf32> to vector<128x128xbf16>
    %c0_7 = arith.constant 0 : index
    %c0_8 = arith.constant 0 : index
    %12 = vector.load %arg4[%c0_7, %c0_8] : memref<128x128xbf16, #tpu.memory_space<vmem>>, vector<128x128xbf16>
    tpu.vector_store %arg4[%c0_7, %c0_8], %11 {strides = array<i32>} : memref<128x128xbf16, #tpu.memory_space<vmem>>, vector<128x128xbf16>,
    return
  }
  func.func @transform_0(%arg0: i32) -> (i32, i32) {
    %c0_i32 = arith.constant 0 : i32
    %c0_i32_0 = arith.constant 0 : i32
    return %arg0, %c0_i32 : i32, i32
  }
  func.func @transform_1(%arg0: i32) -> (i32, i32) {
    %c0_i32 = arith.constant 0 : i32
    %c0_i32_0 = arith.constant 0 : i32
    %c0_i32_1 = arith.constant 0 : i32
    return %c0_i32, %c0_i32_0 : i32, i32
  }
  func.func @transform_2(%arg0: i32) -> (i32, i32) {
    %c0_i32 = arith.constant 0 : i32
    %c0_i32_0 = arith.constant 0 : i32
    %c0_i32_1 = arith.constant 0 : i32
    return %c0_i32, %c0_i32_0 : i32, i32
  }
  func.func @transform_3(%arg0: i32) -> (i32, i32) {
    %c0_i32 = arith.constant 0 : i32
    %c0_i32_0 = arith.constant 0 : i32
    return %arg0, %c0_i32 : i32, i32
  }
}

module attributes {stable_mosaic.version = 11 : i64} {
  func.func @_conv_mm_kernel(%arg0: i32, %arg1: memref<32x512xbf16, #tpu.memory_space<vmem>>, %arg2: memref<512x128xbf16, #tpu.memory_space<vmem>>, %arg3: memref<1x128xf32, #tpu.memory_space<vmem>>, %arg4: memref<32x128xbf16, #tpu.memory_space<vmem>>) attributes {dimension_semantics = [#tpu.dimension_semantics<parallel>], iteration_bounds = array<i64: 1>, scalar_prefetch = 0 : i64, scratch_operands = 0 : i64, tpu.core_type = #tpu.core_type<tc>, window_params = [{transform_indices = @transform_0, window_bounds = array<i64: 32, 512>}, {pipeline_mode = #tpu.pipeline_mode<synchronous>, transform_indices = @transform_1, window_bounds = array<i64: 512, 128>}, {pipeline_mode = #tpu.pipeline_mode<synchronous>, transform_indices = @transform_2, window_bounds = array<i64: 1, 128>}, {transform_indices = @transform_3, window_bounds = array<i64: 32, 128>}]} {
    %c0 = arith.constant 0 : index
    %c0_0 = arith.constant 0 : index
    %0 = vector.load %arg1[%c0, %c0_0] : memref<32x512xbf16, #tpu.memory_space<vmem>>, vector<32x512xbf16>
    %c0_1 = arith.constant 0 : index
    %c0_2 = arith.constant 0 : index
    %1 = vector.load %arg2[%c0_1, %c0_2] : memref<512x128xbf16, #tpu.memory_space<vmem>>, vector<512x128xbf16>
    %cst = arith.constant dense<0.000000e+00> : vector<32x128xf32>
    %2 = tpu.matmul %0, %1, %cst {dimension_numbers = #tpu.dot_dimension_numbers<[1], [0], [0], [1], [0, 0, 1, 1], [], []>} : vector<32x512xbf16>, vector<512x128xbf16>, vector<32x128xf32> -> vector<32x128xf32>
    %c0_3 = arith.constant 0 : index
    %c0_4 = arith.constant 0 : index
    %3 = vector.load %arg3[%c0_3, %c0_4] : memref<1x128xf32, #tpu.memory_space<vmem>>, vector<1x128xf32>
    %4 = vector.broadcast %3 : vector<1x128xf32> to vector<32x128xf32>
    %5 = arith.addf %2, %4 : vector<32x128xf32>
    %cst_5 = arith.constant 0.000000e+00 : f32
    %6 = vector.broadcast %cst_5 : f32 to vector<32x128xf32>
    %7 = arith.cmpf oge, %5, %6 : vector<32x128xf32>
    %cst_6 = arith.constant 2.000000e-01 : f32
    %8 = vector.broadcast %cst_6 : f32 to vector<32x128xf32>
    %9 = arith.mulf %8, %5 : vector<32x128xf32>
    %10 = arith.select %7, %5, %9 : vector<32x128xi1>, vector<32x128xf32>
    %11 = arith.truncf %10 : vector<32x128xf32> to vector<32x128xbf16>
    %c0_7 = arith.constant 0 : index
    %c0_8 = arith.constant 0 : index
    %12 = vector.load %arg4[%c0_7, %c0_8] : memref<32x128xbf16, #tpu.memory_space<vmem>>, vector<32x128xbf16>
    tpu.vector_store %arg4[%c0_7, %c0_8], %11 {strides = array<i32>} : memref<32x128xbf16, #tpu.memory_space<vmem>>, vector<32x128xbf16>,
    return
  }
  func.func @transform_0(%arg0: i32) -> (i32, i32) {
    %c0_i32 = arith.constant 0 : i32
    %c0_i32_0 = arith.constant 0 : i32
    return %arg0, %c0_i32 : i32, i32
  }
  func.func @transform_1(%arg0: i32) -> (i32, i32) {
    %c0_i32 = arith.constant 0 : i32
    %c0_i32_0 = arith.constant 0 : i32
    %c0_i32_1 = arith.constant 0 : i32
    return %c0_i32, %c0_i32_0 : i32, i32
  }
  func.func @transform_2(%arg0: i32) -> (i32, i32) {
    %c0_i32 = arith.constant 0 : i32
    %c0_i32_0 = arith.constant 0 : i32
    %c0_i32_1 = arith.constant 0 : i32
    return %c0_i32, %c0_i32_0 : i32, i32
  }
  func.func @transform_3(%arg0: i32) -> (i32, i32) {
    %c0_i32 = arith.constant 0 : i32
    %c0_i32_0 = arith.constant 0 : i32
    return %arg0, %c0_i32 : i32, i32
  }
}

module attributes {stable_mosaic.version = 11 : i64} {
  func.func @_conv_mm_kernel(%arg0: i32, %arg1: memref<32x1024xbf16, #tpu.memory_space<vmem>>, %arg2: memref<1024x128xbf16, #tpu.memory_space<vmem>>, %arg3: memref<1x128xf32, #tpu.memory_space<vmem>>, %arg4: memref<32x128xbf16, #tpu.memory_space<vmem>>) attributes {dimension_semantics = [#tpu.dimension_semantics<parallel>], iteration_bounds = array<i64: 1>, scalar_prefetch = 0 : i64, scratch_operands = 0 : i64, tpu.core_type = #tpu.core_type<tc>, window_params = [{transform_indices = @transform_0, window_bounds = array<i64: 32, 1024>}, {pipeline_mode = #tpu.pipeline_mode<synchronous>, transform_indices = @transform_1, window_bounds = array<i64: 1024, 128>}, {pipeline_mode = #tpu.pipeline_mode<synchronous>, transform_indices = @transform_2, window_bounds = array<i64: 1, 128>}, {transform_indices = @transform_3, window_bounds = array<i64: 32, 128>}]} {
    %c0 = arith.constant 0 : index
    %c0_0 = arith.constant 0 : index
    %0 = vector.load %arg1[%c0, %c0_0] : memref<32x1024xbf16, #tpu.memory_space<vmem>>, vector<32x1024xbf16>
    %c0_1 = arith.constant 0 : index
    %c0_2 = arith.constant 0 : index
    %1 = vector.load %arg2[%c0_1, %c0_2] : memref<1024x128xbf16, #tpu.memory_space<vmem>>, vector<1024x128xbf16>
    %cst = arith.constant dense<0.000000e+00> : vector<32x128xf32>
    %2 = tpu.matmul %0, %1, %cst {dimension_numbers = #tpu.dot_dimension_numbers<[1], [0], [0], [1], [0, 0, 1, 1], [], []>} : vector<32x1024xbf16>, vector<1024x128xbf16>, vector<32x128xf32> -> vector<32x128xf32>
    %c0_3 = arith.constant 0 : index
    %c0_4 = arith.constant 0 : index
    %3 = vector.load %arg3[%c0_3, %c0_4] : memref<1x128xf32, #tpu.memory_space<vmem>>, vector<1x128xf32>
    %4 = vector.broadcast %3 : vector<1x128xf32> to vector<32x128xf32>
    %5 = arith.addf %2, %4 : vector<32x128xf32>
    %cst_5 = arith.constant 0.000000e+00 : f32
    %6 = vector.broadcast %cst_5 : f32 to vector<32x128xf32>
    %7 = arith.cmpf oge, %5, %6 : vector<32x128xf32>
    %cst_6 = arith.constant 2.000000e-01 : f32
    %8 = vector.broadcast %cst_6 : f32 to vector<32x128xf32>
    %9 = arith.mulf %8, %5 : vector<32x128xf32>
    %10 = arith.select %7, %5, %9 : vector<32x128xi1>, vector<32x128xf32>
    %11 = arith.truncf %10 : vector<32x128xf32> to vector<32x128xbf16>
    %c0_7 = arith.constant 0 : index
    %c0_8 = arith.constant 0 : index
    %12 = vector.load %arg4[%c0_7, %c0_8] : memref<32x128xbf16, #tpu.memory_space<vmem>>, vector<32x128xbf16>
    tpu.vector_store %arg4[%c0_7, %c0_8], %11 {strides = array<i32>} : memref<32x128xbf16, #tpu.memory_space<vmem>>, vector<32x128xbf16>,
    return
  }
  func.func @transform_0(%arg0: i32) -> (i32, i32) {
    %c0_i32 = arith.constant 0 : i32
    %c0_i32_0 = arith.constant 0 : i32
    return %arg0, %c0_i32 : i32, i32
  }
  func.func @transform_1(%arg0: i32) -> (i32, i32) {
    %c0_i32 = arith.constant 0 : i32
    %c0_i32_0 = arith.constant 0 : i32
    %c0_i32_1 = arith.constant 0 : i32
    return %c0_i32, %c0_i32_0 : i32, i32
  }
  func.func @transform_2(%arg0: i32) -> (i32, i32) {
    %c0_i32 = arith.constant 0 : i32
    %c0_i32_0 = arith.constant 0 : i32
    %c0_i32_1 = arith.constant 0 : i32
    return %c0_i32, %c0_i32_0 : i32, i32
  }
  func.func @transform_3(%arg0: i32) -> (i32, i32) {
    %c0_i32 = arith.constant 0 : i32
    %c0_i32_0 = arith.constant 0 : i32
    return %arg0, %c0_i32 : i32, i32
  }
}

module attributes {stable_mosaic.version = 11 : i64} {
  func.func @_conv_mm_kernel(%arg0: i32, %arg1: memref<16x2048xbf16, #tpu.memory_space<vmem>>, %arg2: memref<2048x128xbf16, #tpu.memory_space<vmem>>, %arg3: memref<1x128xf32, #tpu.memory_space<vmem>>, %arg4: memref<16x128xf32, #tpu.memory_space<vmem>>) attributes {dimension_semantics = [#tpu.dimension_semantics<parallel>], iteration_bounds = array<i64: 1>, scalar_prefetch = 0 : i64, scratch_operands = 0 : i64, tpu.core_type = #tpu.core_type<tc>, window_params = [{transform_indices = @transform_0, window_bounds = array<i64: 16, 2048>}, {pipeline_mode = #tpu.pipeline_mode<synchronous>, transform_indices = @transform_1, window_bounds = array<i64: 2048, 128>}, {pipeline_mode = #tpu.pipeline_mode<synchronous>, transform_indices = @transform_2, window_bounds = array<i64: 1, 128>}, {transform_indices = @transform_3, window_bounds = array<i64: 16, 128>}]} {
    %c0 = arith.constant 0 : index
    %c0_0 = arith.constant 0 : index
    %0 = vector.load %arg1[%c0, %c0_0] : memref<16x2048xbf16, #tpu.memory_space<vmem>>, vector<16x2048xbf16>
    %c0_1 = arith.constant 0 : index
    %c0_2 = arith.constant 0 : index
    %1 = vector.load %arg2[%c0_1, %c0_2] : memref<2048x128xbf16, #tpu.memory_space<vmem>>, vector<2048x128xbf16>
    %cst = arith.constant dense<0.000000e+00> : vector<16x128xf32>
    %2 = tpu.matmul %0, %1, %cst {dimension_numbers = #tpu.dot_dimension_numbers<[1], [0], [0], [1], [0, 0, 1, 1], [], []>} : vector<16x2048xbf16>, vector<2048x128xbf16>, vector<16x128xf32> -> vector<16x128xf32>
    %c0_3 = arith.constant 0 : index
    %c0_4 = arith.constant 0 : index
    %3 = vector.load %arg3[%c0_3, %c0_4] : memref<1x128xf32, #tpu.memory_space<vmem>>, vector<1x128xf32>
    %4 = vector.broadcast %3 : vector<1x128xf32> to vector<16x128xf32>
    %5 = arith.addf %2, %4 : vector<16x128xf32>
    %c0_5 = arith.constant 0 : index
    %c0_6 = arith.constant 0 : index
    %6 = vector.load %arg4[%c0_5, %c0_6] : memref<16x128xf32, #tpu.memory_space<vmem>>, vector<16x128xf32>
    tpu.vector_store %arg4[%c0_5, %c0_6], %5 {strides = array<i32>} : memref<16x128xf32, #tpu.memory_space<vmem>>, vector<16x128xf32>,
    return
  }
  func.func @transform_0(%arg0: i32) -> (i32, i32) {
    %c0_i32 = arith.constant 0 : i32
    %c0_i32_0 = arith.constant 0 : i32
    return %arg0, %c0_i32 : i32, i32
  }
  func.func @transform_1(%arg0: i32) -> (i32, i32) {
    %c0_i32 = arith.constant 0 : i32
    %c0_i32_0 = arith.constant 0 : i32
    %c0_i32_1 = arith.constant 0 : i32
    return %c0_i32, %c0_i32_0 : i32, i32
  }
  func.func @transform_2(%arg0: i32) -> (i32, i32) {
    %c0_i32 = arith.constant 0 : i32
    %c0_i32_0 = arith.constant 0 : i32
    %c0_i32_1 = arith.constant 0 : i32
    return %c0_i32, %c0_i32_0 : i32, i32
  }
  func.func @transform_3(%arg0: i32) -> (i32, i32) {
    %c0_i32 = arith.constant 0 : i32
    %c0_i32_0 = arith.constant 0 : i32
    return %arg0, %c0_i32 : i32, i32
  }
}

</mosaic_0001>

<llo_original>
// kernel: spectral_discriminator_forward.5
$region0: #{spectral_discriminator_forward.5}
  #allocation0 [shape = 'u32[]', space=smem, size = 0x4, offset = 0x4, fixed_abs, tag = 'smem constant byte address 0x4 - core index']
  #allocation1 [shape = 'u32[72,128]{1,0:T(1,128)}', space=vmem, size = 0x9000, scoped, tag = 'internal scratch']
  %s0 = inlined_call_operand.vmem [shape: bf16[512,128], index: 0, kind: input, shape index: {}]
  %s1 = inlined_call_operand.vmem [shape: bf16[128,128], index: 1, kind: input, shape index: {}]
  %s2 = inlined_call_operand.vmem [shape: f32[1,128], index: 2, kind: input, shape index: {}]
  %s3 = inlined_call_operand.vmem [shape: bf16[512,128], index: 3, kind: output, shape index: {}]
  %s4 = sld [smem:[#allocation0]]
  $region22: #{spectral_discriminator_forward.5} parent=0
    _
  %s6 = ssub.s32 1, %s4
  %s7 = scalar_select 0, %s6, %s4
  // Predicated region
  $region2: #{spectral_discriminator_forward.5} parent=0 // pred_check
    _
  $region3: #{spectral_discriminator_forward.5} parent=0 // pred_check_branch
    %9 = sbr.rel (0) target = $region5
  $region4: #{spectral_discriminator_forward.5} parent=0 // pred_region
    _
  $region5: #{spectral_discriminator_forward.5} parent=0 // pred_fallthru
    _
  // Predicated region
  $region6: #{spectral_discriminator_forward.5} parent=0 // pred_check
    _
  $region7: #{spectral_discriminator_forward.5} parent=0 // pred_check_branch
    %11 = sbr.rel (0) target = $region9
  $region8: #{spectral_discriminator_forward.5} parent=0 // pred_region
    _
  $region9: #{spectral_discriminator_forward.5} parent=0 // pred_fallthru
    _
  // Predicated region
  $region10: #{spectral_discriminator_forward.5} parent=0 // pred_check
    _
  $region11: #{spectral_discriminator_forward.5} parent=0 // pred_check_branch
    %13 = sbr.rel (0) target = $region13
  $region12: #{spectral_discriminator_forward.5} parent=0 // pred_region
    _
  $region13: #{spectral_discriminator_forward.5} parent=0 // pred_fallthru
    _
  %v14 = vld [vmem:[%s0] sm:$0xf]
  %v15 = vld [vmem:[%s0 + $0x4] sm:$0xf]
  %v16 = vld [vmem:[%s0 + $0x8] sm:$0xf]
  %v17 = vld [vmem:[%s0 + $0xc] sm:$0xf]
  %v18 = vld [vmem:[%s0 + $0x10] sm:$0xf]
  %v19 = vld [vmem:[%s0 + $0x14] sm:$0xf]
  %v20 = vld [vmem:[%s0 + $0x18] sm:$0xf]
  %v21 = vld [vmem:[%s0 + $0x1c] sm:$0xf]
  %v22 = vld [vmem:[%s0 + $0x20] sm:$0xf]
  %v23 = vld [vmem:[%s0 + $0x24] sm:$0xf]
  %v24 = vld [vmem:[%s0 + $0x28] sm:$0xf]
  %v25 = vld [vmem:[%s0 + $0x2c] sm:$0xf]
  %v26 = vld [vmem:[%s0 + $0x30] sm:$0xf]
  %v27 = vld [vmem:[%s0 + $0x34] sm:$0xf]
  %v28 = vld [vmem:[%s0 + $0x38] sm:$0xf]
  %v29 = vld [vmem:[%s0 + $0x3c] sm:$0xf]
  %v30 = vld [vmem:[%s0 + $0x40] sm:$0xf]
  %v31 = vld [vmem:[%s0 + $0x44] sm:$0xf]
  %v32 = vld [vmem:[%s0 + $0x48] sm:$0xf]
  %v33 = vld [vmem:[%s0 + $0x4c] sm:$0xf]
  %v34 = vld [vmem:[%s0 + $0x50] sm:$0xf]
  %v35 = vld [vmem:[%s0 + $0x54] sm:$0xf]
  %v36 = vld [vmem:[%s0 + $0x58] sm:$0xf]
  %v37 = vld [vmem:[%s0 + $0x5c] sm:$0xf]
  %v38 = vld [vmem:[%s0 + $0x60] sm:$0xf]
  %v39 = vld [vmem:[%s0 + $0x64] sm:$0xf]
  %v40 = vld [vmem:[%s0 + $0x68] sm:$0xf]
  %v41 = vld [vmem:[%s0 + $0x6c] sm:$0xf]
  %v42 = vld [vmem:[%s0 + $0x70] sm:$0xf]
  %v43 = vld [vmem:[%s0 + $0x74] sm:$0xf]
  %v44 = vld [vmem:[%s0 + $0x78] sm:$0xf]
  %v45 = vld [vmem:[%s0 + $0x7c] sm:$0xf]
  %v46 = vld [vmem:[%s0 + $0x80] sm:$0xf]
  %v47 = vld [vmem:[%s0 + $0x84] sm:$0xf]
  %v48 = vld [vmem:[%s0 + $0x88] sm:$0xf]
  %v49 = vld [vmem:[%s0 + $0x8c] sm:$0xf]
  %v50 = vld [vmem:[%s0 + $0x90] sm:$0xf]
  %v51 = vld [vmem:[%s0 + $0x94] sm:$0xf]
  %v52 = vld [vmem:[%s0 + $0x98] sm:$0xf]
  %v53 = vld [vmem:[%s0 + $0x9c] sm:$0xf]
  %v54 = vld [vmem:[%s0 + $0xa0] sm:$0xf]
  %v55 = vld [vmem:[%s0 + $0xa4] sm:$0xf]
  %v56 = vld [vmem:[%s0 + $0xa8] sm:$0xf]
  %v57 = vld [vmem:[%s0 + $0xac] sm:$0xf]
  %v58 = vld [vmem:[%s0 + $0xb0] sm:$0xf]
  %v59 = vld [vmem:[%s0 + $0xb4] sm:$0xf]
  %v60 = vld [vmem:[%s0 + $0xb8] sm:$0xf]
  %v61 = vld [vmem:[%s0 + $0xbc] sm:$0xf]
  %v62 = vld [vmem:[%s0 + $0xc0] sm:$0xf]
  %v63 = vld [vmem:[%s0 + $0xc4] sm:$0xf]
  %v64 = vld [vmem:[%s0 + $0xc8] sm:$0xf]
  %v65 = vld [vmem:[%s0 + $0xcc] sm:$0xf]
  %v66 = vld [vmem:[%s0 + $0xd0] sm:$0xf]
  %v67 = vld [vmem:[%s0 + $0xd4] sm:$0xf]
  %v68 = vld [vmem:[%s0 + $0xd8] sm:$0xf]
  %v69 = vld [vmem:[%s0 + $0xdc] sm:$0xf]
  %v70 = vld [vmem:[%s0 + $0xe0] sm:$0xf]
  %v71 = vld [vmem:[%s0 + $0xe4] sm:$0xf]
  %v72 = vld [vmem:[%s0 + $0xe8] sm:$0xf]
  %v73 = vld [vmem:[%s0 + $0xec] sm:$0xf]
  %v74 = vld [vmem:[%s0 + $0xf0] sm:$0xf]
  %v75 = vld [vmem:[%s0 + $0xf4] sm:$0xf]
  %v76 = vld [vmem:[%s0 + $0xf8] sm:$0xf]
  %v77 = vld [vmem:[%s0 + $0xfc] sm:$0xf]
  %v78 = vld [vmem:[%s1] sm:$0xf]
  %v79 = vld [vmem:[%s1 + $0x4] sm:$0xf]
  %v80 = vld [vmem:[%s1 + $0x8] sm:$0xf]
  %v81 = vld [vmem:[%s1 + $0xc] sm:$0xf]
  %v82 = vld [vmem:[%s1 + $0x10] sm:$0xf]
  %v83 = vld [vmem:[%s1 + $0x14] sm:$0xf]
  %v84 = vld [vmem:[%s1 + $0x18] sm:$0xf]
  %v85 = vld [vmem:[%s1 + $0x1c] sm:$0xf]
  %v86 = vld [vmem:[%s1 + $0x20] sm:$0xf]
  %v87 = vld [vmem:[%s1 + $0x24] sm:$0xf]
  %v88 = vld [vmem:[%s1 + $0x28] sm:$0xf]
  %v89 = vld [vmem:[%s1 + $0x2c] sm:$0xf]
  %v90 = vld [vmem:[%s1 + $0x30] sm:$0xf]
  %v91 = vld [vmem:[%s1 + $0x34] sm:$0xf]
  %v92 = vld [vmem:[%s1 + $0x38] sm:$0xf]
  %v93 = vld [vmem:[%s1 + $0x3c] sm:$0xf]
  %v94 = vld [vmem:[%s2] sm:$0x1]
  %v96 = vperm.slane %v94, 0
  %v162 = vunpack.c.l.b16 %v14
  %v163 = vunpack.c.l.b16 %v15
  %v164 = vunpack.c.l.b16 %v16
  %v165 = vunpack.c.l.b16 %v17
  %v166 = vunpack.c.l.b16 %v18
  %v167 = vunpack.c.l.b16 %v19
  %v168 = vunpack.c.l.b16 %v20
  %v169 = vunpack.c.l.b16 %v21
  %v170 = vunpack.c.l.b16 %v22
  %v171 = vunpack.c.l.b16 %v23
  %v172 = vunpack.c.l.b16 %v24
  %v173 = vunpack.c.l.b16 %v25
  %v174 = vunpack.c.l.b16 %v26
  %v175 = vunpack.c.l.b16 %v27
  %v176 = vunpack.c.l.b16 %v28
  %v177 = vunpack.c.l.b16 %v29
  %v178 = vunpack.c.l.b16 %v30
  %v179 = vunpack.c.l.b16 %v31
  %v180 = vunpack.c.l.b16 %v32
  %v181 = vunpack.c.l.b16 %v33
  %v182 = vunpack.c.l.b16 %v34
  %v183 = vunpack.c.l.b16 %v35
  %v184 = vunpack.c.l.b16 %v36
  %v185 = vunpack.c.l.b16 %v37
  %v186 = vunpack.c.l.b16 %v38
  %v187 = vunpack.c.l.b16 %v39
  %v188 = vunpack.c.l.b16 %v40
  %v189 = vunpack.c.l.b16 %v41
  %v190 = vunpack.c.l.b16 %v42
  %v191 = vunpack.c.l.b16 %v43
  %v192 = vunpack.c.l.b16 %v44
  %v193 = vunpack.c.l.b16 %v45
  %v194 = vunpack.c.l.b16 %v46
  %v195 = vunpack.c.l.b16 %v47
  %v196 = vunpack.c.l.b16 %v48
  %v197 = vunpack.c.l.b16 %v49
  %v198 = vunpack.c.l.b16 %v50
  %v199 = vunpack.c.l.b16 %v51
  %v200 = vunpack.c.l.b16 %v52
  %v201 = vunpack.c.l.b16 %v53
  %v202 = vunpack.c.l.b16 %v54
  %v203 = vunpack.c.l.b16 %v55
  %v204 = vunpack.c.l.b16 %v56
  %v205 = vunpack.c.l.b16 %v57
  %v206 = vunpack.c.l.b16 %v58
  %v207 = vunpack.c.l.b16 %v59
  %v208 = vunpack.c.l.b16 %v60
  %v209 = vunpack.c.l.b16 %v61
  %v210 = vunpack.c.l.b16 %v62
  %v211 = vunpack.c.l.b16 %v63
  %v212 = vunpack.c.l.b16 %v64
  %v213 = vunpack.c.l.b16 %v65
  %v214 = vunpack.c.l.b16 %v66
  %v215 = vunpack.c.l.b16 %v67
  %v216 = vunpack.c.l.b16 %v68
  %v217 = vunpack.c.l.b16 %v69
  %v218 = vunpack.c.l.b16 %v70
  %v219 = vunpack.c.l.b16 %v71
  %v220 = vunpack.c.l.b16 %v72
  %v221 = vunpack.c.l.b16 %v73
  %v222 = vunpack.c.l.b16 %v74
  %v223 = vunpack.c.l.b16 %v75
  %v224 = vunpack.c.l.b16 %v76
  %v225 = vunpack.c.l.b16 %v77
  %v226 = vpack.c.b16 %v163, %v162
  %v227 = vpack.c.b16 %v165, %v164
  %v228 = vpack.c.b16 %v167, %v166
  %v229 = vpack.c.b16 %v169, %v168
  %v230 = vpack.c.b16 %v171, %v170
  %v231 = vpack.c.b16 %v173, %v172
  %v232 = vpack.c.b16 %v175, %v174
  %v233 = vpack.c.b16 %v177, %v176
  %v234 = vpack.c.b16 %v179, %v178
  %v235 = vpack.c.b16 %v181, %v180
  %v236 = vpack.c.b16 %v183, %v182
  %v237 = vpack.c.b16 %v185, %v184
  %v238 = vpack.c.b16 %v187, %v186
  %v239 = vpack.c.b16 %v189, %v188
  %v240 = vpack.c.b16 %v191, %v190
  %v241 = vpack.c.b16 %v193, %v192
  %v242 = vpack.c.b16 %v195, %v194
  %v243 = vpack.c.b16 %v197, %v196
  %v244 = vpack.c.b16 %v199, %v198
  %v245 = vpack.c.b16 %v201, %v200
  %v246 = vpack.c.b16 %v203, %v202
  %v247 = vpack.c.b16 %v205, %v204
  %v248 = vpack.c.b16 %v207, %v206
  %v249 = vpack.c.b16 %v209, %v208
  %v250 = vpack.c.b16 %v211, %v210
  %v251 = vpack.c.b16 %v213, %v212
  %v252 = vpack.c.b16 %v215, %v214
  %v253 = vpack.c.b16 %v217, %v216
  %v254 = vpack.c.b16 %v219, %v218
  %v255 = vpack.c.b16 %v221, %v220
  %v256 = vpack.c.b16 %v223, %v222
  %v257 = vpack.c.b16 %v225, %v224
  %v306 = vunpack.c.l.b16 %v78
  %v307 = vunpack.c.l.b16 %v79
  %v308 = vunpack.c.l.b16 %v80
  %v309 = vunpack.c.l.b16 %v81
  %v310 = vunpack.c.l.b16 %v82
  %v311 = vunpack.c.l.b16 %v83
  %v312 = vunpack.c.l.b16 %v84
  %v313 = vunpack.c.l.b16 %v85
  %v314 = vunpack.c.l.b16 %v86
  %v315 = vunpack.c.l.b16 %v87
  %v316 = vunpack.c.l.b16 %v88
  %v317 = vunpack.c.l.b16 %v89
  %v318 = vunpack.c.l.b16 %v90
  %v319 = vunpack.c.l.b16 %v91
  %v320 = vunpack.c.l.b16 %v92
  %v321 = vunpack.c.l.b16 %v93
  %v322 = vpack.c.b16 %v307, %v306
  %v323 = vpack.c.b16 %v309, %v308
  %v324 = vpack.c.b16 %v311, %v310
  %v325 = vpack.c.b16 %v313, %v312
  %v326 = vpack.c.b16 %v315, %v314
  %v327 = vpack.c.b16 %v317, %v316
  %v328 = vpack.c.b16 %v319, %v318
  %v329 = vpack.c.b16 %v321, %v320
  %338 = vmatpush.bf16.msra.mxu0 %v329
  %339 = vmatpush.bf16.msra.mxu0 %v328
  %340 = vmatpush.bf16.msra.mxu0 %v327
  %341 = vmatpush.bf16.msra.mxu0 %v326
  %342 = vmatpush.bf16.msra.mxu0 %v325
  %343 = vmatpush.bf16.msra.mxu0 %v324
  %344 = vmatpush.bf16.msra.mxu0 %v323
  %345 = vmatpush.bf16.msra.mxu0 %v322
  %346 = vmatmul.bf16.gmra.mxu0 %v226
  %v347 = vpop.f32.mrf.mxu0
  %v348 = vadd.f32 %v96, %v347
  %v349 = vpop.f32.mrf.mxu0
  %v350 = vadd.f32 %v96, %v349
  %351 = vmatmul.bf16.gmra.mxu0 %v227
  %v352 = vpop.f32.mrf.mxu0
  %v353 = vadd.f32 %v96, %v352
  %v354 = vpop.f32.mrf.mxu0
  %v355 = vadd.f32 %v96, %v354
  %356 = vmatmul.bf16.gmra.mxu0 %v228
  %v357 = vpop.f32.mrf.mxu0
  %v358 = vadd.f32 %v96, %v357
  %v359 = vpop.f32.mrf.mxu0
  %v360 = vadd.f32 %v96, %v359
  %361 = vmatmul.bf16.gmra.mxu0 %v229
  %v362 = vpop.f32.mrf.mxu0
  %v363 = vadd.f32 %v96, %v362
  %v364 = vpop.f32.mrf.mxu0
  %v365 = vadd.f32 %v96, %v364
  %366 = vmatmul.bf16.gmra.mxu0 %v230
  %v367 = vpop.f32.mrf.mxu0
  %v368 = vadd.f32 %v96, %v367
  %v369 = vpop.f32.mrf.mxu0
  %v370 = vadd.f32 %v96, %v369
  %371 = vmatmul.bf16.gmra.mxu0 %v231
  %v372 = vpop.f32.mrf.mxu0
  %v373 = vadd.f32 %v96, %v372
  %v374 = vpop.f32.mrf.mxu0
  %v375 = vadd.f32 %v96, %v374
  %376 = vmatmul.bf16.gmra.mxu0 %v232
  %v377 = vpop.f32.mrf.mxu0
  %v378 = vadd.f32 %v96, %v377
  %v379 = vpop.f32.mrf.mxu0
  %v380 = vadd.f32 %v96, %v379
  %381 = vmatmul.bf16.gmra.mxu0 %v233
  %v382 = vpop.f32.mrf.mxu0
  %v383 = vadd.f32 %v96, %v382
  %v384 = vpop.f32.mrf.mxu0
  %v385 = vadd.f32 %v96, %v384
  %386 = vmatmul.bf16.gmra.mxu0 %v234
  %v387 = vpop.f32.mrf.mxu0
  %v388 = vadd.f32 %v96, %v387
  %v389 = vpop.f32.mrf.mxu0
  %v390 = vadd.f32 %v96, %v389
  %391 = vmatmul.bf16.gmra.mxu0 %v235
  %v392 = vpop.f32.mrf.mxu0
  %v393 = vadd.f32 %v96, %v392
  %v394 = vpop.f32.mrf.mxu0
  %v395 = vadd.f32 %v96, %v394
  %396 = vmatmul.bf16.gmra.mxu0 %v236
  %v397 = vpop.f32.mrf.mxu0
  %v398 = vadd.f32 %v96, %v397
  %v399 = vpop.f32.mrf.mxu0
  %v400 = vadd.f32 %v96, %v399
  %401 = vmatmul.bf16.gmra.mxu0 %v237
  %v402 = vpop.f32.mrf.mxu0
  %v403 = vadd.f32 %v96, %v402
  %v404 = vpop.f32.mrf.mxu0
  %v405 = vadd.f32 %v96, %v404
  %406 = vmatmul.bf16.gmra.mxu0 %v238
  %v407 = vpop.f32.mrf.mxu0
  %v408 = vadd.f32 %v96, %v407
  %v409 = vpop.f32.mrf.mxu0
  %v410 = vadd.f32 %v96, %v409
  %411 = vmatmul.bf16.gmra.mxu0 %v239
  %v412 = vpop.f32.mrf.mxu0
  %v413 = vadd.f32 %v96, %v412
  %v414 = vpop.f32.mrf.mxu0
  %v415 = vadd.f32 %v96, %v414
  %416 = vmatmul.bf16.gmra.mxu0 %v240
  %v417 = vpop.f32.mrf.mxu0
  %v418 = vadd.f32 %v96, %v417
  %v419 = vpop.f32.mrf.mxu0
  %v420 = vadd.f32 %v96, %v419
  %421 = vmatmul.bf16.gmra.mxu0 %v241
  %v422 = vpop.f32.mrf.mxu0
  %v423 = vadd.f32 %v96, %v422
  %v424 = vpop.f32.mrf.mxu0
  %v425 = vadd.f32 %v96, %v424
  %426 = vmatmul.bf16.gmra.mxu0 %v242
  %v427 = vpop.f32.mrf.mxu0
  %v428 = vadd.f32 %v96, %v427
  %v429 = vpop.f32.mrf.mxu0
  %v430 = vadd.f32 %v96, %v429
  %431 = vmatmul.bf16.gmra.mxu0 %v243
  %v432 = vpop.f32.mrf.mxu0
  %v433 = vadd.f32 %v96, %v432
  %v434 = vpop.f32.mrf.mxu0
  %v435 = vadd.f32 %v96, %v434
  %436 = vmatmul.bf16.gmra.mxu0 %v244
  %v437 = vpop.f32.mrf.mxu0
  %v438 = vadd.f32 %v96, %v437
  %v439 = vpop.f32.mrf.mxu0
  %v440 = vadd.f32 %v96, %v439
  %441 = vmatmul.bf16.gmra.mxu0 %v245
  %v442 = vpop.f32.mrf.mxu0
  %v443 = vadd.f32 %v96, %v442
  %v444 = vpop.f32.mrf.mxu0
  %v445 = vadd.f32 %v96, %v444
  %446 = vmatmul.bf16.gmra.mxu0 %v246
  %v447 = vpop.f32.mrf.mxu0
  %v448 = vadd.f32 %v96, %v447
  %v449 = vpop.f32.mrf.mxu0
  %v450 = vadd.f32 %v96, %v449
  %451 = vmatmul.bf16.gmra.mxu0 %v247
  %v452 = vpop.f32.mrf.mxu0
  %v453 = vadd.f32 %v96, %v452
  %v454 = vpop.f32.mrf.mxu0
  %v455 = vadd.f32 %v96, %v454
  %456 = vmatmul.bf16.gmra.mxu0 %v248
  %v457 = vpop.f32.mrf.mxu0
  %v458 = vadd.f32 %v96, %v457
  %v459 = vpop.f32.mrf.mxu0
  %v460 = vadd.f32 %v96, %v459
  %461 = vmatmul.bf16.gmra.mxu0 %v249
  %v462 = vpop.f32.mrf.mxu0
  %v463 = vadd.f32 %v96, %v462
  %v464 = vpop.f32.mrf.mxu0
  %v465 = vadd.f32 %v96, %v464
  %466 = vmatmul.bf16.gmra.mxu0 %v250
  %v467 = vpop.f32.mrf.mxu0
  %v468 = vadd.f32 %v96, %v467
  %v469 = vpop.f32.mrf.mxu0
  %v470 = vadd.f32 %v96, %v469
  %471 = vmatmul.bf16.gmra.mxu0 %v251
  %v472 = vpop.f32.mrf.mxu0
  %v473 = vadd.f32 %v96, %v472
  %v474 = vpop.f32.mrf.mxu0
  %v475 = vadd.f32 %v96, %v474
  %476 = vmatmul.bf16.gmra.mxu0 %v252
  %v477 = vpop.f32.mrf.mxu0
  %v478 = vadd.f32 %v96, %v477
  %v479 = vpop.f32.mrf.mxu0
  %v480 = vadd.f32 %v96, %v479
  %481 = vmatmul.bf16.gmra.mxu0 %v253
  %v482 = vpop.f32.mrf.mxu0
  %v483 = vadd.f32 %v96, %v482
  %v484 = vpop.f32.mrf.mxu0
  %v485 = vadd.f32 %v96, %v484
  %486 = vmatmul.bf16.gmra.mxu0 %v254
  %v487 = vpop.f32.mrf.mxu0
  %v488 = vadd.f32 %v96, %v487
  %v489 = vpop.f32.mrf.mxu0
  %v490 = vadd.f32 %v96, %v489
  %491 = vmatmul.bf16.gmra.mxu0 %v255
  %v492 = vpop.f32.mrf.mxu0
  %v493 = vadd.f32 %v96, %v492
  %v494 = vpop.f32.mrf.mxu0
  %v495 = vadd.f32 %v96, %v494
  %496 = vmatmul.bf16.gmra.mxu0 %v256
  %v497 = vpop.f32.mrf.mxu0
  %v498 = vadd.f32 %v96, %v497
  %v499 = vpop.f32.mrf.mxu0
  %v500 = vadd.f32 %v96, %v499
  %501 = vmatmul.bf16.gmra.mxu0 %v257
  %v502 = vpop.f32.mrf.mxu0
  %v503 = vadd.f32 %v96, %v502
  %v504 = vpop.f32.mrf.mxu0
  %v505 = vadd.f32 %v96, %v504
  %506 = vdwg.mxu0
  %vm507 = vcmp.ge.f32.partialorder %v348, 0.0
  %vm508 = vcmp.ge.f32.partialorder %v350, 0.0
  %vm509 = vcmp.ge.f32.partialorder %v353, 0.0
  %vm510 = vcmp.ge.f32.partialorder %v355, 0.0
  %vm511 = vcmp.ge.f32.partialorder %v358, 0.0
  %vm512 = vcmp.ge.f32.partialorder %v360, 0.0
  %vm513 = vcmp.ge.f32.partialorder %v363, 0.0
  %vm514 = vcmp.ge.f32.partialorder %v365, 0.0
  %vm515 = vcmp.ge.f32.partialorder %v368, 0.0
  %vm516 = vcmp.ge.f32.partialorder %v370, 0.0
  %vm517 = vcmp.ge.f32.partialorder %v373, 0.0
  %vm518 = vcmp.ge.f32.partialorder %v375, 0.0
  %vm519 = vcmp.ge.f32.partialorder %v378, 0.0
  %vm520 = vcmp.ge.f32.partialorder %v380, 0.0
  %vm521 = vcmp.ge.f32.partialorder %v383, 0.0
  %vm522 = vcmp.ge.f32.partialorder %v385, 0.0
  %vm523 = vcmp.ge.f32.partialorder %v388, 0.0
  %vm524 = vcmp.ge.f32.partialorder %v390, 0.0
  %vm525 = vcmp.ge.f32.partialorder %v393, 0.0
  %vm526 = vcmp.ge.f32.partialorder %v395, 0.0
  %vm527 = vcmp.ge.f32.partialorder %v398, 0.0
  %vm528 = vcmp.ge.f32.partialorder %v400, 0.0
  %vm529 = vcmp.ge.f32.partialorder %v403, 0.0
  %vm530 = vcmp.ge.f32.partialorder %v405, 0.0
  %vm531 = vcmp.ge.f32.partialorder %v408, 0.0
  %vm532 = vcmp.ge.f32.partialorder %v410, 0.0
  %vm533 = vcmp.ge.f32.partialorder %v413, 0.0
  %vm534 = vcmp.ge.f32.partialorder %v415, 0.0
  %vm535 = vcmp.ge.f32.partialorder %v418, 0.0
  %vm536 = vcmp.ge.f32.partialorder %v420, 0.0
  %vm537 = vcmp.ge.f32.partialorder %v423, 0.0
  %vm538 = vcmp.ge.f32.partialorder %v425, 0.0
  %vm539 = vcmp.ge.f32.partialorder %v428, 0.0
  %vm540 = vcmp.ge.f32.partialorder %v430, 0.0
  %vm541 = vcmp.ge.f32.partialorder %v433, 0.0
  %vm542 = vcmp.ge.f32.partialorder %v435, 0.0
  %vm543 = vcmp.ge.f32.partialorder %v438, 0.0
  %vm544 = vcmp.ge.f32.partialorder %v440, 0.0
  %vm545 = vcmp.ge.f32.partialorder %v443, 0.0
  %vm546 = vcmp.ge.f32.partialorder %v445, 0.0
  %vm547 = vcmp.ge.f32.partialorder %v448, 0.0
  %vm548 = vcmp.ge.f32.partialorder %v450, 0.0
  %vm549 = vcmp.ge.f32.partialorder %v453, 0.0
  %vm550 = vcmp.ge.f32.partialorder %v455, 0.0
  %vm551 = vcmp.ge.f32.partialorder %v458, 0.0
  %vm552 = vcmp.ge.f32.partialorder %v460, 0.0
  %vm553 = vcmp.ge.f32.partialorder %v463, 0.0
  %vm554 = vcmp.ge.f32.partialorder %v465, 0.0
  %vm555 = vcmp.ge.f32.partialorder %v468, 0.0
  %vm556 = vcmp.ge.f32.partialorder %v470, 0.0
  %vm557 = vcmp.ge.f32.partialorder %v473, 0.0
  %vm558 = vcmp.ge.f32.partialorder %v475, 0.0
  %vm559 = vcmp.ge.f32.partialorder %v478, 0.0
  %vm560 = vcmp.ge.f32.partialorder %v480, 0.0
  %vm561 = vcmp.ge.f32.partialorder %v483, 0.0
  %vm562 = vcmp.ge.f32.partialorder %v485, 0.0
  %vm563 = vcmp.ge.f32.partialorder %v488, 0.0
  %vm564 = vcmp.ge.f32.partialorder %v490, 0.0
  %vm565 = vcmp.ge.f32.partialorder %v493, 0.0
  %vm566 = vcmp.ge.f32.partialorder %v495, 0.0
  %vm567 = vcmp.ge.f32.partialorder %v498, 0.0
  %vm568 = vcmp.ge.f32.partialorder %v500, 0.0
  %vm569 = vcmp.ge.f32.partialorder %v503, 0.0
  %vm570 = vcmp.ge.f32.partialorder %v505, 0.0
  %v571 = vmul.f32 %v348, 0.2
  %v572 = vmul.f32 %v350, 0.2
  %v573 = vmul.f32 %v353, 0.2
  %v574 = vmul.f32 %v355, 0.2
  %v575 = vmul.f32 %v358, 0.2
  %v576 = vmul.f32 %v360, 0.2
  %v577 = vmul.f32 %v363, 0.2
  %v578 = vmul.f32 %v365, 0.2
  %v579 = vmul.f32 %v368, 0.2
  %v580 = vmul.f32 %v370, 0.2
  %v581 = vmul.f32 %v373, 0.2
  %v582 = vmul.f32 %v375, 0.2
  %v583 = vmul.f32 %v378, 0.2
  %v584 = vmul.f32 %v380, 0.2
  %v585 = vmul.f32 %v383, 0.2
  %v586 = vmul.f32 %v385, 0.2
  %v587 = vmul.f32 %v388, 0.2
  %v588 = vmul.f32 %v390, 0.2
  %v589 = vmul.f32 %v393, 0.2
  %v590 = vmul.f32 %v395, 0.2
  %v591 = vmul.f32 %v398, 0.2
  %v592 = vmul.f32 %v400, 0.2
  %v593 = vmul.f32 %v403, 0.2
  %v594 = vmul.f32 %v405, 0.2
  %v595 = vmul.f32 %v408, 0.2
  %v596 = vmul.f32 %v410, 0.2
  %v597 = vmul.f32 %v413, 0.2
  %v598 = vmul.f32 %v415, 0.2
  %v599 = vmul.f32 %v418, 0.2
  %v600 = vmul.f32 %v420, 0.2
  %v601 = vmul.f32 %v423, 0.2
  %v602 = vmul.f32 %v425, 0.2
  %v603 = vmul.f32 %v428, 0.2
  %v604 = vmul.f32 %v430, 0.2
  %v605 = vmul.f32 %v433, 0.2
  %v606 = vmul.f32 %v435, 0.2
  %v607 = vmul.f32 %v438, 0.2
  %v608 = vmul.f32 %v440, 0.2
  %v609 = vmul.f32 %v443, 0.2
  %v610 = vmul.f32 %v445, 0.2
  %v611 = vmul.f32 %v448, 0.2
  %v612 = vmul.f32 %v450, 0.2
  %v613 = vmul.f32 %v453, 0.2
  %v614 = vmul.f32 %v455, 0.2
  %v615 = vmul.f32 %v458, 0.2
  %v616 = vmul.f32 %v460, 0.2
  %v617 = vmul.f32 %v463, 0.2
  %v618 = vmul.f32 %v465, 0.2
  %v619 = vmul.f32 %v468, 0.2
  %v620 = vmul.f32 %v470, 0.2
  %v621 = vmul.f32 %v473, 0.2
  %v622 = vmul.f32 %v475, 0.2
  %v623 = vmul.f32 %v478, 0.2
  %v624 = vmul.f32 %v480, 0.2
  %v625 = vmul.f32 %v483, 0.2
  %v626 = vmul.f32 %v485, 0.2
  %v627 = vmul.f32 %v488, 0.2
  %v628 = vmul.f32 %v490, 0.2
  %v629 = vmul.f32 %v493, 0.2
  %v630 = vmul.f32 %v495, 0.2
  %v631 = vmul.f32 %v498, 0.2
  %v632 = vmul.f32 %v500, 0.2
  %v633 = vmul.f32 %v503, 0.2
  %v634 = vmul.f32 %v505, 0.2
  %v635 = vsel %vm507, %v348, %v571
  %v636 = vsel %vm508, %v350, %v572
  %v637 = vsel %vm509, %v353, %v573
  %v638 = vsel %vm510, %v355, %v574
  %v639 = vsel %vm511, %v358, %v575
  %v640 = vsel %vm512, %v360, %v576
  %v641 = vsel %vm513, %v363, %v577
  %v642 = vsel %vm514, %v365, %v578
  %v643 = vsel %vm515, %v368, %v579
  %v644 = vsel %vm516, %v370, %v580
  %v645 = vsel %vm517, %v373, %v581
  %v646 = vsel %vm518, %v375, %v582
  %v647 = vsel %vm519, %v378, %v583
  %v648 = vsel %vm520, %v380, %v584
  %v649 = vsel %vm521, %v383, %v585
  %v650 = vsel %vm522, %v385, %v586
  %v651 = vsel %vm523, %v388, %v587
  %v652 = vsel %vm524, %v390, %v588
  %v653 = vsel %vm525, %v393, %v589
  %v654 = vsel %vm526, %v395, %v590
  %v655 = vsel %vm527, %v398, %v591
  %v656 = vsel %vm528, %v400, %v592
  %v657 = vsel %vm529, %v403, %v593
  %v658 = vsel %vm530, %v405, %v594
  %v659 = vsel %vm531, %v408, %v595
  %v660 = vsel %vm532, %v410, %v596
  %v661 = vsel %vm533, %v413, %v597
  %v662 = vsel %vm534, %v415, %v598
  %v663 = vsel %vm535, %v418, %v599
  %v664 = vsel %vm536, %v420, %v600
  %v665 = vsel %vm537, %v423, %v601
  %v666 = vsel %vm538, %v425, %v602
  %v667 = vsel %vm539, %v428, %v603
  %v668 = vsel %vm540, %v430, %v604
  %v669 = vsel %vm541, %v433, %v605
  %v670 = vsel %vm542, %v435, %v606
  %v671 = vsel %vm543, %v438, %v607
  %v672 = vsel %vm544, %v440, %v608
  %v673 = vsel %vm545, %v443, %v609
  %v674 = vsel %vm546, %v445, %v610
  %v675 = vsel %vm547, %v448, %v611
  %v676 = vsel %vm548, %v450, %v612
  %v677 = vsel %vm549, %v453, %v613
  %v678 = vsel %vm550, %v455, %v614
  %v679 = vsel %vm551, %v458, %v615
  %v680 = vsel %vm552, %v460, %v616
  %v681 = vsel %vm553, %v463, %v617
  %v682 = vsel %vm554, %v465, %v618
  %v683 = vsel %vm555, %v468, %v619
  %v684 = vsel %vm556, %v470, %v620
  %v685 = vsel %vm557, %v473, %v621
  %v686 = vsel %vm558, %v475, %v622
  %v687 = vsel %vm559, %v478, %v623
  %v688 = vsel %vm560, %v480, %v624
  %v689 = vsel %vm561, %v483, %v625
  %v690 = vsel %vm562, %v485, %v626
  %v691 = vsel %vm563, %v488, %v627
  %v692 = vsel %vm564, %v490, %v628
  %v693 = vsel %vm565, %v493, %v629
  %v694 = vsel %vm566, %v495, %v630
  %v695 = vsel %vm567, %v498, %v631
  %v696 = vsel %vm568, %v500, %v632
  %v697 = vsel %vm569, %v503, %v633
  %v698 = vsel %vm570, %v505, %v634
  %v699 = vpack.c.bf16 %v635, %v635
  %v700 = vpack.c.bf16 %v636, %v636
  %v701 = vpack.c.bf16 %v637, %v637
  %v702 = vpack.c.bf16 %v638, %v638
  %v703 = vpack.c.bf16 %v639, %v639
  %v704 = vpack.c.bf16 %v640, %v640
  %v705 = vpack.c.bf16 %v641, %v641
  %v706 = vpack.c.bf16 %v642, %v642
  %v707 = vpack.c.bf16 %v643, %v643
  %v708 = vpack.c.bf16 %v644, %v644
  %v709 = vpack.c.bf16 %v645, %v645
  %v710 = vpack.c.bf16 %v646, %v646
  %v711 = vpack.c.bf16 %v647, %v647
  %v712 = vpack.c.bf16 %v648, %v648
  %v713 = vpack.c.bf16 %v649, %v649
  %v714 = vpack.c.bf16 %v650, %v650
  %v715 = vpack.c.bf16 %v651, %v651
  %v716 = vpack.c.bf16 %v652, %v652
  %v717 = vpack.c.bf16 %v653, %v653
  %v718 = vpack.c.bf16 %v654, %v654
  %v719 = vpack.c.bf16 %v655, %v655
  %v720 = vpack.c.bf16 %v656, %v656
  %v721 = vpack.c.bf16 %v657, %v657
  %v722 = vpack.c.bf16 %v658, %v658
  %v723 = vpack.c.bf16 %v659, %v659
  %v724 = vpack.c.bf16 %v660, %v660
  %v725 = vpack.c.bf16 %v661, %v661
  %v726 = vpack.c.bf16 %v662, %v662
  %v727 = vpack.c.bf16 %v663, %v663
  %v728 = vpack.c.bf16 %v664, %v664
  %v729 = vpack.c.bf16 %v665, %v665
  %v730 = vpack.c.bf16 %v666, %v666
  %v731 = vpack.c.bf16 %v667, %v667
  %v732 = vpack.c.bf16 %v668, %v668
  %v733 = vpack.c.bf16 %v669, %v669
  %v734 = vpack.c.bf16 %v670, %v670
  %v735 = vpack.c.bf16 %v671, %v671
  %v736 = vpack.c.bf16 %v672, %v672
  %v737 = vpack.c.bf16 %v673, %v673
  %v738 = vpack.c.bf16 %v674, %v674
  %v739 = vpack.c.bf16 %v675, %v675
  %v740 = vpack.c.bf16 %v676, %v676
  %v741 = vpack.c.bf16 %v677, %v677
  %v742 = vpack.c.bf16 %v678, %v678
  %v743 = vpack.c.bf16 %v679, %v679
  %v744 = vpack.c.bf16 %v680, %v680
  %v745 = vpack.c.bf16 %v681, %v681
  %v746 = vpack.c.bf16 %v682, %v682
  %v747 = vpack.c.bf16 %v683, %v683
  %v748 = vpack.c.bf16 %v684, %v684
  %v749 = vpack.c.bf16 %v685, %v685
  %v750 = vpack.c.bf16 %v686, %v686
  %v751 = vpack.c.bf16 %v687, %v687
  %v752 = vpack.c.bf16 %v688, %v688
  %v753 = vpack.c.bf16 %v689, %v689
  %v754 = vpack.c.bf16 %v690, %v690
  %v755 = vpack.c.bf16 %v691, %v691
  %v756 = vpack.c.bf16 %v692, %v692
  %v757 = vpack.c.bf16 %v693, %v693
  %v758 = vpack.c.bf16 %v694, %v694
  %v759 = vpack.c.bf16 %v695, %v695
  %v760 = vpack.c.bf16 %v696, %v696
  %v761 = vpack.c.bf16 %v697, %v697
  %v762 = vpack.c.bf16 %v698, %v698
  %763 = vst [vmem:[%s3] sm:$0xf] %v699
  %764 = vst [vmem:[%s3 + $0x4] sm:$0xf] %v700
  %765 = vst [vmem:[%s3 + $0x8] sm:$0xf] %v701
  %766 = vst [vmem:[%s3 + $0xc] sm:$0xf] %v702
  %767 = vst [vmem:[%s3 + $0x10] sm:$0xf] %v703
  %768 = vst [vmem:[%s3 + $0x14] sm:$0xf] %v704
  %769 = vst [vmem:[%s3 + $0x18] sm:$0xf] %v705
  %770 = vst [vmem:[%s3 + $0x1c] sm:$0xf] %v706
  %771 = vst [vmem:[%s3 + $0x20] sm:$0xf] %v707
  %772 = vst [vmem:[%s3 + $0x24] sm:$0xf] %v708
  %773 = vst [vmem:[%s3 + $0x28] sm:$0xf] %v709
  %774 = vst [vmem:[%s3 + $0x2c] sm:$0xf] %v710
  %775 = vst [vmem:[%s3 + $0x30] sm:$0xf] %v711
  %776 = vst [vmem:[%s3 + $0x34] sm:$0xf] %v712
  %777 = vst [vmem:[%s3 + $0x38] sm:$0xf] %v713
  %778 = vst [vmem:[%s3 + $0x3c] sm:$0xf] %v714
  %779 = vst [vmem:[%s3 + $0x40] sm:$0xf] %v715
  %780 = vst [vmem:[%s3 + $0x44] sm:$0xf] %v716
  %781 = vst [vmem:[%s3 + $0x48] sm:$0xf] %v717
  %782 = vst [vmem:[%s3 + $0x4c] sm:$0xf] %v718
  %783 = vst [vmem:[%s3 + $0x50] sm:$0xf] %v719
  %784 = vst [vmem:[%s3 + $0x54] sm:$0xf] %v720
  %785 = vst [vmem:[%s3 + $0x58] sm:$0xf] %v721
  %786 = vst [vmem:[%s3 + $0x5c] sm:$0xf] %v722
  %787 = vst [vmem:[%s3 + $0x60] sm:$0xf] %v723
  %788 = vst [vmem:[%s3 + $0x64] sm:$0xf] %v724
  %789 = vst [vmem:[%s3 + $0x68] sm:$0xf] %v725
  %790 = vst [vmem:[%s3 + $0x6c] sm:$0xf] %v726
  %791 = vst [vmem:[%s3 + $0x70] sm:$0xf] %v727
  %792 = vst [vmem:[%s3 + $0x74] sm:$0xf] %v728
  %793 = vst [vmem:[%s3 + $0x78] sm:$0xf] %v729
  %794 = vst [vmem:[%s3 + $0x7c] sm:$0xf] %v730
  %795 = vst [vmem:[%s3 + $0x80] sm:$0xf] %v731
  %796 = vst [vmem:[%s3 + $0x84] sm:$0xf] %v732
  %797 = vst [vmem:[%s3 + $0x88] sm:$0xf] %v733
  %798 = vst [vmem:[%s3 + $0x8c] sm:$0xf] %v734
  %799 = vst [vmem:[%s3 + $0x90] sm:$0xf] %v735
  %800 = vst [vmem:[%s3 + $0x94] sm:$0xf] %v736
  %801 = vst [vmem:[%s3 + $0x98] sm:$0xf] %v737
  %802 = vst [vmem:[%s3 + $0x9c] sm:$0xf] %v738
  %803 = vst [vmem:[%s3 + $0xa0] sm:$0xf] %v739
  %804 = vst [vmem:[%s3 + $0xa4] sm:$0xf] %v740
  %805 = vst [vmem:[%s3 + $0xa8] sm:$0xf] %v741
  %806 = vst [vmem:[%s3 + $0xac] sm:$0xf] %v742
  %807 = vst [vmem:[%s3 + $0xb0] sm:$0xf] %v743
  %808 = vst [vmem:[%s3 + $0xb4] sm:$0xf] %v744
  %809 = vst [vmem:[%s3 + $0xb8] sm:$0xf] %v745
  %810 = vst [vmem:[%s3 + $0xbc] sm:$0xf] %v746
  %811 = vst [vmem:[%s3 + $0xc0] sm:$0xf] %v747
  %812 = vst [vmem:[%s3 + $0xc4] sm:$0xf] %v748
  %813 = vst [vmem:[%s3 + $0xc8] sm:$0xf] %v749
  %814 = vst [vmem:[%s3 + $0xcc] sm:$0xf] %v750
  %815 = vst [vmem:[%s3 + $0xd0] sm:$0xf] %v751
  %816 = vst [vmem:[%s3 + $0xd4] sm:$0xf] %v752
  %817 = vst [vmem:[%s3 + $0xd8] sm:$0xf] %v753
  %818 = vst [vmem:[%s3 + $0xdc] sm:$0xf] %v754
  %819 = vst [vmem:[%s3 + $0xe0] sm:$0xf] %v755
  %820 = vst [vmem:[%s3 + $0xe4] sm:$0xf] %v756
  %821 = vst [vmem:[%s3 + $0xe8] sm:$0xf] %v757
  %822 = vst [vmem:[%s3 + $0xec] sm:$0xf] %v758
  %823 = vst [vmem:[%s3 + $0xf0] sm:$0xf] %v759
  %824 = vst [vmem:[%s3 + $0xf4] sm:$0xf] %v760
  %825 = vst [vmem:[%s3 + $0xf8] sm:$0xf] %v761
  %826 = vst [vmem:[%s3 + $0xfc] sm:$0xf] %v762
  // Predicated region
  $region14: #{spectral_discriminator_forward.5} parent=0 // pred_check
    _
  $region15: #{spectral_discriminator_forward.5} parent=0 // pred_check_branch
    %828 = sbr.rel (0) target = $region17
  $region16: #{spectral_discriminator_forward.5} parent=0 // pred_region
    _
  $region17: #{spectral_discriminator_forward.5} parent=0 // pred_fallthru
    _
  // Predicated region
  $region18: #{spectral_discriminator_forward.5} parent=0 // pred_check
    _
  $region19: #{spectral_discriminator_forward.5} parent=0 // pred_check_branch
    %830 = sbr.rel (0) target = $region21
  $region20: #{spectral_discriminator_forward.5} parent=0 // pred_region
    _
  $region21: #{spectral_discriminator_forward.5} parent=0 // pred_fallthru
    _

// kernel: spectral_discriminator_forward.6
$region0: #{spectral_discriminator_forward.6}
  #allocation0 [shape = 'u32[]', space=smem, size = 0x4, offset = 0x4, fixed_abs, tag = 'smem constant byte address 0x4 - core index']
  #allocation1 [shape = 'u32[72,128]{1,0:T(1,128)}', space=vmem, size = 0x9000, scoped, tag = 'internal scratch']
  %s0 = inlined_call_operand.vmem [shape: bf16[128,256], index: 0, kind: input, shape index: {}]
  %s1 = inlined_call_operand.vmem [shape: bf16[256,128], index: 1, kind: input, shape index: {}]
  %s2 = inlined_call_operand.vmem [shape: f32[1,128], index: 2, kind: input, shape index: {}]
  %s3 = inlined_call_operand.vmem [shape: bf16[128,128], index: 3, kind: output, shape index: {}]
  %s4 = sld [smem:[#allocation0]]
  $region22: #{spectral_discriminator_forward.6} parent=0
    _
  %s6 = ssub.s32 1, %s4
  %s7 = scalar_select 0, %s6, %s4
  // Predicated region
  $region2: #{spectral_discriminator_forward.6} parent=0 // pred_check
    _
  $region3: #{spectral_discriminator_forward.6} parent=0 // pred_check_branch
    %9 = sbr.rel (0) target = $region5
  $region4: #{spectral_discriminator_forward.6} parent=0 // pred_region
    _
  $region5: #{spectral_discriminator_forward.6} parent=0 // pred_fallthru
    _
  // Predicated region
  $region6: #{spectral_discriminator_forward.6} parent=0 // pred_check
    _
  $region7: #{spectral_discriminator_forward.6} parent=0 // pred_check_branch
    %11 = sbr.rel (0) target = $region9
  $region8: #{spectral_discriminator_forward.6} parent=0 // pred_region
    _
  $region9: #{spectral_discriminator_forward.6} parent=0 // pred_fallthru
    _
  // Predicated region
  $region10: #{spectral_discriminator_forward.6} parent=0 // pred_check
    _
  $region11: #{spectral_discriminator_forward.6} parent=0 // pred_check_branch
    %13 = sbr.rel (0) target = $region13
  $region12: #{spectral_discriminator_forward.6} parent=0 // pred_region
    _
  $region13: #{spectral_discriminator_forward.6} parent=0 // pred_fallthru
    _
  %v14 = vld [vmem:[%s0] sm:$0xff]
  %v15 = vld [vmem:[%s0 + $0x8] sm:$0xff]
  %v16 = vld [vmem:[%s0 + $0x10] sm:$0xff]
  %v17 = vld [vmem:[%s0 + $0x18] sm:$0xff]
  %v18 = vld [vmem:[%s0 + $0x20] sm:$0xff]
  %v19 = vld [vmem:[%s0 + $0x28] sm:$0xff]
  %v20 = vld [vmem:[%s0 + $0x30] sm:$0xff]
  %v21 = vld [vmem:[%s0 + $0x38] sm:$0xff]
  %v22 = vld [vmem:[%s0 + $0x40] sm:$0xff]
  %v23 = vld [vmem:[%s0 + $0x48] sm:$0xff]
  %v24 = vld [vmem:[%s0 + $0x50] sm:$0xff]
  %v25 = vld [vmem:[%s0 + $0x58] sm:$0xff]
  %v26 = vld [vmem:[%s0 + $0x60] sm:$0xff]
  %v27 = vld [vmem:[%s0 + $0x68] sm:$0xff]
  %v28 = vld [vmem:[%s0 + $0x70] sm:$0xff]
  %v29 = vld [vmem:[%s0 + $0x78] sm:$0xff]
  %v30 = vld [vmem:[%s1] sm:$0xf]
  %v31 = vld [vmem:[%s1 + $0x4] sm:$0xf]
  %v32 = vld [vmem:[%s1 + $0x8] sm:$0xf]
  %v33 = vld [vmem:[%s1 + $0xc] sm:$0xf]
  %v34 = vld [vmem:[%s1 + $0x10] sm:$0xf]
  %v35 = vld [vmem:[%s1 + $0x14] sm:$0xf]
  %v36 = vld [vmem:[%s1 + $0x18] sm:$0xf]
  %v37 = vld [vmem:[%s1 + $0x1c] sm:$0xf]
  %v38 = vld [vmem:[%s1 + $0x20] sm:$0xf]
  %v39 = vld [vmem:[%s1 + $0x24] sm:$0xf]
  %v40 = vld [vmem:[%s1 + $0x28] sm:$0xf]
  %v41 = vld [vmem:[%s1 + $0x2c] sm:$0xf]
  %v42 = vld [vmem:[%s1 + $0x30] sm:$0xf]
  %v43 = vld [vmem:[%s1 + $0x34] sm:$0xf]
  %v44 = vld [vmem:[%s1 + $0x38] sm:$0xf]
  %v45 = vld [vmem:[%s1 + $0x3c] sm:$0xf]
  %v46 = vld [vmem:[%s1 + $0x40] sm:$0xf]
  %v47 = vld [vmem:[%s1 + $0x44] sm:$0xf]
  %v48 = vld [vmem:[%s1 + $0x48] sm:$0xf]
  %v49 = vld [vmem:[%s1 + $0x4c] sm:$0xf]
  %v50 = vld [vmem:[%s1 + $0x50] sm:$0xf]
  %v51 = vld [vmem:[%s1 + $0x54] sm:$0xf]
  %v52 = vld [vmem:[%s1 + $0x58] sm:$0xf]
  %v53 = vld [vmem:[%s1 + $0x5c] sm:$0xf]
  %v54 = vld [vmem:[%s1 + $0x60] sm:$0xf]
  %v55 = vld [vmem:[%s1 + $0x64] sm:$0xf]
  %v56 = vld [vmem:[%s1 + $0x68] sm:$0xf]
  %v57 = vld [vmem:[%s1 + $0x6c] sm:$0xf]
  %v58 = vld [vmem:[%s1 + $0x70] sm:$0xf]
  %v59 = vld [vmem:[%s1 + $0x74] sm:$0xf]
  %v60 = vld [vmem:[%s1 + $0x78] sm:$0xf]
  %v61 = vld [vmem:[%s1 + $0x7c] sm:$0xf]
  %v62 = vld [vmem:[%s2] sm:$0x1]
  %v64 = vperm.slane %v62, 0
  %v82 = vunpack.c.l.b16 %v14
  %v83 = vunpack.c.h.b16 %v14
  %v84 = vunpack.c.l.b16 %v15
  %v85 = vunpack.c.h.b16 %v15
  %v86 = vunpack.c.l.b16 %v16
  %v87 = vunpack.c.h.b16 %v16
  %v88 = vunpack.c.l.b16 %v17
  %v89 = vunpack.c.h.b16 %v17
  %v90 = vunpack.c.l.b16 %v18
  %v91 = vunpack.c.h.b16 %v18
  %v92 = vunpack.c.l.b16 %v19
  %v93 = vunpack.c.h.b16 %v19
  %v94 = vunpack.c.l.b16 %v20
  %v95 = vunpack.c.h.b16 %v20
  %v96 = vunpack.c.l.b16 %v21
  %v97 = vunpack.c.h.b16 %v21
  %v98 = vunpack.c.l.b16 %v22
  %v99 = vunpack.c.h.b16 %v22
  %v100 = vunpack.c.l.b16 %v23
  %v101 = vunpack.c.h.b16 %v23
  %v102 = vunpack.c.l.b16 %v24
  %v103 = vunpack.c.h.b16 %v24
  %v104 = vunpack.c.l.b16 %v25
  %v105 = vunpack.c.h.b16 %v25
  %v106 = vunpack.c.l.b16 %v26
  %v107 = vunpack.c.h.b16 %v26
  %v108 = vunpack.c.l.b16 %v27
  %v109 = vunpack.c.h.b16 %v27
  %v110 = vunpack.c.l.b16 %v28
  %v111 = vunpack.c.h.b16 %v28
  %v112 = vunpack.c.l.b16 %v29
  %v113 = vunpack.c.h.b16 %v29
  %v114 = vpack.c.b16 %v84, %v82
  %v115 = vpack.c.b16 %v85, %v83
  %v116 = vpack.c.b16 %v88, %v86
  %v117 = vpack.c.b16 %v89, %v87
  %v118 = vpack.c.b16 %v92, %v90
  %v119 = vpack.c.b16 %v93, %v91
  %v120 = vpack.c.b16 %v96, %v94
  %v121 = vpack.c.b16 %v97, %v95
  %v122 = vpack.c.b16 %v100, %v98
  %v123 = vpack.c.b16 %v101, %v99
  %v124 = vpack.c.b16 %v104, %v102
  %v125 = vpack.c.b16 %v105, %v103
  %v126 = vpack.c.b16 %v108, %v106
  %v127 = vpack.c.b16 %v109, %v107
  %v128 = vpack.c.b16 %v112, %v110
  %v129 = vpack.c.b16 %v113, %v111
  %v178 = vunpack.c.l.b16 %v30
  %v179 = vunpack.c.l.b16 %v31
  %v180 = vunpack.c.l.b16 %v32
  %v181 = vunpack.c.l.b16 %v33
  %v182 = vunpack.c.l.b16 %v34
  %v183 = vunpack.c.l.b16 %v35
  %v184 = vunpack.c.l.b16 %v36
  %v185 = vunpack.c.l.b16 %v37
  %v186 = vunpack.c.l.b16 %v38
  %v187 = vunpack.c.l.b16 %v39
  %v188 = vunpack.c.l.b16 %v40
  %v189 = vunpack.c.l.b16 %v41
  %v190 = vunpack.c.l.b16 %v42
  %v191 = vunpack.c.l.b16 %v43
  %v192 = vunpack.c.l.b16 %v44
  %v193 = vunpack.c.l.b16 %v45
  %v194 = vunpack.c.l.b16 %v46
  %v195 = vunpack.c.l.b16 %v47
  %v196 = vunpack.c.l.b16 %v48
  %v197 = vunpack.c.l.b16 %v49
  %v198 = vunpack.c.l.b16 %v50
  %v199 = vunpack.c.l.b16 %v51
  %v200 = vunpack.c.l.b16 %v52
  %v201 = vunpack.c.l.b16 %v53
  %v202 = vunpack.c.l.b16 %v54
  %v203 = vunpack.c.l.b16 %v55
  %v204 = vunpack.c.l.b16 %v56
  %v205 = vunpack.c.l.b16 %v57
  %v206 = vunpack.c.l.b16 %v58
  %v207 = vunpack.c.l.b16 %v59
  %v208 = vunpack.c.l.b16 %v60
  %v209 = vunpack.c.l.b16 %v61
  %v210 = vpack.c.b16 %v179, %v178
  %v211 = vpack.c.b16 %v181, %v180
  %v212 = vpack.c.b16 %v183, %v182
  %v213 = vpack.c.b16 %v185, %v184
  %v214 = vpack.c.b16 %v187, %v186
  %v215 = vpack.c.b16 %v189, %v188
  %v216 = vpack.c.b16 %v191, %v190
  %v217 = vpack.c.b16 %v193, %v192
  %v218 = vpack.c.b16 %v195, %v194
  %v219 = vpack.c.b16 %v197, %v196
  %v220 = vpack.c.b16 %v199, %v198
  %v221 = vpack.c.b16 %v201, %v200
  %v222 = vpack.c.b16 %v203, %v202
  %v223 = vpack.c.b16 %v205, %v204
  %v224 = vpack.c.b16 %v207, %v206
  %v225 = vpack.c.b16 %v209, %v208
  %242 = vmatpush.bf16.msra.mxu0 %v217
  %243 = vmatpush.bf16.msra.mxu0 %v216
  %244 = vmatpush.bf16.msra.mxu0 %v215
  %245 = vmatpush.bf16.msra.mxu0 %v214
  %246 = vmatpush.bf16.msra.mxu0 %v213
  %247 = vmatpush.bf16.msra.mxu0 %v212
  %248 = vmatpush.bf16.msra.mxu0 %v211
  %249 = vmatpush.bf16.msra.mxu0 %v210
  %250 = vmatmul.bf16.gmra.mxu0 %v114
  %v251 = vpop.f32.mrf.mxu0
  %v252 = vadd.f32 %v64, %v251
  %v253 = vpop.f32.mrf.mxu0
  %v254 = vadd.f32 %v64, %v253
  %255 = vmatmul.bf16.gmra.mxu0 %v116
  %v256 = vpop.f32.mrf.mxu0
  %v257 = vadd.f32 %v64, %v256
  %v258 = vpop.f32.mrf.mxu0
  %v259 = vadd.f32 %v64, %v258
  %260 = vmatmul.bf16.gmra.mxu0 %v118
  %v261 = vpop.f32.mrf.mxu0
  %v262 = vadd.f32 %v64, %v261
  %v263 = vpop.f32.mrf.mxu0
  %v264 = vadd.f32 %v64, %v263
  %265 = vmatmul.bf16.gmra.mxu0 %v120
  %v266 = vpop.f32.mrf.mxu0
  %v267 = vadd.f32 %v64, %v266
  %v268 = vpop.f32.mrf.mxu0
  %v269 = vadd.f32 %v64, %v268
  %270 = vmatmul.bf16.gmra.mxu0 %v122
  %v271 = vpop.f32.mrf.mxu0
  %v272 = vadd.f32 %v64, %v271
  %v273 = vpop.f32.mrf.mxu0
  %v274 = vadd.f32 %v64, %v273
  %275 = vmatmul.bf16.gmra.mxu0 %v124
  %v276 = vpop.f32.mrf.mxu0
  %v277 = vadd.f32 %v64, %v276
  %v278 = vpop.f32.mrf.mxu0
  %v279 = vadd.f32 %v64, %v278
  %280 = vmatmul.bf16.gmra.mxu0 %v126
  %v281 = vpop.f32.mrf.mxu0
  %v282 = vadd.f32 %v64, %v281
  %v283 = vpop.f32.mrf.mxu0
  %v284 = vadd.f32 %v64, %v283
  %285 = vmatmul.bf16.gmra.mxu0 %v128
  %v286 = vpop.f32.mrf.mxu0
  %v287 = vadd.f32 %v64, %v286
  %v288 = vpop.f32.mrf.mxu0
  %v289 = vadd.f32 %v64, %v288
  %290 = vdwg.mxu0
  %291 = vmatpush.bf16.msra.mxu0 %v225
  %292 = vmatpush.bf16.msra.mxu0 %v224
  %293 = vmatpush.bf16.msra.mxu0 %v223
  %294 = vmatpush.bf16.msra.mxu0 %v222
  %295 = vmatpush.bf16.msra.mxu0 %v221
  %296 = vmatpush.bf16.msra.mxu0 %v220
  %297 = vmatpush.bf16.msra.mxu0 %v219
  %298 = vmatpush.bf16.msra.mxu0 %v218
  %299 = vmatmul.bf16.gmra.mxu0 %v115
  %v300 = vpop.f32.mrf.mxu0
  %v301 = vadd.f32 %v252, %v300
  %v302 = vpop.f32.mrf.mxu0
  %v303 = vadd.f32 %v254, %v302
  %304 = vmatmul.bf16.gmra.mxu0 %v117
  %v305 = vpop.f32.mrf.mxu0
  %v306 = vadd.f32 %v257, %v305
  %v307 = vpop.f32.mrf.mxu0
  %v308 = vadd.f32 %v259, %v307
  %309 = vmatmul.bf16.gmra.mxu0 %v119
  %v310 = vpop.f32.mrf.mxu0
  %v311 = vadd.f32 %v262, %v310
  %v312 = vpop.f32.mrf.mxu0
  %v313 = vadd.f32 %v264, %v312
  %314 = vmatmul.bf16.gmra.mxu0 %v121
  %v315 = vpop.f32.mrf.mxu0
  %v316 = vadd.f32 %v267, %v315
  %v317 = vpop.f32.mrf.mxu0
  %v318 = vadd.f32 %v269, %v317
  %319 = vmatmul.bf16.gmra.mxu0 %v123
  %v320 = vpop.f32.mrf.mxu0
  %v321 = vadd.f32 %v272, %v320
  %v322 = vpop.f32.mrf.mxu0
  %v323 = vadd.f32 %v274, %v322
  %324 = vmatmul.bf16.gmra.mxu0 %v125
  %v325 = vpop.f32.mrf.mxu0
  %v326 = vadd.f32 %v277, %v325
  %v327 = vpop.f32.mrf.mxu0
  %v328 = vadd.f32 %v279, %v327
  %329 = vmatmul.bf16.gmra.mxu0 %v127
  %v330 = vpop.f32.mrf.mxu0
  %v331 = vadd.f32 %v282, %v330
  %v332 = vpop.f32.mrf.mxu0
  %v333 = vadd.f32 %v284, %v332
  %334 = vmatmul.bf16.gmra.mxu0 %v129
  %v335 = vpop.f32.mrf.mxu0
  %v336 = vadd.f32 %v287, %v335
  %v337 = vpop.f32.mrf.mxu0
  %v338 = vadd.f32 %v289, %v337
  %339 = vdwg.mxu0
  %vm340 = vcmp.ge.f32.partialorder %v301, 0.0
  %vm341 = vcmp.ge.f32.partialorder %v303, 0.0
  %vm342 = vcmp.ge.f32.partialorder %v306, 0.0
  %vm343 = vcmp.ge.f32.partialorder %v308, 0.0
  %vm344 = vcmp.ge.f32.partialorder %v311, 0.0
  %vm345 = vcmp.ge.f32.partialorder %v313, 0.0
  %vm346 = vcmp.ge.f32.partialorder %v316, 0.0
  %vm347 = vcmp.ge.f32.partialorder %v318, 0.0
  %vm348 = vcmp.ge.f32.partialorder %v321, 0.0
  %vm349 = vcmp.ge.f32.partialorder %v323, 0.0
  %vm350 = vcmp.ge.f32.partialorder %v326, 0.0
  %vm351 = vcmp.ge.f32.partialorder %v328, 0.0
  %vm352 = vcmp.ge.f32.partialorder %v331, 0.0
  %vm353 = vcmp.ge.f32.partialorder %v333, 0.0
  %vm354 = vcmp.ge.f32.partialorder %v336, 0.0
  %vm355 = vcmp.ge.f32.partialorder %v338, 0.0
  %v356 = vmul.f32 %v301, 0.2
  %v357 = vmul.f32 %v303, 0.2
  %v358 = vmul.f32 %v306, 0.2
  %v359 = vmul.f32 %v308, 0.2
  %v360 = vmul.f32 %v311, 0.2
  %v361 = vmul.f32 %v313, 0.2
  %v362 = vmul.f32 %v316, 0.2
  %v363 = vmul.f32 %v318, 0.2
  %v364 = vmul.f32 %v321, 0.2
  %v365 = vmul.f32 %v323, 0.2
  %v366 = vmul.f32 %v326, 0.2
  %v367 = vmul.f32 %v328, 0.2
  %v368 = vmul.f32 %v331, 0.2
  %v369 = vmul.f32 %v333, 0.2
  %v370 = vmul.f32 %v336, 0.2
  %v371 = vmul.f32 %v338, 0.2
  %v372 = vsel %vm340, %v301, %v356
  %v373 = vsel %vm341, %v303, %v357
  %v374 = vsel %vm342, %v306, %v358
  %v375 = vsel %vm343, %v308, %v359
  %v376 = vsel %vm344, %v311, %v360
  %v377 = vsel %vm345, %v313, %v361
  %v378 = vsel %vm346, %v316, %v362
  %v379 = vsel %vm347, %v318, %v363
  %v380 = vsel %vm348, %v321, %v364
  %v381 = vsel %vm349, %v323, %v365
  %v382 = vsel %vm350, %v326, %v366
  %v383 = vsel %vm351, %v328, %v367
  %v384 = vsel %vm352, %v331, %v368
  %v385 = vsel %vm353, %v333, %v369
  %v386 = vsel %vm354, %v336, %v370
  %v387 = vsel %vm355, %v338, %v371
  %v388 = vpack.c.bf16 %v372, %v372
  %v389 = vpack.c.bf16 %v373, %v373
  %v390 = vpack.c.bf16 %v374, %v374
  %v391 = vpack.c.bf16 %v375, %v375
  %v392 = vpack.c.bf16 %v376, %v376
  %v393 = vpack.c.bf16 %v377, %v377
  %v394 = vpack.c.bf16 %v378, %v378
  %v395 = vpack.c.bf16 %v379, %v379
  %v396 = vpack.c.bf16 %v380, %v380
  %v397 = vpack.c.bf16 %v381, %v381
  %v398 = vpack.c.bf16 %v382, %v382
  %v399 = vpack.c.bf16 %v383, %v383
  %v400 = vpack.c.bf16 %v384, %v384
  %v401 = vpack.c.bf16 %v385, %v385
  %v402 = vpack.c.bf16 %v386, %v386
  %v403 = vpack.c.bf16 %v387, %v387
  %404 = vst [vmem:[%s3] sm:$0xf] %v388
  %405 = vst [vmem:[%s3 + $0x4] sm:$0xf] %v389
  %406 = vst [vmem:[%s3 + $0x8] sm:$0xf] %v390
  %407 = vst [vmem:[%s3 + $0xc] sm:$0xf] %v391
  %408 = vst [vmem:[%s3 + $0x10] sm:$0xf] %v392
  %409 = vst [vmem:[%s3 + $0x14] sm:$0xf] %v393
  %410 = vst [vmem:[%s3 + $0x18] sm:$0xf] %v394
  %411 = vst [vmem:[%s3 + $0x1c] sm:$0xf] %v395
  %412 = vst [vmem:[%s3 + $0x20] sm:$0xf] %v396
  %413 = vst [vmem:[%s3 + $0x24] sm:$0xf] %v397
  %414 = vst [vmem:[%s3 + $0x28] sm:$0xf] %v398
  %415 = vst [vmem:[%s3 + $0x2c] sm:$0xf] %v399
  %416 = vst [vmem:[%s3 + $0x30] sm:$0xf] %v400
  %417 = vst [vmem:[%s3 + $0x34] sm:$0xf] %v401
  %418 = vst [vmem:[%s3 + $0x38] sm:$0xf] %v402
  %419 = vst [vmem:[%s3 + $0x3c] sm:$0xf] %v403
  // Predicated region
  $region14: #{spectral_discriminator_forward.6} parent=0 // pred_check
    _
  $region15: #{spectral_discriminator_forward.6} parent=0 // pred_check_branch
    %421 = sbr.rel (0) target = $region17
  $region16: #{spectral_discriminator_forward.6} parent=0 // pred_region
    _
  $region17: #{spectral_discriminator_forward.6} parent=0 // pred_fallthru
    _
  // Predicated region
  $region18: #{spectral_discriminator_forward.6} parent=0 // pred_check
    _
  $region19: #{spectral_discriminator_forward.6} parent=0 // pred_check_branch
    %423 = sbr.rel (0) target = $region21
  $region20: #{spectral_discriminator_forward.6} parent=0 // pred_region
    _
  $region21: #{spectral_discriminator_forward.6} parent=0 // pred_fallthru
    _

// kernel: spectral_discriminator_forward.7
$region0: #{spectral_discriminator_forward.7}
  #allocation0 [shape = 'u32[]', space=smem, size = 0x4, offset = 0x4, fixed_abs, tag = 'smem constant byte address 0x4 - core index']
  #allocation1 [shape = 'u32[72,128]{1,0:T(1,128)}', space=vmem, size = 0x9000, scoped, tag = 'internal scratch']
  %s0 = inlined_call_operand.vmem [shape: bf16[32,512], index: 0, kind: input, shape index: {}]
  %s1 = inlined_call_operand.vmem [shape: bf16[512,128], index: 1, kind: input, shape index: {}]
  %s2 = inlined_call_operand.vmem [shape: f32[1,128], index: 2, kind: input, shape index: {}]
  %s3 = inlined_call_operand.vmem [shape: bf16[32,128], index: 3, kind: output, shape index: {}]
  %s4 = sld [smem:[#allocation0]]
  $region22: #{spectral_discriminator_forward.7} parent=0
    _
  %s6 = ssub.s32 1, %s4
  %s7 = scalar_select 0, %s6, %s4
  // Predicated region
  $region2: #{spectral_discriminator_forward.7} parent=0 // pred_check
    _
  $region3: #{spectral_discriminator_forward.7} parent=0 // pred_check_branch
    %9 = sbr.rel (0) target = $region5
  $region4: #{spectral_discriminator_forward.7} parent=0 // pred_region
    _
  $region5: #{spectral_discriminator_forward.7} parent=0 // pred_fallthru
    _
  // Predicated region
  $region6: #{spectral_discriminator_forward.7} parent=0 // pred_check
    _
  $region7: #{spectral_discriminator_forward.7} parent=0 // pred_check_branch
    %11 = sbr.rel (0) target = $region9
  $region8: #{spectral_discriminator_forward.7} parent=0 // pred_region
    _
  $region9: #{spectral_discriminator_forward.7} parent=0 // pred_fallthru
    _
  // Predicated region
  $region10: #{spectral_discriminator_forward.7} parent=0 // pred_check
    _
  $region11: #{spectral_discriminator_forward.7} parent=0 // pred_check_branch
    %13 = sbr.rel (0) target = $region13
  $region12: #{spectral_discriminator_forward.7} parent=0 // pred_region
    _
  $region13: #{spectral_discriminator_forward.7} parent=0 // pred_fallthru
    _
  %v14 = vld [vmem:[%s0] sm:$0xff]
  %v15 = vld [vmem:[%s0 + $0x8] sm:$0xff]
  %v16 = vld [vmem:[%s0 + $0x10] sm:$0xff]
  %v17 = vld [vmem:[%s0 + $0x18] sm:$0xff]
  %v18 = vld [vmem:[%s0 + $0x20] sm:$0xff]
  %v19 = vld [vmem:[%s0 + $0x28] sm:$0xff]
  %v20 = vld [vmem:[%s0 + $0x30] sm:$0xff]
  %v21 = vld [vmem:[%s0 + $0x38] sm:$0xff]
  %v22 = vld [vmem:[%s1] sm:$0xf]
  %v23 = vld [vmem:[%s1 + $0x4] sm:$0xf]
  %v24 = vld [vmem:[%s1 + $0x8] sm:$0xf]
  %v25 = vld [vmem:[%s1 + $0xc] sm:$0xf]
  %v26 = vld [vmem:[%s1 + $0x10] sm:$0xf]
  %v27 = vld [vmem:[%s1 + $0x14] sm:$0xf]
  %v28 = vld [vmem:[%s1 + $0x18] sm:$0xf]
  %v29 = vld [vmem:[%s1 + $0x1c] sm:$0xf]
  %v30 = vld [vmem:[%s1 + $0x20] sm:$0xf]
  %v31 = vld [vmem:[%s1 + $0x24] sm:$0xf]
  %v32 = vld [vmem:[%s1 + $0x28] sm:$0xf]
  %v33 = vld [vmem:[%s1 + $0x2c] sm:$0xf]
  %v34 = vld [vmem:[%s1 + $0x30] sm:$0xf]
  %v35 = vld [vmem:[%s1 + $0x34] sm:$0xf]
  %v36 = vld [vmem:[%s1 + $0x38] sm:$0xf]
  %v37 = vld [vmem:[%s1 + $0x3c] sm:$0xf]
  %v38 = vld [vmem:[%s1 + $0x40] sm:$0xf]
  %v39 = vld [vmem:[%s1 + $0x44] sm:$0xf]
  %v40 = vld [vmem:[%s1 + $0x48] sm:$0xf]
  %v41 = vld [vmem:[%s1 + $0x4c] sm:$0xf]
  %v42 = vld [vmem:[%s1 + $0x50] sm:$0xf]
  %v43 = vld [vmem:[%s1 + $0x54] sm:$0xf]
  %v44 = vld [vmem:[%s1 + $0x58] sm:$0xf]
  %v45 = vld [vmem:[%s1 + $0x5c] sm:$0xf]
  %v46 = vld [vmem:[%s1 + $0x60] sm:$0xf]
  %v47 = vld [vmem:[%s1 + $0x64] sm:$0xf]
  %v48 = vld [vmem:[%s1 + $0x68] sm:$0xf]
  %v49 = vld [vmem:[%s1 + $0x6c] sm:$0xf]
  %v50 = vld [vmem:[%s1 + $0x70] sm:$0xf]
  %v51 = vld [vmem:[%s1 + $0x74] sm:$0xf]
  %v52 = vld [vmem:[%s1 + $0x78] sm:$0xf]
  %v53 = vld [vmem:[%s1 + $0x7c] sm:$0xf]
  %v54 = vld [vmem:[%s1 + $0x80] sm:$0xf]
  %v55 = vld [vmem:[%s1 + $0x84] sm:$0xf]
  %v56 = vld [vmem:[%s1 + $0x88] sm:$0xf]
  %v57 = vld [vmem:[%s1 + $0x8c] sm:$0xf]
  %v58 = vld [vmem:[%s1 + $0x90] sm:$0xf]
  %v59 = vld [vmem:[%s1 + $0x94] sm:$0xf]
  %v60 = vld [vmem:[%s1 + $0x98] sm:$0xf]
  %v61 = vld [vmem:[%s1 + $0x9c] sm:$0xf]
  %v62 = vld [vmem:[%s1 + $0xa0] sm:$0xf]
  %v63 = vld [vmem:[%s1 + $0xa4] sm:$0xf]
  %v64 = vld [vmem:[%s1 + $0xa8] sm:$0xf]
  %v65 = vld [vmem:[%s1 + $0xac] sm:$0xf]
  %v66 = vld [vmem:[%s1 + $0xb0] sm:$0xf]
  %v67 = vld [vmem:[%s1 + $0xb4] sm:$0xf]
  %v68 = vld [vmem:[%s1 + $0xb8] sm:$0xf]
  %v69 = vld [vmem:[%s1 + $0xbc] sm:$0xf]
  %v70 = vld [vmem:[%s1 + $0xc0] sm:$0xf]
  %v71 = vld [vmem:[%s1 + $0xc4] sm:$0xf]
  %v72 = vld [vmem:[%s1 + $0xc8] sm:$0xf]
  %v73 = vld [vmem:[%s1 + $0xcc] sm:$0xf]
  %v74 = vld [vmem:[%s1 + $0xd0] sm:$0xf]
  %v75 = vld [vmem:[%s1 + $0xd4] sm:$0xf]
  %v76 = vld [vmem:[%s1 + $0xd8] sm:$0xf]
  %v77 = vld [vmem:[%s1 + $0xdc] sm:$0xf]
  %v78 = vld [vmem:[%s1 + $0xe0] sm:$0xf]
  %v79 = vld [vmem:[%s1 + $0xe4] sm:$0xf]
  %v80 = vld [vmem:[%s1 + $0xe8] sm:$0xf]
  %v81 = vld [vmem:[%s1 + $0xec] sm:$0xf]
  %v82 = vld [vmem:[%s1 + $0xf0] sm:$0xf]
  %v83 = vld [vmem:[%s1 + $0xf4] sm:$0xf]
  %v84 = vld [vmem:[%s1 + $0xf8] sm:$0xf]
  %v85 = vld [vmem:[%s1 + $0xfc] sm:$0xf]
  %v86 = vld [vmem:[%s2] sm:$0x1]
  %v88 = vperm.slane %v86, 0
  %v98 = vunpack.c.l.b16 %v14
  %v99 = vunpack.c.h.b16 %v14
  %v100 = vunpack.c.l.b16 %v15
  %v101 = vunpack.c.h.b16 %v15
  %v102 = vunpack.c.l.b16 %v16
  %v103 = vunpack.c.h.b16 %v16
  %v104 = vunpack.c.l.b16 %v17
  %v105 = vunpack.c.h.b16 %v17
  %v106 = vunpack.c.l.b16 %v18
  %v107 = vunpack.c.h.b16 %v18
  %v108 = vunpack.c.l.b16 %v19
  %v109 = vunpack.c.h.b16 %v19
  %v110 = vunpack.c.l.b16 %v20
  %v111 = vunpack.c.h.b16 %v20
  %v112 = vunpack.c.l.b16 %v21
  %v113 = vunpack.c.h.b16 %v21
  %v114 = vpack.c.b16 %v102, %v98
  %v115 = vpack.c.b16 %v103, %v99
  %v116 = vpack.c.b16 %v104, %v100
  %v117 = vpack.c.b16 %v105, %v101
  %v118 = vpack.c.b16 %v110, %v106
  %v119 = vpack.c.b16 %v111, %v107
  %v120 = vpack.c.b16 %v112, %v108
  %v121 = vpack.c.b16 %v113, %v109
  %v194 = vunpack.c.l.b16 %v22
  %v195 = vunpack.c.l.b16 %v23
  %v196 = vunpack.c.l.b16 %v24
  %v197 = vunpack.c.l.b16 %v25
  %v198 = vunpack.c.l.b16 %v26
  %v199 = vunpack.c.l.b16 %v27
  %v200 = vunpack.c.l.b16 %v28
  %v201 = vunpack.c.l.b16 %v29
  %v202 = vunpack.c.l.b16 %v30
  %v203 = vunpack.c.l.b16 %v31
  %v204 = vunpack.c.l.b16 %v32
  %v205 = vunpack.c.l.b16 %v33
  %v206 = vunpack.c.l.b16 %v34
  %v207 = vunpack.c.l.b16 %v35
  %v208 = vunpack.c.l.b16 %v36
  %v209 = vunpack.c.l.b16 %v37
  %v210 = vunpack.c.l.b16 %v38
  %v211 = vunpack.c.l.b16 %v39
  %v212 = vunpack.c.l.b16 %v40
  %v213 = vunpack.c.l.b16 %v41
  %v214 = vunpack.c.l.b16 %v42
  %v215 = vunpack.c.l.b16 %v43
  %v216 = vunpack.c.l.b16 %v44
  %v217 = vunpack.c.l.b16 %v45
  %v218 = vunpack.c.l.b16 %v46
  %v219 = vunpack.c.l.b16 %v47
  %v220 = vunpack.c.l.b16 %v48
  %v221 = vunpack.c.l.b16 %v49
  %v222 = vunpack.c.l.b16 %v50
  %v223 = vunpack.c.l.b16 %v51
  %v224 = vunpack.c.l.b16 %v52
  %v225 = vunpack.c.l.b16 %v53
  %v226 = vunpack.c.l.b16 %v54
  %v227 = vunpack.c.l.b16 %v55
  %v228 = vunpack.c.l.b16 %v56
  %v229 = vunpack.c.l.b16 %v57
  %v230 = vunpack.c.l.b16 %v58
  %v231 = vunpack.c.l.b16 %v59
  %v232 = vunpack.c.l.b16 %v60
  %v233 = vunpack.c.l.b16 %v61
  %v234 = vunpack.c.l.b16 %v62
  %v235 = vunpack.c.l.b16 %v63
  %v236 = vunpack.c.l.b16 %v64
  %v237 = vunpack.c.l.b16 %v65
  %v238 = vunpack.c.l.b16 %v66
  %v239 = vunpack.c.l.b16 %v67
  %v240 = vunpack.c.l.b16 %v68
  %v241 = vunpack.c.l.b16 %v69
  %v242 = vunpack.c.l.b16 %v70
  %v243 = vunpack.c.l.b16 %v71
  %v244 = vunpack.c.l.b16 %v72
  %v245 = vunpack.c.l.b16 %v73
  %v246 = vunpack.c.l.b16 %v74
  %v247 = vunpack.c.l.b16 %v75
  %v248 = vunpack.c.l.b16 %v76
  %v249 = vunpack.c.l.b16 %v77
  %v250 = vunpack.c.l.b16 %v78
  %v251 = vunpack.c.l.b16 %v79
  %v252 = vunpack.c.l.b16 %v80
  %v253 = vunpack.c.l.b16 %v81
  %v254 = vunpack.c.l.b16 %v82
  %v255 = vunpack.c.l.b16 %v83
  %v256 = vunpack.c.l.b16 %v84
  %v257 = vunpack.c.l.b16 %v85
  %v258 = vpack.c.b16 %v195, %v194
  %v259 = vpack.c.b16 %v197, %v196
  %v260 = vpack.c.b16 %v199, %v198
  %v261 = vpack.c.b16 %v201, %v200
  %v262 = vpack.c.b16 %v203, %v202
  %v263 = vpack.c.b16 %v205, %v204
  %v264 = vpack.c.b16 %v207, %v206
  %v265 = vpack.c.b16 %v209, %v208
  %v266 = vpack.c.b16 %v211, %v210
  %v267 = vpack.c.b16 %v213, %v212
  %v268 = vpack.c.b16 %v215, %v214
  %v269 = vpack.c.b16 %v217, %v216
  %v270 = vpack.c.b16 %v219, %v218
  %v271 = vpack.c.b16 %v221, %v220
  %v272 = vpack.c.b16 %v223, %v222
  %v273 = vpack.c.b16 %v225, %v224
  %v274 = vpack.c.b16 %v227, %v226
  %v275 = vpack.c.b16 %v229, %v228
  %v276 = vpack.c.b16 %v231, %v230
  %v277 = vpack.c.b16 %v233, %v232
  %v278 = vpack.c.b16 %v235, %v234
  %v279 = vpack.c.b16 %v237, %v236
  %v280 = vpack.c.b16 %v239, %v238
  %v281 = vpack.c.b16 %v241, %v240
  %v282 = vpack.c.b16 %v243, %v242
  %v283 = vpack.c.b16 %v245, %v244
  %v284 = vpack.c.b16 %v247, %v246
  %v285 = vpack.c.b16 %v249, %v248
  %v286 = vpack.c.b16 %v251, %v250
  %v287 = vpack.c.b16 %v253, %v252
  %v288 = vpack.c.b16 %v255, %v254
  %v289 = vpack.c.b16 %v257, %v256
  %322 = vmatpush.bf16.msra.mxu0 %v265
  %323 = vmatpush.bf16.msra.mxu0 %v264
  %324 = vmatpush.bf16.msra.mxu0 %v263
  %325 = vmatpush.bf16.msra.mxu0 %v262
  %326 = vmatpush.bf16.msra.mxu0 %v261
  %327 = vmatpush.bf16.msra.mxu0 %v260
  %328 = vmatpush.bf16.msra.mxu0 %v259
  %329 = vmatpush.bf16.msra.mxu0 %v258
  %330 = vmatmul.bf16.gmra.mxu0 %v114
  %v331 = vpop.f32.mrf.mxu0
  %v332 = vadd.f32 %v88, %v331
  %v333 = vpop.f32.mrf.mxu0
  %v334 = vadd.f32 %v88, %v333
  %335 = vmatmul.bf16.gmra.mxu0 %v118
  %v336 = vpop.f32.mrf.mxu0
  %v337 = vadd.f32 %v88, %v336
  %v338 = vpop.f32.mrf.mxu0
  %v339 = vadd.f32 %v88, %v338
  %340 = vdwg.mxu0
  %341 = vmatpush.bf16.msra.mxu0 %v273
  %342 = vmatpush.bf16.msra.mxu0 %v272
  %343 = vmatpush.bf16.msra.mxu0 %v271
  %344 = vmatpush.bf16.msra.mxu0 %v270
  %345 = vmatpush.bf16.msra.mxu0 %v269
  %346 = vmatpush.bf16.msra.mxu0 %v268
  %347 = vmatpush.bf16.msra.mxu0 %v267
  %348 = vmatpush.bf16.msra.mxu0 %v266
  %349 = vmatmul.bf16.gmra.mxu0 %v115
  %v350 = vpop.f32.mrf.mxu0
  %v351 = vadd.f32 %v332, %v350
  %v352 = vpop.f32.mrf.mxu0
  %v353 = vadd.f32 %v334, %v352
  %354 = vmatmul.bf16.gmra.mxu0 %v119
  %v355 = vpop.f32.mrf.mxu0
  %v356 = vadd.f32 %v337, %v355
  %v357 = vpop.f32.mrf.mxu0
  %v358 = vadd.f32 %v339, %v357
  %359 = vdwg.mxu0
  %360 = vmatpush.bf16.msra.mxu0 %v281
  %361 = vmatpush.bf16.msra.mxu0 %v280
  %362 = vmatpush.bf16.msra.mxu0 %v279
  %363 = vmatpush.bf16.msra.mxu0 %v278
  %364 = vmatpush.bf16.msra.mxu0 %v277
  %365 = vmatpush.bf16.msra.mxu0 %v276
  %366 = vmatpush.bf16.msra.mxu0 %v275
  %367 = vmatpush.bf16.msra.mxu0 %v274
  %368 = vmatmul.bf16.gmra.mxu0 %v116
  %v369 = vpop.f32.mrf.mxu0
  %v370 = vadd.f32 %v351, %v369
  %v371 = vpop.f32.mrf.mxu0
  %v372 = vadd.f32 %v353, %v371
  %373 = vmatmul.bf16.gmra.mxu0 %v120
  %v374 = vpop.f32.mrf.mxu0
  %v375 = vadd.f32 %v356, %v374
  %v376 = vpop.f32.mrf.mxu0
  %v377 = vadd.f32 %v358, %v376
  %378 = vdwg.mxu0
  %379 = vmatpush.bf16.msra.mxu0 %v289
  %380 = vmatpush.bf16.msra.mxu0 %v288
  %381 = vmatpush.bf16.msra.mxu0 %v287
  %382 = vmatpush.bf16.msra.mxu0 %v286
  %383 = vmatpush.bf16.msra.mxu0 %v285
  %384 = vmatpush.bf16.msra.mxu0 %v284
  %385 = vmatpush.bf16.msra.mxu0 %v283
  %386 = vmatpush.bf16.msra.mxu0 %v282
  %387 = vmatmul.bf16.gmra.mxu0 %v117
  %v388 = vpop.f32.mrf.mxu0
  %v389 = vadd.f32 %v370, %v388
  %v390 = vpop.f32.mrf.mxu0
  %v391 = vadd.f32 %v372, %v390
  %392 = vmatmul.bf16.gmra.mxu0 %v121
  %v393 = vpop.f32.mrf.mxu0
  %v394 = vadd.f32 %v375, %v393
  %v395 = vpop.f32.mrf.mxu0
  %v396 = vadd.f32 %v377, %v395
  %397 = vdwg.mxu0
  %vm398 = vcmp.ge.f32.partialorder %v389, 0.0
  %vm399 = vcmp.ge.f32.partialorder %v391, 0.0
  %vm400 = vcmp.ge.f32.partialorder %v394, 0.0
  %vm401 = vcmp.ge.f32.partialorder %v396, 0.0
  %v402 = vmul.f32 %v389, 0.2
  %v403 = vmul.f32 %v391, 0.2
  %v404 = vmul.f32 %v394, 0.2
  %v405 = vmul.f32 %v396, 0.2
  %v406 = vsel %vm398, %v389, %v402
  %v407 = vsel %vm399, %v391, %v403
  %v408 = vsel %vm400, %v394, %v404
  %v409 = vsel %vm401, %v396, %v405
  %v410 = vpack.c.bf16 %v406, %v406
  %v411 = vpack.c.bf16 %v407, %v407
  %v412 = vpack.c.bf16 %v408, %v408
  %v413 = vpack.c.bf16 %v409, %v409
  %414 = vst [vmem:[%s3] sm:$0xf] %v410
  %415 = vst [vmem:[%s3 + $0x4] sm:$0xf] %v411
  %416 = vst [vmem:[%s3 + $0x8] sm:$0xf] %v412
  %417 = vst [vmem:[%s3 + $0xc] sm:$0xf] %v413
  // Predicated region
  $region14: #{spectral_discriminator_forward.7} parent=0 // pred_check
    _
  $region15: #{spectral_discriminator_forward.7} parent=0 // pred_check_branch
    %419 = sbr.rel (0) target = $region17
  $region16: #{spectral_discriminator_forward.7} parent=0 // pred_region
    _
  $region17: #{spectral_discriminator_forward.7} parent=0 // pred_fallthru
    _
  // Predicated region
  $region18: #{spectral_discriminator_forward.7} parent=0 // pred_check
    _
  $region19: #{spectral_discriminator_forward.7} parent=0 // pred_check_branch
    %421 = sbr.rel (0) target = $region21
  $region20: #{spectral_discriminator_forward.7} parent=0 // pred_region
    _
  $region21: #{spectral_discriminator_forward.7} parent=0 // pred_fallthru
    _

// kernel: spectral_discriminator_forward.8
$region0: #{spectral_discriminator_forward.8}
  #allocation0 [shape = 'u32[]', space=smem, size = 0x4, offset = 0x4, fixed_abs, tag = 'smem constant byte address 0x4 - core index']
  #allocation1 [shape = 'u32[72,128]{1,0:T(1,128)}', space=vmem, size = 0x9000, scoped, tag = 'internal scratch']
  %s0 = inlined_call_operand.vmem [shape: bf16[32,1024], index: 0, kind: input, shape index: {}]
  %s1 = inlined_call_operand.vmem [shape: bf16[1024,128], index: 1, kind: input, shape index: {}]
  %s2 = inlined_call_operand.vmem [shape: f32[1,128], index: 2, kind: input, shape index: {}]
  %s3 = inlined_call_operand.vmem [shape: bf16[32,128], index: 3, kind: output, shape index: {}]
  %s4 = sld [smem:[#allocation0]]
  $region22: #{spectral_discriminator_forward.8} parent=0
    _
  %s6 = ssub.s32 1, %s4
  %s7 = scalar_select 0, %s6, %s4
  // Predicated region
  $region2: #{spectral_discriminator_forward.8} parent=0 // pred_check
    _
  $region3: #{spectral_discriminator_forward.8} parent=0 // pred_check_branch
    %9 = sbr.rel (0) target = $region5
  $region4: #{spectral_discriminator_forward.8} parent=0 // pred_region
    _
  $region5: #{spectral_discriminator_forward.8} parent=0 // pred_fallthru
    _
  // Predicated region
  $region6: #{spectral_discriminator_forward.8} parent=0 // pred_check
    _
  $region7: #{spectral_discriminator_forward.8} parent=0 // pred_check_branch
    %11 = sbr.rel (0) target = $region9
  $region8: #{spectral_discriminator_forward.8} parent=0 // pred_region
    _
  $region9: #{spectral_discriminator_forward.8} parent=0 // pred_fallthru
    _
  // Predicated region
  $region10: #{spectral_discriminator_forward.8} parent=0 // pred_check
    _
  $region11: #{spectral_discriminator_forward.8} parent=0 // pred_check_branch
    %13 = sbr.rel (0) target = $region13
  $region12: #{spectral_discriminator_forward.8} parent=0 // pred_region
    _
  $region13: #{spectral_discriminator_forward.8} parent=0 // pred_fallthru
    _
  %v14 = vld [vmem:[%s0] sm:$0xff]
  %v15 = vld [vmem:[%s0 + $0x8] sm:$0xff]
  %v16 = vld [vmem:[%s0 + $0x10] sm:$0xff]
  %v17 = vld [vmem:[%s0 + $0x18] sm:$0xff]
  %v18 = vld [vmem:[%s0 + $0x20] sm:$0xff]
  %v19 = vld [vmem:[%s0 + $0x28] sm:$0xff]
  %v20 = vld [vmem:[%s0 + $0x30] sm:$0xff]
  %v21 = vld [vmem:[%s0 + $0x38] sm:$0xff]
  %v22 = vld [vmem:[%s0 + $0x40] sm:$0xff]
  %v23 = vld [vmem:[%s0 + $0x48] sm:$0xff]
  %v24 = vld [vmem:[%s0 + $0x50] sm:$0xff]
  %v25 = vld [vmem:[%s0 + $0x58] sm:$0xff]
  %v26 = vld [vmem:[%s0 + $0x60] sm:$0xff]
  %v27 = vld [vmem:[%s0 + $0x68] sm:$0xff]
  %v28 = vld [vmem:[%s0 + $0x70] sm:$0xff]
  %v29 = vld [vmem:[%s0 + $0x78] sm:$0xff]
  %v30 = vld [vmem:[%s1] sm:$0xf]
  %v31 = vld [vmem:[%s1 + $0x4] sm:$0xf]
  %v32 = vld [vmem:[%s1 + $0x8] sm:$0xf]
  %v33 = vld [vmem:[%s1 + $0xc] sm:$0xf]
  %v34 = vld [vmem:[%s1 + $0x10] sm:$0xf]
  %v35 = vld [vmem:[%s1 + $0x14] sm:$0xf]
  %v36 = vld [vmem:[%s1 + $0x18] sm:$0xf]
  %v37 = vld [vmem:[%s1 + $0x1c] sm:$0xf]
  %v38 = vld [vmem:[%s1 + $0x20] sm:$0xf]
  %v39 = vld [vmem:[%s1 + $0x24] sm:$0xf]
  %v40 = vld [vmem:[%s1 + $0x28] sm:$0xf]
  %v41 = vld [vmem:[%s1 + $0x2c] sm:$0xf]
  %v42 = vld [vmem:[%s1 + $0x30] sm:$0xf]
  %v43 = vld [vmem:[%s1 + $0x34] sm:$0xf]
  %v44 = vld [vmem:[%s1 + $0x38] sm:$0xf]
  %v45 = vld [vmem:[%s1 + $0x3c] sm:$0xf]
  %v46 = vld [vmem:[%s1 + $0x40] sm:$0xf]
  %v47 = vld [vmem:[%s1 + $0x44] sm:$0xf]
  %v48 = vld [vmem:[%s1 + $0x48] sm:$0xf]
  %v49 = vld [vmem:[%s1 + $0x4c] sm:$0xf]
  %v50 = vld [vmem:[%s1 + $0x50] sm:$0xf]
  %v51 = vld [vmem:[%s1 + $0x54] sm:$0xf]
  %v52 = vld [vmem:[%s1 + $0x58] sm:$0xf]
  %v53 = vld [vmem:[%s1 + $0x5c] sm:$0xf]
  %v54 = vld [vmem:[%s1 + $0x60] sm:$0xf]
  %v55 = vld [vmem:[%s1 + $0x64] sm:$0xf]
  %v56 = vld [vmem:[%s1 + $0x68] sm:$0xf]
  %v57 = vld [vmem:[%s1 + $0x6c] sm:$0xf]
  %v58 = vld [vmem:[%s1 + $0x70] sm:$0xf]
  %v59 = vld [vmem:[%s1 + $0x74] sm:$0xf]
  %v60 = vld [vmem:[%s1 + $0x78] sm:$0xf]
  %v61 = vld [vmem:[%s1 + $0x7c] sm:$0xf]
  %v62 = vld [vmem:[%s1 + $0x80] sm:$0xf]
  %v63 = vld [vmem:[%s1 + $0x84] sm:$0xf]
  %v64 = vld [vmem:[%s1 + $0x88] sm:$0xf]
  %v65 = vld [vmem:[%s1 + $0x8c] sm:$0xf]
  %v66 = vld [vmem:[%s1 + $0x90] sm:$0xf]
  %v67 = vld [vmem:[%s1 + $0x94] sm:$0xf]
  %v68 = vld [vmem:[%s1 + $0x98] sm:$0xf]
  %v69 = vld [vmem:[%s1 + $0x9c] sm:$0xf]
  %v70 = vld [vmem:[%s1 + $0xa0] sm:$0xf]
  %v71 = vld [vmem:[%s1 + $0xa4] sm:$0xf]
  %v72 = vld [vmem:[%s1 + $0xa8] sm:$0xf]
  %v73 = vld [vmem:[%s1 + $0xac] sm:$0xf]
  %v74 = vld [vmem:[%s1 + $0xb0] sm:$0xf]
  %v75 = vld [vmem:[%s1 + $0xb4] sm:$0xf]
  %v76 = vld [vmem:[%s1 + $0xb8] sm:$0xf]
  %v77 = vld [vmem:[%s1 + $0xbc] sm:$0xf]
  %v78 = vld [vmem:[%s1 + $0xc0] sm:$0xf]
  %v79 = vld [vmem:[%s1 + $0xc4] sm:$0xf]
  %v80 = vld [vmem:[%s1 + $0xc8] sm:$0xf]
  %v81 = vld [vmem:[%s1 + $0xcc] sm:$0xf]
  %v82 = vld [vmem:[%s1 + $0xd0] sm:$0xf]
  %v83 = vld [vmem:[%s1 + $0xd4] sm:$0xf]
  %v84 = vld [vmem:[%s1 + $0xd8] sm:$0xf]
  %v85 = vld [vmem:[%s1 + $0xdc] sm:$0xf]
  %v86 = vld [vmem:[%s1 + $0xe0] sm:$0xf]
  %v87 = vld [vmem:[%s1 + $0xe4] sm:$0xf]
  %v88 = vld [vmem:[%s1 + $0xe8] sm:$0xf]
  %v89 = vld [vmem:[%s1 + $0xec] sm:$0xf]
  %v90 = vld [vmem:[%s1 + $0xf0] sm:$0xf]
  %v91 = vld [vmem:[%s1 + $0xf4] sm:$0xf]
  %v92 = vld [vmem:[%s1 + $0xf8] sm:$0xf]
  %v93 = vld [vmem:[%s1 + $0xfc] sm:$0xf]
  %v94 = vld [vmem:[%s1 + $0x100] sm:$0xf]
  %v95 = vld [vmem:[%s1 + $0x104] sm:$0xf]
  %v96 = vld [vmem:[%s1 + $0x108] sm:$0xf]
  %v97 = vld [vmem:[%s1 + $0x10c] sm:$0xf]
  %v98 = vld [vmem:[%s1 + $0x110] sm:$0xf]
  %v99 = vld [vmem:[%s1 + $0x114] sm:$0xf]
  %v100 = vld [vmem:[%s1 + $0x118] sm:$0xf]
  %v101 = vld [vmem:[%s1 + $0x11c] sm:$0xf]
  %v102 = vld [vmem:[%s1 + $0x120] sm:$0xf]
  %v103 = vld [vmem:[%s1 + $0x124] sm:$0xf]
  %v104 = vld [vmem:[%s1 + $0x128] sm:$0xf]
  %v105 = vld [vmem:[%s1 + $0x12c] sm:$0xf]
  %v106 = vld [vmem:[%s1 + $0x130] sm:$0xf]
  %v107 = vld [vmem:[%s1 + $0x134] sm:$0xf]
  %v108 = vld [vmem:[%s1 + $0x138] sm:$0xf]
  %v109 = vld [vmem:[%s1 + $0x13c] sm:$0xf]
  %v110 = vld [vmem:[%s1 + $0x140] sm:$0xf]
  %v111 = vld [vmem:[%s1 + $0x144] sm:$0xf]
  %v112 = vld [vmem:[%s1 + $0x148] sm:$0xf]
  %v113 = vld [vmem:[%s1 + $0x14c] sm:$0xf]
  %v114 = vld [vmem:[%s1 + $0x150] sm:$0xf]
  %v115 = vld [vmem:[%s1 + $0x154] sm:$0xf]
  %v116 = vld [vmem:[%s1 + $0x158] sm:$0xf]
  %v117 = vld [vmem:[%s1 + $0x15c] sm:$0xf]
  %v118 = vld [vmem:[%s1 + $0x160] sm:$0xf]
  %v119 = vld [vmem:[%s1 + $0x164] sm:$0xf]
  %v120 = vld [vmem:[%s1 + $0x168] sm:$0xf]
  %v121 = vld [vmem:[%s1 + $0x16c] sm:$0xf]
  %v122 = vld [vmem:[%s1 + $0x170] sm:$0xf]
  %v123 = vld [vmem:[%s1 + $0x174] sm:$0xf]
  %v124 = vld [vmem:[%s1 + $0x178] sm:$0xf]
  %v125 = vld [vmem:[%s1 + $0x17c] sm:$0xf]
  %v126 = vld [vmem:[%s1 + $0x180] sm:$0xf]
  %v127 = vld [vmem:[%s1 + $0x184] sm:$0xf]
  %v128 = vld [vmem:[%s1 + $0x188] sm:$0xf]
  %v129 = vld [vmem:[%s1 + $0x18c] sm:$0xf]
  %v130 = vld [vmem:[%s1 + $0x190] sm:$0xf]
  %v131 = vld [vmem:[%s1 + $0x194] sm:$0xf]
  %v132 = vld [vmem:[%s1 + $0x198] sm:$0xf]
  %v133 = vld [vmem:[%s1 + $0x19c] sm:$0xf]
  %v134 = vld [vmem:[%s1 + $0x1a0] sm:$0xf]
  %v135 = vld [vmem:[%s1 + $0x1a4] sm:$0xf]
  %v136 = vld [vmem:[%s1 + $0x1a8] sm:$0xf]
  %v137 = vld [vmem:[%s1 + $0x1ac] sm:$0xf]
  %v138 = vld [vmem:[%s1 + $0x1b0] sm:$0xf]
  %v139 = vld [vmem:[%s1 + $0x1b4] sm:$0xf]
  %v140 = vld [vmem:[%s1 + $0x1b8] sm:$0xf]
  %v141 = vld [vmem:[%s1 + $0x1bc] sm:$0xf]
  %v142 = vld [vmem:[%s1 + $0x1c0] sm:$0xf]
  %v143 = vld [vmem:[%s1 + $0x1c4] sm:$0xf]
  %v144 = vld [vmem:[%s1 + $0x1c8] sm:$0xf]
  %v145 = vld [vmem:[%s1 + $0x1cc] sm:$0xf]
  %v146 = vld [vmem:[%s1 + $0x1d0] sm:$0xf]
  %v147 = vld [vmem:[%s1 + $0x1d4] sm:$0xf]
  %v148 = vld [vmem:[%s1 + $0x1d8] sm:$0xf]
  %v149 = vld [vmem:[%s1 + $0x1dc] sm:$0xf]
  %v150 = vld [vmem:[%s1 + $0x1e0] sm:$0xf]
  %v151 = vld [vmem:[%s1 + $0x1e4] sm:$0xf]
  %v152 = vld [vmem:[%s1 + $0x1e8] sm:$0xf]
  %v153 = vld [vmem:[%s1 + $0x1ec] sm:$0xf]
  %v154 = vld [vmem:[%s1 + $0x1f0] sm:$0xf]
  %v155 = vld [vmem:[%s1 + $0x1f4] sm:$0xf]
  %v156 = vld [vmem:[%s1 + $0x1f8] sm:$0xf]
  %v157 = vld [vmem:[%s1 + $0x1fc] sm:$0xf]
  %v158 = vld [vmem:[%s2] sm:$0x1]
  %v160 = vperm.slane %v158, 0
  %v178 = vunpack.c.l.b16 %v14
  %v179 = vunpack.c.h.b16 %v14
  %v180 = vunpack.c.l.b16 %v15
  %v181 = vunpack.c.h.b16 %v15
  %v182 = vunpack.c.l.b16 %v16
  %v183 = vunpack.c.h.b16 %v16
  %v184 = vunpack.c.l.b16 %v17
  %v185 = vunpack.c.h.b16 %v17
  %v186 = vunpack.c.l.b16 %v18
  %v187 = vunpack.c.h.b16 %v18
  %v188 = vunpack.c.l.b16 %v19
  %v189 = vunpack.c.h.b16 %v19
  %v190 = vunpack.c.l.b16 %v20
  %v191 = vunpack.c.h.b16 %v20
  %v192 = vunpack.c.l.b16 %v21
  %v193 = vunpack.c.h.b16 %v21
  %v194 = vunpack.c.l.b16 %v22
  %v195 = vunpack.c.h.b16 %v22
  %v196 = vunpack.c.l.b16 %v23
  %v197 = vunpack.c.h.b16 %v23
  %v198 = vunpack.c.l.b16 %v24
  %v199 = vunpack.c.h.b16 %v24
  %v200 = vunpack.c.l.b16 %v25
  %v201 = vunpack.c.h.b16 %v25
  %v202 = vunpack.c.l.b16 %v26
  %v203 = vunpack.c.h.b16 %v26
  %v204 = vunpack.c.l.b16 %v27
  %v205 = vunpack.c.h.b16 %v27
  %v206 = vunpack.c.l.b16 %v28
  %v207 = vunpack.c.h.b16 %v28
  %v208 = vunpack.c.l.b16 %v29
  %v209 = vunpack.c.h.b16 %v29
  %v210 = vpack.c.b16 %v186, %v178
  %v211 = vpack.c.b16 %v187, %v179
  %v212 = vpack.c.b16 %v188, %v180
  %v213 = vpack.c.b16 %v189, %v181
  %v214 = vpack.c.b16 %v190, %v182
  %v215 = vpack.c.b16 %v191, %v183
  %v216 = vpack.c.b16 %v192, %v184
  %v217 = vpack.c.b16 %v193, %v185
  %v218 = vpack.c.b16 %v202, %v194
  %v219 = vpack.c.b16 %v203, %v195
  %v220 = vpack.c.b16 %v204, %v196
  %v221 = vpack.c.b16 %v205, %v197
  %v222 = vpack.c.b16 %v206, %v198
  %v223 = vpack.c.b16 %v207, %v199
  %v224 = vpack.c.b16 %v208, %v200
  %v225 = vpack.c.b16 %v209, %v201
  %v370 = vunpack.c.l.b16 %v30
  %v371 = vunpack.c.l.b16 %v31
  %v372 = vunpack.c.l.b16 %v32
  %v373 = vunpack.c.l.b16 %v33
  %v374 = vunpack.c.l.b16 %v34
  %v375 = vunpack.c.l.b16 %v35
  %v376 = vunpack.c.l.b16 %v36
  %v377 = vunpack.c.l.b16 %v37
  %v378 = vunpack.c.l.b16 %v38
  %v379 = vunpack.c.l.b16 %v39
  %v380 = vunpack.c.l.b16 %v40
  %v381 = vunpack.c.l.b16 %v41
  %v382 = vunpack.c.l.b16 %v42
  %v383 = vunpack.c.l.b16 %v43
  %v384 = vunpack.c.l.b16 %v44
  %v385 = vunpack.c.l.b16 %v45
  %v386 = vunpack.c.l.b16 %v46
  %v387 = vunpack.c.l.b16 %v47
  %v388 = vunpack.c.l.b16 %v48
  %v389 = vunpack.c.l.b16 %v49
  %v390 = vunpack.c.l.b16 %v50
  %v391 = vunpack.c.l.b16 %v51
  %v392 = vunpack.c.l.b16 %v52
  %v393 = vunpack.c.l.b16 %v53
  %v394 = vunpack.c.l.b16 %v54
  %v395 = vunpack.c.l.b16 %v55
  %v396 = vunpack.c.l.b16 %v56
  %v397 = vunpack.c.l.b16 %v57
  %v398 = vunpack.c.l.b16 %v58
  %v399 = vunpack.c.l.b16 %v59
  %v400 = vunpack.c.l.b16 %v60
  %v401 = vunpack.c.l.b16 %v61
  %v402 = vunpack.c.l.b16 %v62
  %v403 = vunpack.c.l.b16 %v63
  %v404 = vunpack.c.l.b16 %v64
  %v405 = vunpack.c.l.b16 %v65
  %v406 = vunpack.c.l.b16 %v66
  %v407 = vunpack.c.l.b16 %v67
  %v408 = vunpack.c.l.b16 %v68
  %v409 = vunpack.c.l.b16 %v69
  %v410 = vunpack.c.l.b16 %v70
  %v411 = vunpack.c.l.b16 %v71
  %v412 = vunpack.c.l.b16 %v72
  %v413 = vunpack.c.l.b16 %v73
  %v414 = vunpack.c.l.b16 %v74
  %v415 = vunpack.c.l.b16 %v75
  %v416 = vunpack.c.l.b16 %v76
  %v417 = vunpack.c.l.b16 %v77
  %v418 = vunpack.c.l.b16 %v78
  %v419 = vunpack.c.l.b16 %v79
  %v420 = vunpack.c.l.b16 %v80
  %v421 = vunpack.c.l.b16 %v81
  %v422 = vunpack.c.l.b16 %v82
  %v423 = vunpack.c.l.b16 %v83
  %v424 = vunpack.c.l.b16 %v84
  %v425 = vunpack.c.l.b16 %v85
  %v426 = vunpack.c.l.b16 %v86
  %v427 = vunpack.c.l.b16 %v87
  %v428 = vunpack.c.l.b16 %v88
  %v429 = vunpack.c.l.b16 %v89
  %v430 = vunpack.c.l.b16 %v90
  %v431 = vunpack.c.l.b16 %v91
  %v432 = vunpack.c.l.b16 %v92
  %v433 = vunpack.c.l.b16 %v93
  %v434 = vunpack.c.l.b16 %v94
  %v435 = vunpack.c.l.b16 %v95
  %v436 = vunpack.c.l.b16 %v96
  %v437 = vunpack.c.l.b16 %v97
  %v438 = vunpack.c.l.b16 %v98
  %v439 = vunpack.c.l.b16 %v99
  %v440 = vunpack.c.l.b16 %v100
  %v441 = vunpack.c.l.b16 %v101
  %v442 = vunpack.c.l.b16 %v102
  %v443 = vunpack.c.l.b16 %v103
  %v444 = vunpack.c.l.b16 %v104
  %v445 = vunpack.c.l.b16 %v105
  %v446 = vunpack.c.l.b16 %v106
  %v447 = vunpack.c.l.b16 %v107
  %v448 = vunpack.c.l.b16 %v108
  %v449 = vunpack.c.l.b16 %v109
  %v450 = vunpack.c.l.b16 %v110
  %v451 = vunpack.c.l.b16 %v111
  %v452 = vunpack.c.l.b16 %v112
  %v453 = vunpack.c.l.b16 %v113
  %v454 = vunpack.c.l.b16 %v114
  %v455 = vunpack.c.l.b16 %v115
  %v456 = vunpack.c.l.b16 %v116
  %v457 = vunpack.c.l.b16 %v117
  %v458 = vunpack.c.l.b16 %v118
  %v459 = vunpack.c.l.b16 %v119
  %v460 = vunpack.c.l.b16 %v120
  %v461 = vunpack.c.l.b16 %v121
  %v462 = vunpack.c.l.b16 %v122
  %v463 = vunpack.c.l.b16 %v123
  %v464 = vunpack.c.l.b16 %v124
  %v465 = vunpack.c.l.b16 %v125
  %v466 = vunpack.c.l.b16 %v126
  %v467 = vunpack.c.l.b16 %v127
  %v468 = vunpack.c.l.b16 %v128
  %v469 = vunpack.c.l.b16 %v129
  %v470 = vunpack.c.l.b16 %v130
  %v471 = vunpack.c.l.b16 %v131
  %v472 = vunpack.c.l.b16 %v132
  %v473 = vunpack.c.l.b16 %v133
  %v474 = vunpack.c.l.b16 %v134
  %v475 = vunpack.c.l.b16 %v135
  %v476 = vunpack.c.l.b16 %v136
  %v477 = vunpack.c.l.b16 %v137
  %v478 = vunpack.c.l.b16 %v138
  %v479 = vunpack.c.l.b16 %v139
  %v480 = vunpack.c.l.b16 %v140
  %v481 = vunpack.c.l.b16 %v141
  %v482 = vunpack.c.l.b16 %v142
  %v483 = vunpack.c.l.b16 %v143
  %v484 = vunpack.c.l.b16 %v144
  %v485 = vunpack.c.l.b16 %v145
  %v486 = vunpack.c.l.b16 %v146
  %v487 = vunpack.c.l.b16 %v147
  %v488 = vunpack.c.l.b16 %v148
  %v489 = vunpack.c.l.b16 %v149
  %v490 = vunpack.c.l.b16 %v150
  %v491 = vunpack.c.l.b16 %v151
  %v492 = vunpack.c.l.b16 %v152
  %v493 = vunpack.c.l.b16 %v153
  %v494 = vunpack.c.l.b16 %v154
  %v495 = vunpack.c.l.b16 %v155
  %v496 = vunpack.c.l.b16 %v156
  %v497 = vunpack.c.l.b16 %v157
  %v498 = vpack.c.b16 %v371, %v370
  %v499 = vpack.c.b16 %v373, %v372
  %v500 = vpack.c.b16 %v375, %v374
  %v501 = vpack.c.b16 %v377, %v376
  %v502 = vpack.c.b16 %v379, %v378
  %v503 = vpack.c.b16 %v381, %v380
  %v504 = vpack.c.b16 %v383, %v382
  %v505 = vpack.c.b16 %v385, %v384
  %v506 = vpack.c.b16 %v387, %v386
  %v507 = vpack.c.b16 %v389, %v388
  %v508 = vpack.c.b16 %v391, %v390
  %v509 = vpack.c.b16 %v393, %v392
  %v510 = vpack.c.b16 %v395, %v394
  %v511 = vpack.c.b16 %v397, %v396
  %v512 = vpack.c.b16 %v399, %v398
  %v513 = vpack.c.b16 %v401, %v400
  %v514 = vpack.c.b16 %v403, %v402
  %v515 = vpack.c.b16 %v405, %v404
  %v516 = vpack.c.b16 %v407, %v406
  %v517 = vpack.c.b16 %v409, %v408
  %v518 = vpack.c.b16 %v411, %v410
  %v519 = vpack.c.b16 %v413, %v412
  %v520 = vpack.c.b16 %v415, %v414
  %v521 = vpack.c.b16 %v417, %v416
  %v522 = vpack.c.b16 %v419, %v418
  %v523 = vpack.c.b16 %v421, %v420
  %v524 = vpack.c.b16 %v423, %v422
  %v525 = vpack.c.b16 %v425, %v424
  %v526 = vpack.c.b16 %v427, %v426
  %v527 = vpack.c.b16 %v429, %v428
  %v528 = vpack.c.b16 %v431, %v430
  %v529 = vpack.c.b16 %v433, %v432
  %v530 = vpack.c.b16 %v435, %v434
  %v531 = vpack.c.b16 %v437, %v436
  %v532 = vpack.c.b16 %v439, %v438
  %v533 = vpack.c.b16 %v441, %v440
  %v534 = vpack.c.b16 %v443, %v442
  %v535 = vpack.c.b16 %v445, %v444
  %v536 = vpack.c.b16 %v447, %v446
  %v537 = vpack.c.b16 %v449, %v448
  %v538 = vpack.c.b16 %v451, %v450
  %v539 = vpack.c.b16 %v453, %v452
  %v540 = vpack.c.b16 %v455, %v454
  %v541 = vpack.c.b16 %v457, %v456
  %v542 = vpack.c.b16 %v459, %v458
  %v543 = vpack.c.b16 %v461, %v460
  %v544 = vpack.c.b16 %v463, %v462
  %v545 = vpack.c.b16 %v465, %v464
  %v546 = vpack.c.b16 %v467, %v466
  %v547 = vpack.c.b16 %v469, %v468
  %v548 = vpack.c.b16 %v471, %v470
  %v549 = vpack.c.b16 %v473, %v472
  %v550 = vpack.c.b16 %v475, %v474
  %v551 = vpack.c.b16 %v477, %v476
  %v552 = vpack.c.b16 %v479, %v478
  %v553 = vpack.c.b16 %v481, %v480
  %v554 = vpack.c.b16 %v483, %v482
  %v555 = vpack.c.b16 %v485, %v484
  %v556 = vpack.c.b16 %v487, %v486
  %v557 = vpack.c.b16 %v489, %v488
  %v558 = vpack.c.b16 %v491, %v490
  %v559 = vpack.c.b16 %v493, %v492
  %v560 = vpack.c.b16 %v495, %v494
  %v561 = vpack.c.b16 %v497, %v496
  %626 = vmatpush.bf16.msra.mxu0 %v505
  %627 = vmatpush.bf16.msra.mxu0 %v504
  %628 = vmatpush.bf16.msra.mxu0 %v503
  %629 = vmatpush.bf16.msra.mxu0 %v502
  %630 = vmatpush.bf16.msra.mxu0 %v501
  %631 = vmatpush.bf16.msra.mxu0 %v500
  %632 = vmatpush.bf16.msra.mxu0 %v499
  %633 = vmatpush.bf16.msra.mxu0 %v498
  %634 = vmatmul.bf16.gmra.mxu0 %v210
  %v635 = vpop.f32.mrf.mxu0
  %v636 = vadd.f32 %v160, %v635
  %v637 = vpop.f32.mrf.mxu0
  %v638 = vadd.f32 %v160, %v637
  %639 = vmatmul.bf16.gmra.mxu0 %v218
  %v640 = vpop.f32.mrf.mxu0
  %v641 = vadd.f32 %v160, %v640
  %v642 = vpop.f32.mrf.mxu0
  %v643 = vadd.f32 %v160, %v642
  %644 = vdwg.mxu0
  %645 = vmatpush.bf16.msra.mxu0 %v513
  %646 = vmatpush.bf16.msra.mxu0 %v512
  %647 = vmatpush.bf16.msra.mxu0 %v511
  %648 = vmatpush.bf16.msra.mxu0 %v510
  %649 = vmatpush.bf16.msra.mxu0 %v509
  %650 = vmatpush.bf16.msra.mxu0 %v508
  %651 = vmatpush.bf16.msra.mxu0 %v507
  %652 = vmatpush.bf16.msra.mxu0 %v506
  %653 = vmatmul.bf16.gmra.mxu0 %v211
  %v654 = vpop.f32.mrf.mxu0
  %v655 = vadd.f32 %v636, %v654
  %v656 = vpop.f32.mrf.mxu0
  %v657 = vadd.f32 %v638, %v656
  %658 = vmatmul.bf16.gmra.mxu0 %v219
  %v659 = vpop.f32.mrf.mxu0
  %v660 = vadd.f32 %v641, %v659
  %v661 = vpop.f32.mrf.mxu0
  %v662 = vadd.f32 %v643, %v661
  %663 = vdwg.mxu0
  %664 = vmatpush.bf16.msra.mxu0 %v521
  %665 = vmatpush.bf16.msra.mxu0 %v520
  %666 = vmatpush.bf16.msra.mxu0 %v519
  %667 = vmatpush.bf16.msra.mxu0 %v518
  %668 = vmatpush.bf16.msra.mxu0 %v517
  %669 = vmatpush.bf16.msra.mxu0 %v516
  %670 = vmatpush.bf16.msra.mxu0 %v515
  %671 = vmatpush.bf16.msra.mxu0 %v514
  %672 = vmatmul.bf16.gmra.mxu0 %v212
  %v673 = vpop.f32.mrf.mxu0
  %v674 = vadd.f32 %v655, %v673
  %v675 = vpop.f32.mrf.mxu0
  %v676 = vadd.f32 %v657, %v675
  %677 = vmatmul.bf16.gmra.mxu0 %v220
  %v678 = vpop.f32.mrf.mxu0
  %v679 = vadd.f32 %v660, %v678
  %v680 = vpop.f32.mrf.mxu0
  %v681 = vadd.f32 %v662, %v680
  %682 = vdwg.mxu0
  %683 = vmatpush.bf16.msra.mxu0 %v529
  %684 = vmatpush.bf16.msra.mxu0 %v528
  %685 = vmatpush.bf16.msra.mxu0 %v527
  %686 = vmatpush.bf16.msra.mxu0 %v526
  %687 = vmatpush.bf16.msra.mxu0 %v525
  %688 = vmatpush.bf16.msra.mxu0 %v524
  %689 = vmatpush.bf16.msra.mxu0 %v523
  %690 = vmatpush.bf16.msra.mxu0 %v522
  %691 = vmatmul.bf16.gmra.mxu0 %v213
  %v692 = vpop.f32.mrf.mxu0
  %v693 = vadd.f32 %v674, %v692
  %v694 = vpop.f32.mrf.mxu0
  %v695 = vadd.f32 %v676, %v694
  %696 = vmatmul.bf16.gmra.mxu0 %v221
  %v697 = vpop.f32.mrf.mxu0
  %v698 = vadd.f32 %v679, %v697
  %v699 = vpop.f32.mrf.mxu0
  %v700 = vadd.f32 %v681, %v699
  %701 = vdwg.mxu0
  %702 = vmatpush.bf16.msra.mxu0 %v537
  %703 = vmatpush.bf16.msra.mxu0 %v536
  %704 = vmatpush.bf16.msra.mxu0 %v535
  %705 = vmatpush.bf16.msra.mxu0 %v534
  %706 = vmatpush.bf16.msra.mxu0 %v533
  %707 = vmatpush.bf16.msra.mxu0 %v532
  %708 = vmatpush.bf16.msra.mxu0 %v531
  %709 = vmatpush.bf16.msra.mxu0 %v530
  %710 = vmatmul.bf16.gmra.mxu0 %v214
  %v711 = vpop.f32.mrf.mxu0
  %v712 = vadd.f32 %v693, %v711
  %v713 = vpop.f32.mrf.mxu0
  %v714 = vadd.f32 %v695, %v713
  %715 = vmatmul.bf16.gmra.mxu0 %v222
  %v716 = vpop.f32.mrf.mxu0
  %v717 = vadd.f32 %v698, %v716
  %v718 = vpop.f32.mrf.mxu0
  %v719 = vadd.f32 %v700, %v718
  %720 = vdwg.mxu0
  %721 = vmatpush.bf16.msra.mxu0 %v545
  %722 = vmatpush.bf16.msra.mxu0 %v544
  %723 = vmatpush.bf16.msra.mxu0 %v543
  %724 = vmatpush.bf16.msra.mxu0 %v542
  %725 = vmatpush.bf16.msra.mxu0 %v541
  %726 = vmatpush.bf16.msra.mxu0 %v540
  %727 = vmatpush.bf16.msra.mxu0 %v539
  %728 = vmatpush.bf16.msra.mxu0 %v538
  %729 = vmatmul.bf16.gmra.mxu0 %v215
  %v730 = vpop.f32.mrf.mxu0
  %v731 = vadd.f32 %v712, %v730
  %v732 = vpop.f32.mrf.mxu0
  %v733 = vadd.f32 %v714, %v732
  %734 = vmatmul.bf16.gmra.mxu0 %v223
  %v735 = vpop.f32.mrf.mxu0
  %v736 = vadd.f32 %v717, %v735
  %v737 = vpop.f32.mrf.mxu0
  %v738 = vadd.f32 %v719, %v737
  %739 = vdwg.mxu0
  %740 = vmatpush.bf16.msra.mxu0 %v553
  %741 = vmatpush.bf16.msra.mxu0 %v552
  %742 = vmatpush.bf16.msra.mxu0 %v551
  %743 = vmatpush.bf16.msra.mxu0 %v550
  %744 = vmatpush.bf16.msra.mxu0 %v549
  %745 = vmatpush.bf16.msra.mxu0 %v548
  %746 = vmatpush.bf16.msra.mxu0 %v547
  %747 = vmatpush.bf16.msra.mxu0 %v546
  %748 = vmatmul.bf16.gmra.mxu0 %v216
  %v749 = vpop.f32.mrf.mxu0
  %v750 = vadd.f32 %v731, %v749
  %v751 = vpop.f32.mrf.mxu0
  %v752 = vadd.f32 %v733, %v751
  %753 = vmatmul.bf16.gmra.mxu0 %v224
  %v754 = vpop.f32.mrf.mxu0
  %v755 = vadd.f32 %v736, %v754
  %v756 = vpop.f32.mrf.mxu0
  %v757 = vadd.f32 %v738, %v756
  %758 = vdwg.mxu0
  %759 = vmatpush.bf16.msra.mxu0 %v561
  %760 = vmatpush.bf16.msra.mxu0 %v560
  %761 = vmatpush.bf16.msra.mxu0 %v559
  %762 = vmatpush.bf16.msra.mxu0 %v558
  %763 = vmatpush.bf16.msra.mxu0 %v557
  %764 = vmatpush.bf16.msra.mxu0 %v556
  %765 = vmatpush.bf16.msra.mxu0 %v555
  %766 = vmatpush.bf16.msra.mxu0 %v554
  %767 = vmatmul.bf16.gmra.mxu0 %v217
  %v768 = vpop.f32.mrf.mxu0
  %v769 = vadd.f32 %v750, %v768
  %v770 = vpop.f32.mrf.mxu0
  %v771 = vadd.f32 %v752, %v770
  %772 = vmatmul.bf16.gmra.mxu0 %v225
  %v773 = vpop.f32.mrf.mxu0
  %v774 = vadd.f32 %v755, %v773
  %v775 = vpop.f32.mrf.mxu0
  %v776 = vadd.f32 %v757, %v775
  %777 = vdwg.mxu0
  %vm778 = vcmp.ge.f32.partialorder %v769, 0.0
  %vm779 = vcmp.ge.f32.partialorder %v771, 0.0
  %vm780 = vcmp.ge.f32.partialorder %v774, 0.0
  %vm781 = vcmp.ge.f32.partialorder %v776, 0.0
  %v782 = vmul.f32 %v769, 0.2
  %v783 = vmul.f32 %v771, 0.2
  %v784 = vmul.f32 %v774, 0.2
  %v785 = vmul.f32 %v776, 0.2
  %v786 = vsel %vm778, %v769, %v782
  %v787 = vsel %vm779, %v771, %v783
  %v788 = vsel %vm780, %v774, %v784
  %v789 = vsel %vm781, %v776, %v785
  %v790 = vpack.c.bf16 %v786, %v786
  %v791 = vpack.c.bf16 %v787, %v787
  %v792 = vpack.c.bf16 %v788, %v788
  %v793 = vpack.c.bf16 %v789, %v789
  %794 = vst [vmem:[%s3] sm:$0xf] %v790
  %795 = vst [vmem:[%s3 + $0x4] sm:$0xf] %v791
  %796 = vst [vmem:[%s3 + $0x8] sm:$0xf] %v792
  %797 = vst [vmem:[%s3 + $0xc] sm:$0xf] %v793
  // Predicated region
  $region14: #{spectral_discriminator_forward.8} parent=0 // pred_check
    _
  $region15: #{spectral_discriminator_forward.8} parent=0 // pred_check_branch
    %799 = sbr.rel (0) target = $region17
  $region16: #{spectral_discriminator_forward.8} parent=0 // pred_region
    _
  $region17: #{spectral_discriminator_forward.8} parent=0 // pred_fallthru
    _
  // Predicated region
  $region18: #{spectral_discriminator_forward.8} parent=0 // pred_check
    _
  $region19: #{spectral_discriminator_forward.8} parent=0 // pred_check_branch
    %801 = sbr.rel (0) target = $region21
  $region20: #{spectral_discriminator_forward.8} parent=0 // pred_region
    _
  $region21: #{spectral_discriminator_forward.8} parent=0 // pred_fallthru
    _

// kernel: spectral_discriminator_forward.9
$region0: #{spectral_discriminator_forward.9}
  #allocation0 [shape = 'u32[]', space=smem, size = 0x4, offset = 0x4, fixed_abs, tag = 'smem constant byte address 0x4 - core index']
  #allocation1 [shape = 'u32[72,128]{1,0:T(1,128)}', space=vmem, size = 0x9000, scoped, tag = 'internal scratch']
  %s0 = inlined_call_operand.vmem [shape: bf16[16,2048], index: 0, kind: input, shape index: {}]
  %s1 = inlined_call_operand.vmem [shape: bf16[2048,128], index: 1, kind: input, shape index: {}]
  %s2 = inlined_call_operand.vmem [shape: f32[1,128], index: 2, kind: input, shape index: {}]
  %s3 = inlined_call_operand.vmem [shape: f32[16,128], index: 3, kind: output, shape index: {}]
  %s4 = sld [smem:[#allocation0]]
  $region22: #{spectral_discriminator_forward.9} parent=0
    _
  %s6 = ssub.s32 1, %s4
  %s7 = scalar_select 0, %s6, %s4
  // Predicated region
  $region2: #{spectral_discriminator_forward.9} parent=0 // pred_check
    _
  $region3: #{spectral_discriminator_forward.9} parent=0 // pred_check_branch
    %9 = sbr.rel (0) target = $region5
  $region4: #{spectral_discriminator_forward.9} parent=0 // pred_region
    _
  $region5: #{spectral_discriminator_forward.9} parent=0 // pred_fallthru
    _
  // Predicated region
  $region6: #{spectral_discriminator_forward.9} parent=0 // pred_check
    _
  $region7: #{spectral_discriminator_forward.9} parent=0 // pred_check_branch
    %11 = sbr.rel (0) target = $region9
  $region8: #{spectral_discriminator_forward.9} parent=0 // pred_region
    _
  $region9: #{spectral_discriminator_forward.9} parent=0 // pred_fallthru
    _
  // Predicated region
  $region10: #{spectral_discriminator_forward.9} parent=0 // pred_check
    _
  $region11: #{spectral_discriminator_forward.9} parent=0 // pred_check_branch
    %13 = sbr.rel (0) target = $region13
  $region12: #{spectral_discriminator_forward.9} parent=0 // pred_region
    _
  $region13: #{spectral_discriminator_forward.9} parent=0 // pred_fallthru
    _
  %v14 = vld [vmem:[%s0] sm:$0xff]
  %v15 = vld [vmem:[%s0 + $0x8] sm:$0xff]
  %v16 = vld [vmem:[%s0 + $0x10] sm:$0xff]
  %v17 = vld [vmem:[%s0 + $0x18] sm:$0xff]
  %v18 = vld [vmem:[%s0 + $0x20] sm:$0xff]
  %v19 = vld [vmem:[%s0 + $0x28] sm:$0xff]
  %v20 = vld [vmem:[%s0 + $0x30] sm:$0xff]
  %v21 = vld [vmem:[%s0 + $0x38] sm:$0xff]
  %v22 = vld [vmem:[%s0 + $0x40] sm:$0xff]
  %v23 = vld [vmem:[%s0 + $0x48] sm:$0xff]
  %v24 = vld [vmem:[%s0 + $0x50] sm:$0xff]
  %v25 = vld [vmem:[%s0 + $0x58] sm:$0xff]
  %v26 = vld [vmem:[%s0 + $0x60] sm:$0xff]
  %v27 = vld [vmem:[%s0 + $0x68] sm:$0xff]
  %v28 = vld [vmem:[%s0 + $0x70] sm:$0xff]
  %v29 = vld [vmem:[%s0 + $0x78] sm:$0xff]
  %v30 = vld [vmem:[%s1] sm:$0xf]
  %v31 = vld [vmem:[%s1 + $0x4] sm:$0xf]
  %v32 = vld [vmem:[%s1 + $0x8] sm:$0xf]
  %v33 = vld [vmem:[%s1 + $0xc] sm:$0xf]
  %v34 = vld [vmem:[%s1 + $0x10] sm:$0xf]
  %v35 = vld [vmem:[%s1 + $0x14] sm:$0xf]
  %v36 = vld [vmem:[%s1 + $0x18] sm:$0xf]
  %v37 = vld [vmem:[%s1 + $0x1c] sm:$0xf]
  %v38 = vld [vmem:[%s1 + $0x20] sm:$0xf]
  %v39 = vld [vmem:[%s1 + $0x24] sm:$0xf]
  %v40 = vld [vmem:[%s1 + $0x28] sm:$0xf]
  %v41 = vld [vmem:[%s1 + $0x2c] sm:$0xf]
  %v42 = vld [vmem:[%s1 + $0x30] sm:$0xf]
  %v43 = vld [vmem:[%s1 + $0x34] sm:$0xf]
  %v44 = vld [vmem:[%s1 + $0x38] sm:$0xf]
  %v45 = vld [vmem:[%s1 + $0x3c] sm:$0xf]
  %v46 = vld [vmem:[%s1 + $0x40] sm:$0xf]
  %v47 = vld [vmem:[%s1 + $0x44] sm:$0xf]
  %v48 = vld [vmem:[%s1 + $0x48] sm:$0xf]
  %v49 = vld [vmem:[%s1 + $0x4c] sm:$0xf]
  %v50 = vld [vmem:[%s1 + $0x50] sm:$0xf]
  %v51 = vld [vmem:[%s1 + $0x54] sm:$0xf]
  %v52 = vld [vmem:[%s1 + $0x58] sm:$0xf]
  %v53 = vld [vmem:[%s1 + $0x5c] sm:$0xf]
  %v54 = vld [vmem:[%s1 + $0x60] sm:$0xf]
  %v55 = vld [vmem:[%s1 + $0x64] sm:$0xf]
  %v56 = vld [vmem:[%s1 + $0x68] sm:$0xf]
  %v57 = vld [vmem:[%s1 + $0x6c] sm:$0xf]
  %v58 = vld [vmem:[%s1 + $0x70] sm:$0xf]
  %v59 = vld [vmem:[%s1 + $0x74] sm:$0xf]
  %v60 = vld [vmem:[%s1 + $0x78] sm:$0xf]
  %v61 = vld [vmem:[%s1 + $0x7c] sm:$0xf]
  %v62 = vld [vmem:[%s1 + $0x80] sm:$0xf]
  %v63 = vld [vmem:[%s1 + $0x84] sm:$0xf]
  %v64 = vld [vmem:[%s1 + $0x88] sm:$0xf]
  %v65 = vld [vmem:[%s1 + $0x8c] sm:$0xf]
  %v66 = vld [vmem:[%s1 + $0x90] sm:$0xf]
  %v67 = vld [vmem:[%s1 + $0x94] sm:$0xf]
  %v68 = vld [vmem:[%s1 + $0x98] sm:$0xf]
  %v69 = vld [vmem:[%s1 + $0x9c] sm:$0xf]
  %v70 = vld [vmem:[%s1 + $0xa0] sm:$0xf]
  %v71 = vld [vmem:[%s1 + $0xa4] sm:$0xf]
  %v72 = vld [vmem:[%s1 + $0xa8] sm:$0xf]
  %v73 = vld [vmem:[%s1 + $0xac] sm:$0xf]
  %v74 = vld [vmem:[%s1 + $0xb0] sm:$0xf]
  %v75 = vld [vmem:[%s1 + $0xb4] sm:$0xf]
  %v76 = vld [vmem:[%s1 + $0xb8] sm:$0xf]
  %v77 = vld [vmem:[%s1 + $0xbc] sm:$0xf]
  %v78 = vld [vmem:[%s1 + $0xc0] sm:$0xf]
  %v79 = vld [vmem:[%s1 + $0xc4] sm:$0xf]
  %v80 = vld [vmem:[%s1 + $0xc8] sm:$0xf]
  %v81 = vld [vmem:[%s1 + $0xcc] sm:$0xf]
  %v82 = vld [vmem:[%s1 + $0xd0] sm:$0xf]
  %v83 = vld [vmem:[%s1 + $0xd4] sm:$0xf]
  %v84 = vld [vmem:[%s1 + $0xd8] sm:$0xf]
  %v85 = vld [vmem:[%s1 + $0xdc] sm:$0xf]
  %v86 = vld [vmem:[%s1 + $0xe0] sm:$0xf]
  %v87 = vld [vmem:[%s1 + $0xe4] sm:$0xf]
  %v88 = vld [vmem:[%s1 + $0xe8] sm:$0xf]
  %v89 = vld [vmem:[%s1 + $0xec] sm:$0xf]
  %v90 = vld [vmem:[%s1 + $0xf0] sm:$0xf]
  %v91 = vld [vmem:[%s1 + $0xf4] sm:$0xf]
  %v92 = vld [vmem:[%s1 + $0xf8] sm:$0xf]
  %v93 = vld [vmem:[%s1 + $0xfc] sm:$0xf]
  %v94 = vld [vmem:[%s1 + $0x100] sm:$0xf]
  %v95 = vld [vmem:[%s1 + $0x104] sm:$0xf]
  %v96 = vld [vmem:[%s1 + $0x108] sm:$0xf]
  %v97 = vld [vmem:[%s1 + $0x10c] sm:$0xf]
  %v98 = vld [vmem:[%s1 + $0x110] sm:$0xf]
  %v99 = vld [vmem:[%s1 + $0x114] sm:$0xf]
  %v100 = vld [vmem:[%s1 + $0x118] sm:$0xf]
  %v101 = vld [vmem:[%s1 + $0x11c] sm:$0xf]
  %v102 = vld [vmem:[%s1 + $0x120] sm:$0xf]
  %v103 = vld [vmem:[%s1 + $0x124] sm:$0xf]
  %v104 = vld [vmem:[%s1 + $0x128] sm:$0xf]
  %v105 = vld [vmem:[%s1 + $0x12c] sm:$0xf]
  %v106 = vld [vmem:[%s1 + $0x130] sm:$0xf]
  %v107 = vld [vmem:[%s1 + $0x134] sm:$0xf]
  %v108 = vld [vmem:[%s1 + $0x138] sm:$0xf]
  %v109 = vld [vmem:[%s1 + $0x13c] sm:$0xf]
  %v110 = vld [vmem:[%s1 + $0x140] sm:$0xf]
  %v111 = vld [vmem:[%s1 + $0x144] sm:$0xf]
  %v112 = vld [vmem:[%s1 + $0x148] sm:$0xf]
  %v113 = vld [vmem:[%s1 + $0x14c] sm:$0xf]
  %v114 = vld [vmem:[%s1 + $0x150] sm:$0xf]
  %v115 = vld [vmem:[%s1 + $0x154] sm:$0xf]
  %v116 = vld [vmem:[%s1 + $0x158] sm:$0xf]
  %v117 = vld [vmem:[%s1 + $0x15c] sm:$0xf]
  %v118 = vld [vmem:[%s1 + $0x160] sm:$0xf]
  %v119 = vld [vmem:[%s1 + $0x164] sm:$0xf]
  %v120 = vld [vmem:[%s1 + $0x168] sm:$0xf]
  %v121 = vld [vmem:[%s1 + $0x16c] sm:$0xf]
  %v122 = vld [vmem:[%s1 + $0x170] sm:$0xf]
  %v123 = vld [vmem:[%s1 + $0x174] sm:$0xf]
  %v124 = vld [vmem:[%s1 + $0x178] sm:$0xf]
  %v125 = vld [vmem:[%s1 + $0x17c] sm:$0xf]
  %v126 = vld [vmem:[%s1 + $0x180] sm:$0xf]
  %v127 = vld [vmem:[%s1 + $0x184] sm:$0xf]
  %v128 = vld [vmem:[%s1 + $0x188] sm:$0xf]
  %v129 = vld [vmem:[%s1 + $0x18c] sm:$0xf]
  %v130 = vld [vmem:[%s1 + $0x190] sm:$0xf]
  %v131 = vld [vmem:[%s1 + $0x194] sm:$0xf]
  %v132 = vld [vmem:[%s1 + $0x198] sm:$0xf]
  %v133 = vld [vmem:[%s1 + $0x19c] sm:$0xf]
  %v134 = vld [vmem:[%s1 + $0x1a0] sm:$0xf]
  %v135 = vld [vmem:[%s1 + $0x1a4] sm:$0xf]
  %v136 = vld [vmem:[%s1 + $0x1a8] sm:$0xf]
  %v137 = vld [vmem:[%s1 + $0x1ac] sm:$0xf]
  %v138 = vld [vmem:[%s1 + $0x1b0] sm:$0xf]
  %v139 = vld [vmem:[%s1 + $0x1b4] sm:$0xf]
  %v140 = vld [vmem:[%s1 + $0x1b8] sm:$0xf]
  %v141 = vld [vmem:[%s1 + $0x1bc] sm:$0xf]
  %v142 = vld [vmem:[%s1 + $0x1c0] sm:$0xf]
  %v143 = vld [vmem:[%s1 + $0x1c4] sm:$0xf]
  %v144 = vld [vmem:[%s1 + $0x1c8] sm:$0xf]
  %v145 = vld [vmem:[%s1 + $0x1cc] sm:$0xf]
  %v146 = vld [vmem:[%s1 + $0x1d0] sm:$0xf]
  %v147 = vld [vmem:[%s1 + $0x1d4] sm:$0xf]
  %v148 = vld [vmem:[%s1 + $0x1d8] sm:$0xf]
  %v149 = vld [vmem:[%s1 + $0x1dc] sm:$0xf]
  %v150 = vld [vmem:[%s1 + $0x1e0] sm:$0xf]
  %v151 = vld [vmem:[%s1 + $0x1e4] sm:$0xf]
  %v152 = vld [vmem:[%s1 + $0x1e8] sm:$0xf]
  %v153 = vld [vmem:[%s1 + $0x1ec] sm:$0xf]
  %v154 = vld [vmem:[%s1 + $0x1f0] sm:$0xf]
  %v155 = vld [vmem:[%s1 + $0x1f4] sm:$0xf]
  %v156 = vld [vmem:[%s1 + $0x1f8] sm:$0xf]
  %v157 = vld [vmem:[%s1 + $0x1fc] sm:$0xf]
  %v158 = vld [vmem:[%s1 + $0x200] sm:$0xf]
  %v159 = vld [vmem:[%s1 + $0x204] sm:$0xf]
  %v160 = vld [vmem:[%s1 + $0x208] sm:$0xf]
  %v161 = vld [vmem:[%s1 + $0x20c] sm:$0xf]
  %v162 = vld [vmem:[%s1 + $0x210] sm:$0xf]
  %v163 = vld [vmem:[%s1 + $0x214] sm:$0xf]
  %v164 = vld [vmem:[%s1 + $0x218] sm:$0xf]
  %v165 = vld [vmem:[%s1 + $0x21c] sm:$0xf]
  %v166 = vld [vmem:[%s1 + $0x220] sm:$0xf]
  %v167 = vld [vmem:[%s1 + $0x224] sm:$0xf]
  %v168 = vld [vmem:[%s1 + $0x228] sm:$0xf]
  %v169 = vld [vmem:[%s1 + $0x22c] sm:$0xf]
  %v170 = vld [vmem:[%s1 + $0x230] sm:$0xf]
  %v171 = vld [vmem:[%s1 + $0x234] sm:$0xf]
  %v172 = vld [vmem:[%s1 + $0x238] sm:$0xf]
  %v173 = vld [vmem:[%s1 + $0x23c] sm:$0xf]
  %v174 = vld [vmem:[%s1 + $0x240] sm:$0xf]
  %v175 = vld [vmem:[%s1 + $0x244] sm:$0xf]
  %v176 = vld [vmem:[%s1 + $0x248] sm:$0xf]
  %v177 = vld [vmem:[%s1 + $0x24c] sm:$0xf]
  %v178 = vld [vmem:[%s1 + $0x250] sm:$0xf]
  %v179 = vld [vmem:[%s1 + $0x254] sm:$0xf]
  %v180 = vld [vmem:[%s1 + $0x258] sm:$0xf]
  %v181 = vld [vmem:[%s1 + $0x25c] sm:$0xf]
  %v182 = vld [vmem:[%s1 + $0x260] sm:$0xf]
  %v183 = vld [vmem:[%s1 + $0x264] sm:$0xf]
  %v184 = vld [vmem:[%s1 + $0x268] sm:$0xf]
  %v185 = vld [vmem:[%s1 + $0x26c] sm:$0xf]
  %v186 = vld [vmem:[%s1 + $0x270] sm:$0xf]
  %v187 = vld [vmem:[%s1 + $0x274] sm:$0xf]
  %v188 = vld [vmem:[%s1 + $0x278] sm:$0xf]
  %v189 = vld [vmem:[%s1 + $0x27c] sm:$0xf]
  %v190 = vld [vmem:[%s1 + $0x280] sm:$0xf]
  %v191 = vld [vmem:[%s1 + $0x284] sm:$0xf]
  %v192 = vld [vmem:[%s1 + $0x288] sm:$0xf]
  %v193 = vld [vmem:[%s1 + $0x28c] sm:$0xf]
  %v194 = vld [vmem:[%s1 + $0x290] sm:$0xf]
  %v195 = vld [vmem:[%s1 + $0x294] sm:$0xf]
  %v196 = vld [vmem:[%s1 + $0x298] sm:$0xf]
  %v197 = vld [vmem:[%s1 + $0x29c] sm:$0xf]
  %v198 = vld [vmem:[%s1 + $0x2a0] sm:$0xf]
  %v199 = vld [vmem:[%s1 + $0x2a4] sm:$0xf]
  %v200 = vld [vmem:[%s1 + $0x2a8] sm:$0xf]
  %v201 = vld [vmem:[%s1 + $0x2ac] sm:$0xf]
  %v202 = vld [vmem:[%s1 + $0x2b0] sm:$0xf]
  %v203 = vld [vmem:[%s1 + $0x2b4] sm:$0xf]
  %v204 = vld [vmem:[%s1 + $0x2b8] sm:$0xf]
  %v205 = vld [vmem:[%s1 + $0x2bc] sm:$0xf]
  %v206 = vld [vmem:[%s1 + $0x2c0] sm:$0xf]
  %v207 = vld [vmem:[%s1 + $0x2c4] sm:$0xf]
  %v208 = vld [vmem:[%s1 + $0x2c8] sm:$0xf]
  %v209 = vld [vmem:[%s1 + $0x2cc] sm:$0xf]
  %v210 = vld [vmem:[%s1 + $0x2d0] sm:$0xf]
  %v211 = vld [vmem:[%s1 + $0x2d4] sm:$0xf]
  %v212 = vld [vmem:[%s1 + $0x2d8] sm:$0xf]
  %v213 = vld [vmem:[%s1 + $0x2dc] sm:$0xf]
  %v214 = vld [vmem:[%s1 + $0x2e0] sm:$0xf]
  %v215 = vld [vmem:[%s1 + $0x2e4] sm:$0xf]
  %v216 = vld [vmem:[%s1 + $0x2e8] sm:$0xf]
  %v217 = vld [vmem:[%s1 + $0x2ec] sm:$0xf]
  %v218 = vld [vmem:[%s1 + $0x2f0] sm:$0xf]
  %v219 = vld [vmem:[%s1 + $0x2f4] sm:$0xf]
  %v220 = vld [vmem:[%s1 + $0x2f8] sm:$0xf]
  %v221 = vld [vmem:[%s1 + $0x2fc] sm:$0xf]
  %v222 = vld [vmem:[%s1 + $0x300] sm:$0xf]
  %v223 = vld [vmem:[%s1 + $0x304] sm:$0xf]
  %v224 = vld [vmem:[%s1 + $0x308] sm:$0xf]
  %v225 = vld [vmem:[%s1 + $0x30c] sm:$0xf]
  %v226 = vld [vmem:[%s1 + $0x310] sm:$0xf]
  %v227 = vld [vmem:[%s1 + $0x314] sm:$0xf]
  %v228 = vld [vmem:[%s1 + $0x318] sm:$0xf]
  %v229 = vld [vmem:[%s1 + $0x31c] sm:$0xf]
  %v230 = vld [vmem:[%s1 + $0x320] sm:$0xf]
  %v231 = vld [vmem:[%s1 + $0x324] sm:$0xf]
  %v232 = vld [vmem:[%s1 + $0x328] sm:$0xf]
  %v233 = vld [vmem:[%s1 + $0x32c] sm:$0xf]
  %v234 = vld [vmem:[%s1 + $0x330] sm:$0xf]
  %v235 = vld [vmem:[%s1 + $0x334] sm:$0xf]
  %v236 = vld [vmem:[%s1 + $0x338] sm:$0xf]
  %v237 = vld [vmem:[%s1 + $0x33c] sm:$0xf]
  %v238 = vld [vmem:[%s1 + $0x340] sm:$0xf]
  %v239 = vld [vmem:[%s1 + $0x344] sm:$0xf]
  %v240 = vld [vmem:[%s1 + $0x348] sm:$0xf]
  %v241 = vld [vmem:[%s1 + $0x34c] sm:$0xf]
  %v242 = vld [vmem:[%s1 + $0x350] sm:$0xf]
  %v243 = vld [vmem:[%s1 + $0x354] sm:$0xf]
  %v244 = vld [vmem:[%s1 + $0x358] sm:$0xf]
  %v245 = vld [vmem:[%s1 + $0x35c] sm:$0xf]
  %v246 = vld [vmem:[%s1 + $0x360] sm:$0xf]
  %v247 = vld [vmem:[%s1 + $0x364] sm:$0xf]
  %v248 = vld [vmem:[%s1 + $0x368] sm:$0xf]
  %v249 = vld [vmem:[%s1 + $0x36c] sm:$0xf]
  %v250 = vld [vmem:[%s1 + $0x370] sm:$0xf]
  %v251 = vld [vmem:[%s1 + $0x374] sm:$0xf]
  %v252 = vld [vmem:[%s1 + $0x378] sm:$0xf]
  %v253 = vld [vmem:[%s1 + $0x37c] sm:$0xf]
  %v254 = vld [vmem:[%s1 + $0x380] sm:$0xf]
  %v255 = vld [vmem:[%s1 + $0x384] sm:$0xf]
  %v256 = vld [vmem:[%s1 + $0x388] sm:$0xf]
  %v257 = vld [vmem:[%s1 + $0x38c] sm:$0xf]
  %v258 = vld [vmem:[%s1 + $0x390] sm:$0xf]
  %v259 = vld [vmem:[%s1 + $0x394] sm:$0xf]
  %v260 = vld [vmem:[%s1 + $0x398] sm:$0xf]
  %v261 = vld [vmem:[%s1 + $0x39c] sm:$0xf]
  %v262 = vld [vmem:[%s1 + $0x3a0] sm:$0xf]
  %v263 = vld [vmem:[%s1 + $0x3a4] sm:$0xf]
  %v264 = vld [vmem:[%s1 + $0x3a8] sm:$0xf]
  %v265 = vld [vmem:[%s1 + $0x3ac] sm:$0xf]
  %v266 = vld [vmem:[%s1 + $0x3b0] sm:$0xf]
  %v267 = vld [vmem:[%s1 + $0x3b4] sm:$0xf]
  %v268 = vld [vmem:[%s1 + $0x3b8] sm:$0xf]
  %v269 = vld [vmem:[%s1 + $0x3bc] sm:$0xf]
  %v270 = vld [vmem:[%s1 + $0x3c0] sm:$0xf]
  %v271 = vld [vmem:[%s1 + $0x3c4] sm:$0xf]
  %v272 = vld [vmem:[%s1 + $0x3c8] sm:$0xf]
  %v273 = vld [vmem:[%s1 + $0x3cc] sm:$0xf]
  %v274 = vld [vmem:[%s1 + $0x3d0] sm:$0xf]
  %v275 = vld [vmem:[%s1 + $0x3d4] sm:$0xf]
  %v276 = vld [vmem:[%s1 + $0x3d8] sm:$0xf]
  %v277 = vld [vmem:[%s1 + $0x3dc] sm:$0xf]
  %v278 = vld [vmem:[%s1 + $0x3e0] sm:$0xf]
  %v279 = vld [vmem:[%s1 + $0x3e4] sm:$0xf]
  %v280 = vld [vmem:[%s1 + $0x3e8] sm:$0xf]
  %v281 = vld [vmem:[%s1 + $0x3ec] sm:$0xf]
  %v282 = vld [vmem:[%s1 + $0x3f0] sm:$0xf]
  %v283 = vld [vmem:[%s1 + $0x3f4] sm:$0xf]
  %v284 = vld [vmem:[%s1 + $0x3f8] sm:$0xf]
  %v285 = vld [vmem:[%s1 + $0x3fc] sm:$0xf]
  %v286 = vld [vmem:[%s2] sm:$0x1]
  %v288 = vperm.slane %v286, 0
  %v306 = vunpack.c.l.b16 %v14
  %v307 = vunpack.c.h.b16 %v14
  %v308 = vunpack.c.l.b16 %v15
  %v309 = vunpack.c.h.b16 %v15
  %v310 = vunpack.c.l.b16 %v16
  %v311 = vunpack.c.h.b16 %v16
  %v312 = vunpack.c.l.b16 %v17
  %v313 = vunpack.c.h.b16 %v17
  %v314 = vunpack.c.l.b16 %v18
  %v315 = vunpack.c.h.b16 %v18
  %v316 = vunpack.c.l.b16 %v19
  %v317 = vunpack.c.h.b16 %v19
  %v318 = vunpack.c.l.b16 %v20
  %v319 = vunpack.c.h.b16 %v20
  %v320 = vunpack.c.l.b16 %v21
  %v321 = vunpack.c.h.b16 %v21
  %v322 = vunpack.c.l.b16 %v22
  %v323 = vunpack.c.h.b16 %v22
  %v324 = vunpack.c.l.b16 %v23
  %v325 = vunpack.c.h.b16 %v23
  %v326 = vunpack.c.l.b16 %v24
  %v327 = vunpack.c.h.b16 %v24
  %v328 = vunpack.c.l.b16 %v25
  %v329 = vunpack.c.h.b16 %v25
  %v330 = vunpack.c.l.b16 %v26
  %v331 = vunpack.c.h.b16 %v26
  %v332 = vunpack.c.l.b16 %v27
  %v333 = vunpack.c.h.b16 %v27
  %v334 = vunpack.c.l.b16 %v28
  %v335 = vunpack.c.h.b16 %v28
  %v336 = vunpack.c.l.b16 %v29
  %v337 = vunpack.c.h.b16 %v29
  %v338 = vpack.c.b16 %v322, %v306
  %v339 = vpack.c.b16 %v323, %v307
  %v340 = vpack.c.b16 %v324, %v308
  %v341 = vpack.c.b16 %v325, %v309
  %v342 = vpack.c.b16 %v326, %v310
  %v343 = vpack.c.b16 %v327, %v311
  %v344 = vpack.c.b16 %v328, %v312
  %v345 = vpack.c.b16 %v329, %v313
  %v346 = vpack.c.b16 %v330, %v314
  %v347 = vpack.c.b16 %v331, %v315
  %v348 = vpack.c.b16 %v332, %v316
  %v349 = vpack.c.b16 %v333, %v317
  %v350 = vpack.c.b16 %v334, %v318
  %v351 = vpack.c.b16 %v335, %v319
  %v352 = vpack.c.b16 %v336, %v320
  %v353 = vpack.c.b16 %v337, %v321
  %v626 = vunpack.c.l.b16 %v30
  %v627 = vunpack.c.l.b16 %v31
  %v628 = vunpack.c.l.b16 %v32
  %v629 = vunpack.c.l.b16 %v33
  %v630 = vunpack.c.l.b16 %v34
  %v631 = vunpack.c.l.b16 %v35
  %v632 = vunpack.c.l.b16 %v36
  %v633 = vunpack.c.l.b16 %v37
  %v634 = vunpack.c.l.b16 %v38
  %v635 = vunpack.c.l.b16 %v39
  %v636 = vunpack.c.l.b16 %v40
  %v637 = vunpack.c.l.b16 %v41
  %v638 = vunpack.c.l.b16 %v42
  %v639 = vunpack.c.l.b16 %v43
  %v640 = vunpack.c.l.b16 %v44
  %v641 = vunpack.c.l.b16 %v45
  %v642 = vunpack.c.l.b16 %v46
  %v643 = vunpack.c.l.b16 %v47
  %v644 = vunpack.c.l.b16 %v48
  %v645 = vunpack.c.l.b16 %v49
  %v646 = vunpack.c.l.b16 %v50
  %v647 = vunpack.c.l.b16 %v51
  %v648 = vunpack.c.l.b16 %v52
  %v649 = vunpack.c.l.b16 %v53
  %v650 = vunpack.c.l.b16 %v54
  %v651 = vunpack.c.l.b16 %v55
  %v652 = vunpack.c.l.b16 %v56
  %v653 = vunpack.c.l.b16 %v57
  %v654 = vunpack.c.l.b16 %v58
  %v655 = vunpack.c.l.b16 %v59
  %v656 = vunpack.c.l.b16 %v60
  %v657 = vunpack.c.l.b16 %v61
  %v658 = vunpack.c.l.b16 %v62
  %v659 = vunpack.c.l.b16 %v63
  %v660 = vunpack.c.l.b16 %v64
  %v661 = vunpack.c.l.b16 %v65
  %v662 = vunpack.c.l.b16 %v66
  %v663 = vunpack.c.l.b16 %v67
  %v664 = vunpack.c.l.b16 %v68
  %v665 = vunpack.c.l.b16 %v69
  %v666 = vunpack.c.l.b16 %v70
  %v667 = vunpack.c.l.b16 %v71
  %v668 = vunpack.c.l.b16 %v72
  %v669 = vunpack.c.l.b16 %v73
  %v670 = vunpack.c.l.b16 %v74
  %v671 = vunpack.c.l.b16 %v75
  %v672 = vunpack.c.l.b16 %v76
  %v673 = vunpack.c.l.b16 %v77
  %v674 = vunpack.c.l.b16 %v78
  %v675 = vunpack.c.l.b16 %v79
  %v676 = vunpack.c.l.b16 %v80
  %v677 = vunpack.c.l.b16 %v81
  %v678 = vunpack.c.l.b16 %v82
  %v679 = vunpack.c.l.b16 %v83
  %v680 = vunpack.c.l.b16 %v84
  %v681 = vunpack.c.l.b16 %v85
  %v682 = vunpack.c.l.b16 %v86
  %v683 = vunpack.c.l.b16 %v87
  %v684 = vunpack.c.l.b16 %v88
  %v685 = vunpack.c.l.b16 %v89
  %v686 = vunpack.c.l.b16 %v90
  %v687 = vunpack.c.l.b16 %v91
  %v688 = vunpack.c.l.b16 %v92
  %v689 = vunpack.c.l.b16 %v93
  %v690 = vunpack.c.l.b16 %v94
  %v691 = vunpack.c.l.b16 %v95
  %v692 = vunpack.c.l.b16 %v96
  %v693 = vunpack.c.l.b16 %v97
  %v694 = vunpack.c.l.b16 %v98
  %v695 = vunpack.c.l.b16 %v99
  %v696 = vunpack.c.l.b16 %v100
  %v697 = vunpack.c.l.b16 %v101
  %v698 = vunpack.c.l.b16 %v102
  %v699 = vunpack.c.l.b16 %v103
  %v700 = vunpack.c.l.b16 %v104
  %v701 = vunpack.c.l.b16 %v105
  %v702 = vunpack.c.l.b16 %v106
  %v703 = vunpack.c.l.b16 %v107
  %v704 = vunpack.c.l.b16 %v108
  %v705 = vunpack.c.l.b16 %v109
  %v706 = vunpack.c.l.b16 %v110
  %v707 = vunpack.c.l.b16 %v111
  %v708 = vunpack.c.l.b16 %v112
  %v709 = vunpack.c.l.b16 %v113
  %v710 = vunpack.c.l.b16 %v114
  %v711 = vunpack.c.l.b16 %v115
  %v712 = vunpack.c.l.b16 %v116
  %v713 = vunpack.c.l.b16 %v117
  %v714 = vunpack.c.l.b16 %v118
  %v715 = vunpack.c.l.b16 %v119
  %v716 = vunpack.c.l.b16 %v120
  %v717 = vunpack.c.l.b16 %v121
  %v718 = vunpack.c.l.b16 %v122
  %v719 = vunpack.c.l.b16 %v123
  %v720 = vunpack.c.l.b16 %v124
  %v721 = vunpack.c.l.b16 %v125
  %v722 = vunpack.c.l.b16 %v126
  %v723 = vunpack.c.l.b16 %v127
  %v724 = vunpack.c.l.b16 %v128
  %v725 = vunpack.c.l.b16 %v129
  %v726 = vunpack.c.l.b16 %v130
  %v727 = vunpack.c.l.b16 %v131
  %v728 = vunpack.c.l.b16 %v132
  %v729 = vunpack.c.l.b16 %v133
  %v730 = vunpack.c.l.b16 %v134
  %v731 = vunpack.c.l.b16 %v135
  %v732 = vunpack.c.l.b16 %v136
  %v733 = vunpack.c.l.b16 %v137
  %v734 = vunpack.c.l.b16 %v138
  %v735 = vunpack.c.l.b16 %v139
  %v736 = vunpack.c.l.b16 %v140
  %v737 = vunpack.c.l.b16 %v141
  %v738 = vunpack.c.l.b16 %v142
  %v739 = vunpack.c.l.b16 %v143
  %v740 = vunpack.c.l.b16 %v144
  %v741 = vunpack.c.l.b16 %v145
  %v742 = vunpack.c.l.b16 %v146
  %v743 = vunpack.c.l.b16 %v147
  %v744 = vunpack.c.l.b16 %v148
  %v745 = vunpack.c.l.b16 %v149
  %v746 = vunpack.c.l.b16 %v150
  %v747 = vunpack.c.l.b16 %v151
  %v748 = vunpack.c.l.b16 %v152
  %v749 = vunpack.c.l.b16 %v153
  %v750 = vunpack.c.l.b16 %v154
  %v751 = vunpack.c.l.b16 %v155
  %v752 = vunpack.c.l.b16 %v156
  %v753 = vunpack.c.l.b16 %v157
  %v754 = vunpack.c.l.b16 %v158
  %v755 = vunpack.c.l.b16 %v159
  %v756 = vunpack.c.l.b16 %v160
  %v757 = vunpack.c.l.b16 %v161
  %v758 = vunpack.c.l.b16 %v162
  %v759 = vunpack.c.l.b16 %v163
  %v760 = vunpack.c.l.b16 %v164
  %v761 = vunpack.c.l.b16 %v165
  %v762 = vunpack.c.l.b16 %v166
  %v763 = vunpack.c.l.b16 %v167
  %v764 = vunpack.c.l.b16 %v168
  %v765 = vunpack.c.l.b16 %v169
  %v766 = vunpack.c.l.b16 %v170
  %v767 = vunpack.c.l.b16 %v171
  %v768 = vunpack.c.l.b16 %v172
  %v769 = vunpack.c.l.b16 %v173
  %v770 = vunpack.c.l.b16 %v174
  %v771 = vunpack.c.l.b16 %v175
  %v772 = vunpack.c.l.b16 %v176
  %v773 = vunpack.c.l.b16 %v177
  %v774 = vunpack.c.l.b16 %v178
  %v775 = vunpack.c.l.b16 %v179
  %v776 = vunpack.c.l.b16 %v180
  %v777 = vunpack.c.l.b16 %v181
  %v778 = vunpack.c.l.b16 %v182
  %v779 = vunpack.c.l.b16 %v183
  %v780 = vunpack.c.l.b16 %v184
  %v781 = vunpack.c.l.b16 %v185
  %v782 = vunpack.c.l.b16 %v186
  %v783 = vunpack.c.l.b16 %v187
  %v784 = vunpack.c.l.b16 %v188
  %v785 = vunpack.c.l.b16 %v189
  %v786 = vunpack.c.l.b16 %v190
  %v787 = vunpack.c.l.b16 %v191
  %v788 = vunpack.c.l.b16 %v192
  %v789 = vunpack.c.l.b16 %v193
  %v790 = vunpack.c.l.b16 %v194
  %v791 = vunpack.c.l.b16 %v195
  %v792 = vunpack.c.l.b16 %v196
  %v793 = vunpack.c.l.b16 %v197
  %v794 = vunpack.c.l.b16 %v198
  %v795 = vunpack.c.l.b16 %v199
  %v796 = vunpack.c.l.b16 %v200
  %v797 = vunpack.c.l.b16 %v201
  %v798 = vunpack.c.l.b16 %v202
  %v799 = vunpack.c.l.b16 %v203
  %v800 = vunpack.c.l.b16 %v204
  %v801 = vunpack.c.l.b16 %v205
  %v802 = vunpack.c.l.b16 %v206
  %v803 = vunpack.c.l.b16 %v207
  %v804 = vunpack.c.l.b16 %v208
  %v805 = vunpack.c.l.b16 %v209
  %v806 = vunpack.c.l.b16 %v210
  %v807 = vunpack.c.l.b16 %v211
  %v808 = vunpack.c.l.b16 %v212
  %v809 = vunpack.c.l.b16 %v213
  %v810 = vunpack.c.l.b16 %v214
  %v811 = vunpack.c.l.b16 %v215
  %v812 = vunpack.c.l.b16 %v216
  %v813 = vunpack.c.l.b16 %v217
  %v814 = vunpack.c.l.b16 %v218
  %v815 = vunpack.c.l.b16 %v219
  %v816 = vunpack.c.l.b16 %v220
  %v817 = vunpack.c.l.b16 %v221
  %v818 = vunpack.c.l.b16 %v222
  %v819 = vunpack.c.l.b16 %v223
  %v820 = vunpack.c.l.b16 %v224
  %v821 = vunpack.c.l.b16 %v225
  %v822 = vunpack.c.l.b16 %v226
  %v823 = vunpack.c.l.b16 %v227
  %v824 = vunpack.c.l.b16 %v228
  %v825 = vunpack.c.l.b16 %v229
  %v826 = vunpack.c.l.b16 %v230
  %v827 = vunpack.c.l.b16 %v231
  %v828 = vunpack.c.l.b16 %v232
  %v829 = vunpack.c.l.b16 %v233
  %v830 = vunpack.c.l.b16 %v234
  %v831 = vunpack.c.l.b16 %v235
  %v832 = vunpack.c.l.b16 %v236
  %v833 = vunpack.c.l.b16 %v237
  %v834 = vunpack.c.l.b16 %v238
  %v835 = vunpack.c.l.b16 %v239
  %v836 = vunpack.c.l.b16 %v240
  %v837 = vunpack.c.l.b16 %v241
  %v838 = vunpack.c.l.b16 %v242
  %v839 = vunpack.c.l.b16 %v243
  %v840 = vunpack.c.l.b16 %v244
  %v841 = vunpack.c.l.b16 %v245
  %v842 = vunpack.c.l.b16 %v246
  %v843 = vunpack.c.l.b16 %v247
  %v844 = vunpack.c.l.b16 %v248
  %v845 = vunpack.c.l.b16 %v249
  %v846 = vunpack.c.l.b16 %v250
  %v847 = vunpack.c.l.b16 %v251
  %v848 = vunpack.c.l.b16 %v252
  %v849 = vunpack.c.l.b16 %v253
  %v850 = vunpack.c.l.b16 %v254
  %v851 = vunpack.c.l.b16 %v255
  %v852 = vunpack.c.l.b16 %v256
  %v853 = vunpack.c.l.b16 %v257
  %v854 = vunpack.c.l.b16 %v258
  %v855 = vunpack.c.l.b16 %v259
  %v856 = vunpack.c.l.b16 %v260
  %v857 = vunpack.c.l.b16 %v261
  %v858 = vunpack.c.l.b16 %v262
  %v859 = vunpack.c.l.b16 %v263
  %v860 = vunpack.c.l.b16 %v264
  %v861 = vunpack.c.l.b16 %v265
  %v862 = vunpack.c.l.b16 %v266
  %v863 = vunpack.c.l.b16 %v267
  %v864 = vunpack.c.l.b16 %v268
  %v865 = vunpack.c.l.b16 %v269
  %v866 = vunpack.c.l.b16 %v270
  %v867 = vunpack.c.l.b16 %v271
  %v868 = vunpack.c.l.b16 %v272
  %v869 = vunpack.c.l.b16 %v273
  %v870 = vunpack.c.l.b16 %v274
  %v871 = vunpack.c.l.b16 %v275
  %v872 = vunpack.c.l.b16 %v276
  %v873 = vunpack.c.l.b16 %v277
  %v874 = vunpack.c.l.b16 %v278
  %v875 = vunpack.c.l.b16 %v279
  %v876 = vunpack.c.l.b16 %v280
  %v877 = vunpack.c.l.b16 %v281
  %v878 = vunpack.c.l.b16 %v282
  %v879 = vunpack.c.l.b16 %v283
  %v880 = vunpack.c.l.b16 %v284
  %v881 = vunpack.c.l.b16 %v285
  %v882 = vpack.c.b16 %v627, %v626
  %v883 = vpack.c.b16 %v629, %v628
  %v884 = vpack.c.b16 %v631, %v630
  %v885 = vpack.c.b16 %v633, %v632
  %v886 = vpack.c.b16 %v635, %v634
  %v887 = vpack.c.b16 %v637, %v636
  %v888 = vpack.c.b16 %v639, %v638
  %v889 = vpack.c.b16 %v641, %v640
  %v890 = vpack.c.b16 %v643, %v642
  %v891 = vpack.c.b16 %v645, %v644
  %v892 = vpack.c.b16 %v647, %v646
  %v893 = vpack.c.b16 %v649, %v648
  %v894 = vpack.c.b16 %v651, %v650
  %v895 = vpack.c.b16 %v653, %v652
  %v896 = vpack.c.b16 %v655, %v654
  %v897 = vpack.c.b16 %v657, %v656
  %v898 = vpack.c.b16 %v659, %v658
  %v899 = vpack.c.b16 %v661, %v660
  %v900 = vpack.c.b16 %v663, %v662
  %v901 = vpack.c.b16 %v665, %v664
  %v902 = vpack.c.b16 %v667, %v666
  %v903 = vpack.c.b16 %v669, %v668
  %v904 = vpack.c.b16 %v671, %v670
  %v905 = vpack.c.b16 %v673, %v672
  %v906 = vpack.c.b16 %v675, %v674
  %v907 = vpack.c.b16 %v677, %v676
  %v908 = vpack.c.b16 %v679, %v678
  %v909 = vpack.c.b16 %v681, %v680
  %v910 = vpack.c.b16 %v683, %v682
  %v911 = vpack.c.b16 %v685, %v684
  %v912 = vpack.c.b16 %v687, %v686
  %v913 = vpack.c.b16 %v689, %v688
  %v914 = vpack.c.b16 %v691, %v690
  %v915 = vpack.c.b16 %v693, %v692
  %v916 = vpack.c.b16 %v695, %v694
  %v917 = vpack.c.b16 %v697, %v696
  %v918 = vpack.c.b16 %v699, %v698
  %v919 = vpack.c.b16 %v701, %v700
  %v920 = vpack.c.b16 %v703, %v702
  %v921 = vpack.c.b16 %v705, %v704
  %v922 = vpack.c.b16 %v707, %v706
  %v923 = vpack.c.b16 %v709, %v708
  %v924 = vpack.c.b16 %v711, %v710
  %v925 = vpack.c.b16 %v713, %v712
  %v926 = vpack.c.b16 %v715, %v714
  %v927 = vpack.c.b16 %v717, %v716
  %v928 = vpack.c.b16 %v719, %v718
  %v929 = vpack.c.b16 %v721, %v720
  %v930 = vpack.c.b16 %v723, %v722
  %v931 = vpack.c.b16 %v725, %v724
  %v932 = vpack.c.b16 %v727, %v726
  %v933 = vpack.c.b16 %v729, %v728
  %v934 = vpack.c.b16 %v731, %v730
  %v935 = vpack.c.b16 %v733, %v732
  %v936 = vpack.c.b16 %v735, %v734
  %v937 = vpack.c.b16 %v737, %v736
  %v938 = vpack.c.b16 %v739, %v738
  %v939 = vpack.c.b16 %v741, %v740
  %v940 = vpack.c.b16 %v743, %v742
  %v941 = vpack.c.b16 %v745, %v744
  %v942 = vpack.c.b16 %v747, %v746
  %v943 = vpack.c.b16 %v749, %v748
  %v944 = vpack.c.b16 %v751, %v750
  %v945 = vpack.c.b16 %v753, %v752
  %v946 = vpack.c.b16 %v755, %v754
  %v947 = vpack.c.b16 %v757, %v756
  %v948 = vpack.c.b16 %v759, %v758
  %v949 = vpack.c.b16 %v761, %v760
  %v950 = vpack.c.b16 %v763, %v762
  %v951 = vpack.c.b16 %v765, %v764
  %v952 = vpack.c.b16 %v767, %v766
  %v953 = vpack.c.b16 %v769, %v768
  %v954 = vpack.c.b16 %v771, %v770
  %v955 = vpack.c.b16 %v773, %v772
  %v956 = vpack.c.b16 %v775, %v774
  %v957 = vpack.c.b16 %v777, %v776
  %v958 = vpack.c.b16 %v779, %v778
  %v959 = vpack.c.b16 %v781, %v780
  %v960 = vpack.c.b16 %v783, %v782
  %v961 = vpack.c.b16 %v785, %v784
  %v962 = vpack.c.b16 %v787, %v786
  %v963 = vpack.c.b16 %v789, %v788
  %v964 = vpack.c.b16 %v791, %v790
  %v965 = vpack.c.b16 %v793, %v792
  %v966 = vpack.c.b16 %v795, %v794
  %v967 = vpack.c.b16 %v797, %v796
  %v968 = vpack.c.b16 %v799, %v798
  %v969 = vpack.c.b16 %v801, %v800
  %v970 = vpack.c.b16 %v803, %v802
  %v971 = vpack.c.b16 %v805, %v804
  %v972 = vpack.c.b16 %v807, %v806
  %v973 = vpack.c.b16 %v809, %v808
  %v974 = vpack.c.b16 %v811, %v810
  %v975 = vpack.c.b16 %v813, %v812
  %v976 = vpack.c.b16 %v815, %v814
  %v977 = vpack.c.b16 %v817, %v816
  %v978 = vpack.c.b16 %v819, %v818
  %v979 = vpack.c.b16 %v821, %v820
  %v980 = vpack.c.b16 %v823, %v822
  %v981 = vpack.c.b16 %v825, %v824
  %v982 = vpack.c.b16 %v827, %v826
  %v983 = vpack.c.b16 %v829, %v828
  %v984 = vpack.c.b16 %v831, %v830
  %v985 = vpack.c.b16 %v833, %v832
  %v986 = vpack.c.b16 %v835, %v834
  %v987 = vpack.c.b16 %v837, %v836
  %v988 = vpack.c.b16 %v839, %v838
  %v989 = vpack.c.b16 %v841, %v840
  %v990 = vpack.c.b16 %v843, %v842
  %v991 = vpack.c.b16 %v845, %v844
  %v992 = vpack.c.b16 %v847, %v846
  %v993 = vpack.c.b16 %v849, %v848
  %v994 = vpack.c.b16 %v851, %v850
  %v995 = vpack.c.b16 %v853, %v852
  %v996 = vpack.c.b16 %v855, %v854
  %v997 = vpack.c.b16 %v857, %v856
  %v998 = vpack.c.b16 %v859, %v858
  %v999 = vpack.c.b16 %v861, %v860
  %v1000 = vpack.c.b16 %v863, %v862
  %v1001 = vpack.c.b16 %v865, %v864
  %v1002 = vpack.c.b16 %v867, %v866
  %v1003 = vpack.c.b16 %v869, %v868
  %v1004 = vpack.c.b16 %v871, %v870
  %v1005 = vpack.c.b16 %v873, %v872
  %v1006 = vpack.c.b16 %v875, %v874
  %v1007 = vpack.c.b16 %v877, %v876
  %v1008 = vpack.c.b16 %v879, %v878
  %v1009 = vpack.c.b16 %v881, %v880
  %1138 = vmatpush.bf16.msra.mxu0 %v889
  %1139 = vmatpush.bf16.msra.mxu0 %v888
  %1140 = vmatpush.bf16.msra.mxu0 %v887
  %1141 = vmatpush.bf16.msra.mxu0 %v886
  %1142 = vmatpush.bf16.msra.mxu0 %v885
  %1143 = vmatpush.bf16.msra.mxu0 %v884
  %1144 = vmatpush.bf16.msra.mxu0 %v883
  %1145 = vmatpush.bf16.msra.mxu0 %v882
  %1146 = vmatmul.bf16.gmra.mxu0 %v338
  %v1147 = vpop.f32.mrf.mxu0
  %v1148 = vadd.f32 %v288, %v1147
  %v1149 = vpop.f32.mrf.mxu0
  %v1150 = vadd.f32 %v288, %v1149
  %1151 = vdwg.mxu0
  %1152 = vmatpush.bf16.msra.mxu0 %v897
  %1153 = vmatpush.bf16.msra.mxu0 %v896
  %1154 = vmatpush.bf16.msra.mxu0 %v895
  %1155 = vmatpush.bf16.msra.mxu0 %v894
  %1156 = vmatpush.bf16.msra.mxu0 %v893
  %1157 = vmatpush.bf16.msra.mxu0 %v892
  %1158 = vmatpush.bf16.msra.mxu0 %v891
  %1159 = vmatpush.bf16.msra.mxu0 %v890
  %1160 = vmatmul.bf16.gmra.mxu0 %v339
  %v1161 = vpop.f32.mrf.mxu0
  %v1162 = vadd.f32 %v1148, %v1161
  %v1163 = vpop.f32.mrf.mxu0
  %v1164 = vadd.f32 %v1150, %v1163
  %1165 = vdwg.mxu0
  %1166 = vmatpush.bf16.msra.mxu0 %v905
  %1167 = vmatpush.bf16.msra.mxu0 %v904
  %1168 = vmatpush.bf16.msra.mxu0 %v903
  %1169 = vmatpush.bf16.msra.mxu0 %v902
  %1170 = vmatpush.bf16.msra.mxu0 %v901
  %1171 = vmatpush.bf16.msra.mxu0 %v900
  %1172 = vmatpush.bf16.msra.mxu0 %v899
  %1173 = vmatpush.bf16.msra.mxu0 %v898
  %1174 = vmatmul.bf16.gmra.mxu0 %v340
  %v1175 = vpop.f32.mrf.mxu0
  %v1176 = vadd.f32 %v1162, %v1175
  %v1177 = vpop.f32.mrf.mxu0
  %v1178 = vadd.f32 %v1164, %v1177
  %1179 = vdwg.mxu0
  %1180 = vmatpush.bf16.msra.mxu0 %v913
  %1181 = vmatpush.bf16.msra.mxu0 %v912
  %1182 = vmatpush.bf16.msra.mxu0 %v911
  %1183 = vmatpush.bf16.msra.mxu0 %v910
  %1184 = vmatpush.bf16.msra.mxu0 %v909
  %1185 = vmatpush.bf16.msra.mxu0 %v908
  %1186 = vmatpush.bf16.msra.mxu0 %v907
  %1187 = vmatpush.bf16.msra.mxu0 %v906
  %1188 = vmatmul.bf16.gmra.mxu0 %v341
  %v1189 = vpop.f32.mrf.mxu0
  %v1190 = vadd.f32 %v1176, %v1189
  %v1191 = vpop.f32.mrf.mxu0
  %v1192 = vadd.f32 %v1178, %v1191
  %1193 = vdwg.mxu0
  %1194 = vmatpush.bf16.msra.mxu0 %v921
  %1195 = vmatpush.bf16.msra.mxu0 %v920
  %1196 = vmatpush.bf16.msra.mxu0 %v919
  %1197 = vmatpush.bf16.msra.mxu0 %v918
  %1198 = vmatpush.bf16.msra.mxu0 %v917
  %1199 = vmatpush.bf16.msra.mxu0 %v916
  %1200 = vmatpush.bf16.msra.mxu0 %v915
  %1201 = vmatpush.bf16.msra.mxu0 %v914
  %1202 = vmatmul.bf16.gmra.mxu0 %v342
  %v1203 = vpop.f32.mrf.mxu0
  %v1204 = vadd.f32 %v1190, %v1203
  %v1205 = vpop.f32.mrf.mxu0
  %v1206 = vadd.f32 %v1192, %v1205
  %1207 = vdwg.mxu0
  %1208 = vmatpush.bf16.msra.mxu0 %v929
  %1209 = vmatpush.bf16.msra.mxu0 %v928
  %1210 = vmatpush.bf16.msra.mxu0 %v927
  %1211 = vmatpush.bf16.msra.mxu0 %v926
  %1212 = vmatpush.bf16.msra.mxu0 %v925
  %1213 = vmatpush.bf16.msra.mxu0 %v924
  %1214 = vmatpush.bf16.msra.mxu0 %v923
  %1215 = vmatpush.bf16.msra.mxu0 %v922
  %1216 = vmatmul.bf16.gmra.mxu0 %v343
  %v1217 = vpop.f32.mrf.mxu0
  %v1218 = vadd.f32 %v1204, %v1217
  %v1219 = vpop.f32.mrf.mxu0
  %v1220 = vadd.f32 %v1206, %v1219
  %1221 = vdwg.mxu0
  %1222 = vmatpush.bf16.msra.mxu0 %v937
  %1223 = vmatpush.bf16.msra.mxu0 %v936
  %1224 = vmatpush.bf16.msra.mxu0 %v935
  %1225 = vmatpush.bf16.msra.mxu0 %v934
  %1226 = vmatpush.bf16.msra.mxu0 %v933
  %1227 = vmatpush.bf16.msra.mxu0 %v932
  %1228 = vmatpush.bf16.msra.mxu0 %v931
  %1229 = vmatpush.bf16.msra.mxu0 %v930
  %1230 = vmatmul.bf16.gmra.mxu0 %v344
  %v1231 = vpop.f32.mrf.mxu0
  %v1232 = vadd.f32 %v1218, %v1231
  %v1233 = vpop.f32.mrf.mxu0
  %v1234 = vadd.f32 %v1220, %v1233
  %1235 = vdwg.mxu0
  %1236 = vmatpush.bf16.msra.mxu0 %v945
  %1237 = vmatpush.bf16.msra.mxu0 %v944
  %1238 = vmatpush.bf16.msra.mxu0 %v943
  %1239 = vmatpush.bf16.msra.mxu0 %v942
  %1240 = vmatpush.bf16.msra.mxu0 %v941
  %1241 = vmatpush.bf16.msra.mxu0 %v940
  %1242 = vmatpush.bf16.msra.mxu0 %v939
  %1243 = vmatpush.bf16.msra.mxu0 %v938
  %1244 = vmatmul.bf16.gmra.mxu0 %v345
  %v1245 = vpop.f32.mrf.mxu0
  %v1246 = vadd.f32 %v1232, %v1245
  %v1247 = vpop.f32.mrf.mxu0
  %v1248 = vadd.f32 %v1234, %v1247
  %1249 = vdwg.mxu0
  %1250 = vmatpush.bf16.msra.mxu0 %v953
  %1251 = vmatpush.bf16.msra.mxu0 %v952
  %1252 = vmatpush.bf16.msra.mxu0 %v951
  %1253 = vmatpush.bf16.msra.mxu0 %v950
  %1254 = vmatpush.bf16.msra.mxu0 %v949
  %1255 = vmatpush.bf16.msra.mxu0 %v948
  %1256 = vmatpush.bf16.msra.mxu0 %v947
  %1257 = vmatpush.bf16.msra.mxu0 %v946
  %1258 = vmatmul.bf16.gmra.mxu0 %v346
  %v1259 = vpop.f32.mrf.mxu0
  %v1260 = vadd.f32 %v1246, %v1259
  %v1261 = vpop.f32.mrf.mxu0
  %v1262 = vadd.f32 %v1248, %v1261
  %1263 = vdwg.mxu0
  %1264 = vmatpush.bf16.msra.mxu0 %v961
  %1265 = vmatpush.bf16.msra.mxu0 %v960
  %1266 = vmatpush.bf16.msra.mxu0 %v959
  %1267 = vmatpush.bf16.msra.mxu0 %v958
  %1268 = vmatpush.bf16.msra.mxu0 %v957
  %1269 = vmatpush.bf16.msra.mxu0 %v956
  %1270 = vmatpush.bf16.msra.mxu0 %v955
  %1271 = vmatpush.bf16.msra.mxu0 %v954
  %1272 = vmatmul.bf16.gmra.mxu0 %v347
  %v1273 = vpop.f32.mrf.mxu0
  %v1274 = vadd.f32 %v1260, %v1273
  %v1275 = vpop.f32.mrf.mxu0
  %v1276 = vadd.f32 %v1262, %v1275
  %1277 = vdwg.mxu0
  %1278 = vmatpush.bf16.msra.mxu0 %v969
  %1279 = vmatpush.bf16.msra.mxu0 %v968
  %1280 = vmatpush.bf16.msra.mxu0 %v967
  %1281 = vmatpush.bf16.msra.mxu0 %v966
  %1282 = vmatpush.bf16.msra.mxu0 %v965
  %1283 = vmatpush.bf16.msra.mxu0 %v964
  %1284 = vmatpush.bf16.msra.mxu0 %v963
  %1285 = vmatpush.bf16.msra.mxu0 %v962
  %1286 = vmatmul.bf16.gmra.mxu0 %v348
  %v1287 = vpop.f32.mrf.mxu0
  %v1288 = vadd.f32 %v1274, %v1287
  %v1289 = vpop.f32.mrf.mxu0
  %v1290 = vadd.f32 %v1276, %v1289
  %1291 = vdwg.mxu0
  %1292 = vmatpush.bf16.msra.mxu0 %v977
  %1293 = vmatpush.bf16.msra.mxu0 %v976
  %1294 = vmatpush.bf16.msra.mxu0 %v975
  %1295 = vmatpush.bf16.msra.mxu0 %v974
  %1296 = vmatpush.bf16.msra.mxu0 %v973
  %1297 = vmatpush.bf16.msra.mxu0 %v972
  %1298 = vmatpush.bf16.msra.mxu0 %v971
  %1299 = vmatpush.bf16.msra.mxu0 %v970
  %1300 = vmatmul.bf16.gmra.mxu0 %v349
  %v1301 = vpop.f32.mrf.mxu0
  %v1302 = vadd.f32 %v1288, %v1301
  %v1303 = vpop.f32.mrf.mxu0
  %v1304 = vadd.f32 %v1290, %v1303
  %1305 = vdwg.mxu0
  %1306 = vmatpush.bf16.msra.mxu0 %v985
  %1307 = vmatpush.bf16.msra.mxu0 %v984
  %1308 = vmatpush.bf16.msra.mxu0 %v983
  %1309 = vmatpush.bf16.msra.mxu0 %v982
  %1310 = vmatpush.bf16.msra.mxu0 %v981
  %1311 = vmatpush.bf16.msra.mxu0 %v980
  %1312 = vmatpush.bf16.msra.mxu0 %v979
  %1313 = vmatpush.bf16.msra.mxu0 %v978
  %1314 = vmatmul.bf16.gmra.mxu0 %v350
  %v1315 = vpop.f32.mrf.mxu0
  %v1316 = vadd.f32 %v1302, %v1315
  %v1317 = vpop.f32.mrf.mxu0
  %v1318 = vadd.f32 %v1304, %v1317
  %1319 = vdwg.mxu0
  %1320 = vmatpush.bf16.msra.mxu0 %v993
  %1321 = vmatpush.bf16.msra.mxu0 %v992
  %1322 = vmatpush.bf16.msra.mxu0 %v991
  %1323 = vmatpush.bf16.msra.mxu0 %v990
  %1324 = vmatpush.bf16.msra.mxu0 %v989
  %1325 = vmatpush.bf16.msra.mxu0 %v988
  %1326 = vmatpush.bf16.msra.mxu0 %v987
  %1327 = vmatpush.bf16.msra.mxu0 %v986
  %1328 = vmatmul.bf16.gmra.mxu0 %v351
  %v1329 = vpop.f32.mrf.mxu0
  %v1330 = vadd.f32 %v1316, %v1329
  %v1331 = vpop.f32.mrf.mxu0
  %v1332 = vadd.f32 %v1318, %v1331
  %1333 = vdwg.mxu0
  %1334 = vmatpush.bf16.msra.mxu0 %v1001
  %1335 = vmatpush.bf16.msra.mxu0 %v1000
  %1336 = vmatpush.bf16.msra.mxu0 %v999
  %1337 = vmatpush.bf16.msra.mxu0 %v998
  %1338 = vmatpush.bf16.msra.mxu0 %v997
  %1339 = vmatpush.bf16.msra.mxu0 %v996
  %1340 = vmatpush.bf16.msra.mxu0 %v995
  %1341 = vmatpush.bf16.msra.mxu0 %v994
  %1342 = vmatmul.bf16.gmra.mxu0 %v352
  %v1343 = vpop.f32.mrf.mxu0
  %v1344 = vadd.f32 %v1330, %v1343
  %v1345 = vpop.f32.mrf.mxu0
  %v1346 = vadd.f32 %v1332, %v1345
  %1347 = vdwg.mxu0
  %1348 = vmatpush.bf16.msra.mxu0 %v1009
  %1349 = vmatpush.bf16.msra.mxu0 %v1008
  %1350 = vmatpush.bf16.msra.mxu0 %v1007
  %1351 = vmatpush.bf16.msra.mxu0 %v1006
  %1352 = vmatpush.bf16.msra.mxu0 %v1005
  %1353 = vmatpush.bf16.msra.mxu0 %v1004
  %1354 = vmatpush.bf16.msra.mxu0 %v1003
  %1355 = vmatpush.bf16.msra.mxu0 %v1002
  %1356 = vmatmul.bf16.gmra.mxu0 %v353
  %v1357 = vpop.f32.mrf.mxu0
  %v1358 = vadd.f32 %v1344, %v1357
  %v1359 = vpop.f32.mrf.mxu0
  %v1360 = vadd.f32 %v1346, %v1359
  %1361 = vdwg.mxu0
  %1362 = vst [vmem:[%s3] sm:$0xff] %v1358
  %1363 = vst [vmem:[%s3 + $0x8] sm:$0xff] %v1360
  // Predicated region
  $region14: #{spectral_discriminator_forward.9} parent=0 // pred_check
    _
  $region15: #{spectral_discriminator_forward.9} parent=0 // pred_check_branch
    %1365 = sbr.rel (0) target = $region17
  $region16: #{spectral_discriminator_forward.9} parent=0 // pred_region
    _
  $region17: #{spectral_discriminator_forward.9} parent=0 // pred_fallthru
    _
  // Predicated region
  $region18: #{spectral_discriminator_forward.9} parent=0 // pred_check
    _
  $region19: #{spectral_discriminator_forward.9} parent=0 // pred_check_branch
    %1367 = sbr.rel (0) target = $region21
  $region20: #{spectral_discriminator_forward.9} parent=0 // pred_region
    _
  $region21: #{spectral_discriminator_forward.9} parent=0 // pred_fallthru
    _

</llo_original>
